<compile_context>
chip_gen: v5e
topology: v5e:2x2
jax: 0.10.0
libtpu: 0.0.40
codegen_flags: <defaults>
</compile_context>

<pallas_src>
import jax
import jax.numpy as jnp
import numpy as np
from jax import lax
from jax.experimental import pallas as pl
from jax.experimental.pallas import tpu as pltpu

EPS = 1e-5
SLOPE = 0.01  # torch.nn.LeakyReLU default negative_slope


def _bn_leaky(y, gamma, beta):
    """Training-mode BatchNorm + LeakyReLU on a channel-major (C, M) tile.

    Reduction is along axis=1 (all N*H*W pixels -> full-batch statistics).
    Centered two-pass mean/variance in f32, folded into one per-channel
    scale/shift, so the per-element work is one FMA + one select.
    """
    inv_n = 1.0 / y.shape[1]
    mean = jnp.sum(y, axis=1, keepdims=True) * inv_n            # (C, 1)
    d = y - mean
    var = jnp.sum(d * d, axis=1, keepdims=True) * inv_n         # (C, 1)
    scale = gamma * lax.rsqrt(var + EPS)                        # g / sqrt(var+eps)
    yh = d * scale + beta
    return jnp.where(yh > 0, yh, SLOPE * yh)


def _write_padded(pad_ref, val):
    """Zero the pad buffer with one dense store, then write the interior."""
    N, Hpad, Wpad, C = pad_ref.shape
    Hp, Wp = Hpad - 2, Wpad - 2
    # TODO(synk): in the gridded version zero the 1-px halo only once
    # (@pl.when(first step)) since the scratch persists across grid iterations.
    pad_ref[...] = jnp.zeros(pad_ref.shape, pad_ref.dtype)
    pad_ref[:, 1:Hp + 1, 1:Wp + 1, :] = val.astype(pad_ref.dtype)


def _im2col(pad_ref):
    """(N, Hp+2, Wp+2, C) padded activations -> (N*Hp*Wp, 9*C) bf16 patch matrix."""
    N, Hpad, Wpad, C = pad_ref.shape
    Hp, Wp = Hpad - 2, Wpad - 2
    taps = [pad_ref[:, dy:dy + Hp, dx:dx + Wp, :]
            for dy in range(3) for dx in range(3)]
    patches = jnp.concatenate(taps, axis=-1)                    # (N, Hp, Wp, 9*C)
    return patches.reshape(N * Hp * Wp, 9 * C)
    # TODO(synk): for production layers with C >= 128, replace this 9x VMEM patch
    # blow-up with 9 accumulated K=C matmuls over shifted views of the pad buffer.


def _down_kernel(x_ref, w1_ref, g1_ref, b1_ref, w2_ref, g2_ref, b2_ref,
                 o_ref, pad1_ref, pad2_ref):
    N, H, Wp, two_cin = x_ref.shape
    Cin = two_cin // 2
    Hp = H // 2
    Cmid = w1_ref.shape[0]

    # ---- MaxPool2d(kernel=2, stride=2) ----
    # Input arrives packed as (N, H, W/2, 2*Cin): W-pair max = two contiguous
    # lane slices (no strided sublane loads); H-pair max via a free leading split.
    x = x_ref[...]                                              # bf16
    xw = jnp.maximum(x[..., :Cin], x[..., Cin:])                # (N, H, Wp, Cin)
    xw = xw.reshape(N, Hp, 2, Wp, Cin)
    pooled = jnp.maximum(xw[:, :, 0], xw[:, :, 1])              # (N, Hp, Wp, Cin) bf16

    # ---- conv1: im2col + one MXU matmul, lane-dense (Cmid, M) output ----
    _write_padded(pad1_ref, pooled)
    p1 = _im2col(pad1_ref)                                      # (M, 9*Cin) bf16
    y1 = lax.dot_general(w1_ref[...], p1,                       # (Cmid,9Cin) x (M,9Cin)^T
                         dimension_numbers=(((1,), (1,)), ((), ())),
                         preferred_element_type=jnp.float32)    # (Cmid, M) f32
    h1 = _bn_leaky(y1, g1_ref[...], b1_ref[...])                # (Cmid, M) f32

    # ---- conv2: same scheme; (Cout, M) output store is lane-dense ----
    h1_sp = h1.T.reshape(N, Hp, Wp, Cmid)                       # one small 2-D transpose
    _write_padded(pad2_ref, h1_sp)
    p2 = _im2col(pad2_ref)                                      # (M, 9*Cmid) bf16
    y2 = lax.dot_general(w2_ref[...], p2,
                         dimension_numbers=(((1,), (1,)), ((), ())),
                         preferred_element_type=jnp.float32)    # (Cout, M) f32
    h2 = _bn_leaky(y2, g2_ref[...], b2_ref[...])                # (Cout, M)
    o_ref[...] = h2.astype(o_ref.dtype)


def down_pallas(x_nchw, w1_oihw, g1, b1, w2_oihw, g2, b2):
    """x_nchw: (N, Cin, H, W) float32. Returns (N, Cout, H//2, W//2) float32."""
    N, Cin, H, W = x_nchw.shape
    Cmid = w1_oihw.shape[0]
    Cout = w2_oihw.shape[0]
    assert H % 2 == 0 and W % 2 == 0, "Down requires even spatial dims"
    Hp, Wp = H // 2, W // 2
    M = N * Hp * Wp

    # Layout glue (tiny next to the conv work).
    # TODO(synk): at real UNet sizes accept/emit NHWC directly (fold these layout
    # changes into a gridded kernel's index_maps) to avoid standalone HBM transposes.
    x_nhwc = jnp.transpose(x_nchw, (0, 2, 3, 1))
    # Free row-major reshape packing the W-pair + channels into the lane dim,
    # plus bf16 cast (max commutes with monotone bf16 rounding -> same numerics).
    x_pk = x_nhwc.reshape(N, H, Wp, 2 * Cin).astype(jnp.bfloat16)
    # conv1 weights -> (Cmid, 9*Cin), K ordered (ky, kx, cin); bf16 MXU operand.
    w1r = jnp.transpose(w1_oihw, (0, 2, 3, 1)).reshape(Cmid, 9 * Cin).astype(jnp.bfloat16)
    # conv2 weights -> (Cout, 9*Cmid), same K order.
    w2r = jnp.transpose(w2_oihw, (0, 2, 3, 1)).reshape(Cout, 9 * Cmid).astype(jnp.bfloat16)
    g1r = g1.reshape(Cmid, 1).astype(jnp.float32)
    b1r = b1.reshape(Cmid, 1).astype(jnp.float32)
    g2r = g2.reshape(Cout, 1).astype(jnp.float32)
    b2r = b2.reshape(Cout, 1).astype(jnp.float32)

    flops = 2 * M * 9 * (Cin * Cmid + Cmid * Cout)
    bytes_accessed = (x_pk.size * 2 + w1r.size * 2 + w2r.size * 2
                      + (g1r.size + b1r.size + g2r.size + b2r.size) * 4
                      + Cout * M * 4)

    vmem = pl.BlockSpec(memory_space=pltpu.MemorySpace.VMEM)
    out2d = pl.pallas_call(
        _down_kernel,
        out_shape=jax.ShapeDtypeStruct((Cout, M), jnp.float32),
        in_specs=[vmem] * 7,
        out_specs=vmem,
        scratch_shapes=[
            pltpu.VMEM((N, Hp + 2, Wp + 2, Cin), jnp.bfloat16),   # conv1 pad buffer
            pltpu.VMEM((N, Hp + 2, Wp + 2, Cmid), jnp.bfloat16),  # conv2 pad buffer
        ],
        # Plenty at these shapes; re-derive per generation for the gridded version
        # (<= ~48-56 MiB on v7x's 64 MiB physical VMEM, ~96-100 MiB on v6e).
        compiler_params=pltpu.CompilerParams(
            vmem_limit_bytes=32 * 1024 * 1024),
        cost_estimate=pl.CostEstimate(flops=flops, transcendentals=0,
                                      bytes_accessed=bytes_accessed),
    )(x_pk, w1r, g1r, b1r, w2r, g2r, b2r)

    # (Cout, N*Hp*Wp) -> (N, Cout, Hp, Wp)
    return jnp.transpose(out2d.reshape(Cout, N, Hp, Wp), (1, 0, 2, 3))


def down_reference(x_nchw, w1_oihw, g1, b1, w2_oihw, g2, b2):
    """Pure-JAX f32 reference mirroring torch semantics (training-mode BN)."""
    x = jnp.transpose(x_nchw, (0, 2, 3, 1))
    p = lax.reduce_window(x, -jnp.inf, lax.max,
                          (1, 2, 2, 1), (1, 2, 2, 1), 'VALID')

    def conv_bn_lrelu(h, w_oihw, g, b):
        w = jnp.transpose(w_oihw, (2, 3, 1, 0))
        y = lax.conv_general_dilated(
            h, w, window_strides=(1, 1), padding=((1, 1), (1, 1)),
            dimension_numbers=('NHWC', 'HWIO', 'NHWC'))
        mean = jnp.mean(y, axis=(0, 1, 2), keepdims=True)
        var = jnp.mean((y - mean) ** 2, axis=(0, 1, 2), keepdims=True)
        yh = (y - mean) * lax.rsqrt(var + EPS)
        yh = yh * g.reshape(1, 1, 1, -1) + b.reshape(1, 1, 1, -1)
        return jnp.where(yh > 0, yh, SLOPE * yh)

    h = conv_bn_lrelu(p, w1_oihw, g1, b1)
    out = conv_bn_lrelu(h, w2_oihw, g2, b2)
    return jnp.transpose(out, (0, 3, 1, 2))


if __name__ == "__main__":
    N, Cin, H, W = 2, 4, 16, 16
    Cout = 8
    Cmid = Cout  # DoubleConv default: mid_channels = out_channels

    key = jax.random.PRNGKey(0)
    kx, kw1, kw2, kg1, kb1, kg2, kb2 = jax.random.split(key, 7)

    x = jax.random.normal(kx, (N, Cin, H, W), dtype=jnp.float32)
    # Conv2d weights, OIHW (torch layout), bias=False
    w1 = jax.random.normal(kw1, (Cmid, Cin, 3, 3), dtype=jnp.float32) * 0.2
    w2 = jax.random.normal(kw2, (Cout, Cmid, 3, 3), dtype=jnp.float32) * 0.2
    # BatchNorm affine params (non-trivial values to exercise the affine path)
    g1 = 1.0 + 0.1 * jax.random.normal(kg1, (Cmid,), dtype=jnp.float32)
    b1 = 0.1 * jax.random.normal(kb1, (Cmid,), dtype=jnp.float32)
    g2 = 1.0 + 0.1 * jax.random.normal(kg2, (Cout,), dtype=jnp.float32)
    b2 = 0.1 * jax.random.normal(kb2, (Cout,), dtype=jnp.float32)

    out = jax.block_until_ready(down_pallas(x, w1, g1, b1, w2, g2, b2))
    ref = jax.block_until_ready(down_reference(x, w1, g1, b1, w2, g2, b2))

    assert out.shape == (N, Cout, H // 2, W // 2)
    # bf16 activations/weights at the MXU (f32 accumulation) vs the all-f32
    # reference give ~1e-3..1e-2 relative differences; tolerance covers that.
    np.testing.assert_allclose(np.asarray(out), np.asarray(ref),
                               rtol=2e-2, atol=2e-2)
    print("KERNEL_OK")
</pallas_src>

<mosaic_0001>
module attributes {stable_mosaic.version = 11 : i64} {
  func.func @_down_kernel(%arg0: memref<2x16x8x8xbf16, #tpu.memory_space<vmem>>, %arg1: memref<8x36xbf16, #tpu.memory_space<vmem>>, %arg2: memref<8x1xf32, #tpu.memory_space<vmem>>, %arg3: memref<8x1xf32, #tpu.memory_space<vmem>>, %arg4: memref<8x72xbf16, #tpu.memory_space<vmem>>, %arg5: memref<8x1xf32, #tpu.memory_space<vmem>>, %arg6: memref<8x1xf32, #tpu.memory_space<vmem>>, %arg7: memref<8x128xf32, #tpu.memory_space<vmem>>, %arg8: memref<2x10x10x4xbf16, #tpu.memory_space<vmem>>, %arg9: memref<2x10x10x8xbf16, #tpu.memory_space<vmem>>) attributes {dimension_semantics = [], scalar_prefetch = 0 : i64, scratch_operands = 2 : i64, tpu.core_type = #tpu.core_type<tc>} {
    %c0 = arith.constant 0 : index
    %c0_0 = arith.constant 0 : index
    %c0_1 = arith.constant 0 : index
    %c0_2 = arith.constant 0 : index
    %0 = vector.load %arg0[%c0, %c0_0, %c0_1, %c0_2] : memref<2x16x8x8xbf16, #tpu.memory_space<vmem>>, vector<2x16x8x8xbf16>
    %1 = vector.extract_strided_slice %0 {offsets = [0, 0, 0, 0], sizes = [2, 16, 8, 4], strides = [1, 1, 1, 1]} : vector<2x16x8x8xbf16> to vector<2x16x8x4xbf16>
    %2 = vector.extract_strided_slice %0 {offsets = [0, 0, 0, 4], sizes = [2, 16, 8, 4], strides = [1, 1, 1, 1]} : vector<2x16x8x8xbf16> to vector<2x16x8x4xbf16>
    %3 = arith.maximumf %1, %2 : vector<2x16x8x4xbf16>
    %4 = vector.shape_cast %3 : vector<2x16x8x4xbf16> to vector<2x8x2x8x4xbf16>
    %5 = vector.extract_strided_slice %4 {offsets = [0, 0, 0, 0, 0], sizes = [2, 8, 1, 8, 4], strides = [1, 1, 1, 1, 1]} : vector<2x8x2x8x4xbf16> to vector<2x8x1x8x4xbf16>
    %6 = vector.shape_cast %5 : vector<2x8x1x8x4xbf16> to vector<2x8x8x4xbf16>
    %7 = vector.extract_strided_slice %4 {offsets = [0, 0, 1, 0, 0], sizes = [2, 8, 1, 8, 4], strides = [1, 1, 1, 1, 1]} : vector<2x8x2x8x4xbf16> to vector<2x8x1x8x4xbf16>
    %8 = vector.shape_cast %7 : vector<2x8x1x8x4xbf16> to vector<2x8x8x4xbf16>
    %9 = arith.maximumf %6, %8 : vector<2x8x8x4xbf16>
    %cst = arith.constant 0.000000e+00 : bf16
    %10 = vector.broadcast %cst : bf16 to vector<2x10x10x4xbf16>
    %c0_3 = arith.constant 0 : index
    %c0_4 = arith.constant 0 : index
    %c0_5 = arith.constant 0 : index
    %c0_6 = arith.constant 0 : index
    %11 = vector.load %arg8[%c0_3, %c0_4, %c0_5, %c0_6] : memref<2x10x10x4xbf16, #tpu.memory_space<vmem>>, vector<2x10x10x4xbf16>
    tpu.vector_store %arg8[%c0_3, %c0_4, %c0_5, %c0_6], %10 {strides = array<i32>} : memref<2x10x10x4xbf16, #tpu.memory_space<vmem>>, vector<2x10x10x4xbf16>,
    %c0_7 = arith.constant 0 : index
    %c1 = arith.constant 1 : index
    %c1_8 = arith.constant 1 : index
    %c0_9 = arith.constant 0 : index
    %12 = vector.load %arg8[%c0_7, %c1, %c1_8, %c0_9] : memref<2x10x10x4xbf16, #tpu.memory_space<vmem>>, vector<2x8x8x4xbf16>
    tpu.vector_store %arg8[%c0_7, %c1, %c1_8, %c0_9], %9 {strides = array<i32>} : memref<2x10x10x4xbf16, #tpu.memory_space<vmem>>, vector<2x8x8x4xbf16>,
    %c0_10 = arith.constant 0 : index
    %c0_11 = arith.constant 0 : index
    %c0_12 = arith.constant 0 : index
    %c0_13 = arith.constant 0 : index
    %13 = vector.load %arg8[%c0_10, %c0_11, %c0_12, %c0_13] : memref<2x10x10x4xbf16, #tpu.memory_space<vmem>>, vector<2x8x8x4xbf16>
    %c0_14 = arith.constant 0 : index
    %c0_15 = arith.constant 0 : index
    %c1_16 = arith.constant 1 : index
    %c0_17 = arith.constant 0 : index
    %14 = vector.load %arg8[%c0_14, %c0_15, %c1_16, %c0_17] : memref<2x10x10x4xbf16, #tpu.memory_space<vmem>>, vector<2x8x8x4xbf16>
    %c0_18 = arith.constant 0 : index
    %c0_19 = arith.constant 0 : index
    %c2 = arith.constant 2 : index
    %c0_20 = arith.constant 0 : index
    %15 = vector.load %arg8[%c0_18, %c0_19, %c2, %c0_20] : memref<2x10x10x4xbf16, #tpu.memory_space<vmem>>, vector<2x8x8x4xbf16>
    %c0_21 = arith.constant 0 : index
    %c1_22 = arith.constant 1 : index
    %c0_23 = arith.constant 0 : index
    %c0_24 = arith.constant 0 : index
    %16 = vector.load %arg8[%c0_21, %c1_22, %c0_23, %c0_24] : memref<2x10x10x4xbf16, #tpu.memory_space<vmem>>, vector<2x8x8x4xbf16>
    %c0_25 = arith.constant 0 : index
    %c1_26 = arith.constant 1 : index
    %c1_27 = arith.constant 1 : index
    %c0_28 = arith.constant 0 : index
    %17 = vector.load %arg8[%c0_25, %c1_26, %c1_27, %c0_28] : memref<2x10x10x4xbf16, #tpu.memory_space<vmem>>, vector<2x8x8x4xbf16>
    %c0_29 = arith.constant 0 : index
    %c1_30 = arith.constant 1 : index
    %c2_31 = arith.constant 2 : index
    %c0_32 = arith.constant 0 : index
    %18 = vector.load %arg8[%c0_29, %c1_30, %c2_31, %c0_32] : memref<2x10x10x4xbf16, #tpu.memory_space<vmem>>, vector<2x8x8x4xbf16>
    %c0_33 = arith.constant 0 : index
    %c2_34 = arith.constant 2 : index
    %c0_35 = arith.constant 0 : index
    %c0_36 = arith.constant 0 : index
    %19 = vector.load %arg8[%c0_33, %c2_34, %c0_35, %c0_36] : memref<2x10x10x4xbf16, #tpu.memory_space<vmem>>, vector<2x8x8x4xbf16>
    %c0_37 = arith.constant 0 : index
    %c2_38 = arith.constant 2 : index
    %c1_39 = arith.constant 1 : index
    %c0_40 = arith.constant 0 : index
    %20 = vector.load %arg8[%c0_37, %c2_38, %c1_39, %c0_40] : memref<2x10x10x4xbf16, #tpu.memory_space<vmem>>, vector<2x8x8x4xbf16>
    %c0_41 = arith.constant 0 : index
    %c2_42 = arith.constant 2 : index
    %c2_43 = arith.constant 2 : index
    %c0_44 = arith.constant 0 : index
    %21 = vector.load %arg8[%c0_41, %c2_42, %c2_43, %c0_44] : memref<2x10x10x4xbf16, #tpu.memory_space<vmem>>, vector<2x8x8x4xbf16>
    %22 = tpu.concatenate %13, %14, %15, %16, %17, %18, %19, %20, %21 in 3 : vector<2x8x8x4xbf16>, vector<2x8x8x4xbf16>, vector<2x8x8x4xbf16>, vector<2x8x8x4xbf16>, vector<2x8x8x4xbf16>, vector<2x8x8x4xbf16>, vector<2x8x8x4xbf16>, vector<2x8x8x4xbf16>, vector<2x8x8x4xbf16> -> vector<2x8x8x36xbf16>
    %23 = vector.shape_cast %22 : vector<2x8x8x36xbf16> to vector<128x36xbf16>
    %c0_45 = arith.constant 0 : index
    %c0_46 = arith.constant 0 : index
    %24 = vector.load %arg1[%c0_45, %c0_46] : memref<8x36xbf16, #tpu.memory_space<vmem>>, vector<8x36xbf16>
    %cst_47 = arith.constant dense<0.000000e+00> : vector<8x128xf32>
    %25 = tpu.matmul %24, %23, %cst_47 {dimension_numbers = #tpu.dot_dimension_numbers<[1], [1], [0], [0], [0, 0, 1, 0], [], []>} : vector<8x36xbf16>, vector<128x36xbf16>, vector<8x128xf32> -> vector<8x128xf32>
    %c0_48 = arith.constant 0 : index
    %c0_49 = arith.constant 0 : index
    %26 = vector.load %arg2[%c0_48, %c0_49] : memref<8x1xf32, #tpu.memory_space<vmem>>, vector<8x1xf32>
    %c0_50 = arith.constant 0 : index
    %c0_51 = arith.constant 0 : index
    %27 = vector.load %arg3[%c0_50, %c0_51] : memref<8x1xf32, #tpu.memory_space<vmem>>, vector<8x1xf32>
    %cst_52 = arith.constant dense<0.000000e+00> : vector<8xf32>
    %28 = vector.multi_reduction <add>, %25, %cst_52 [1] : vector<8x128xf32> to vector<8xf32>
    %29 = vector.shape_cast %28 : vector<8xf32> to vector<8x1xf32>
    %cst_53 = arith.constant 7.812500e-03 : f32
    %30 = vector.broadcast %cst_53 : f32 to vector<8x1xf32>
    %31 = arith.mulf %29, %30 : vector<8x1xf32>
    %32 = vector.broadcast %31 : vector<8x1xf32> to vector<8x128xf32>
    %33 = arith.subf %25, %32 : vector<8x128xf32>
    %34 = arith.mulf %33, %33 : vector<8x128xf32>
    %cst_54 = arith.constant dense<0.000000e+00> : vector<8xf32>
    %35 = vector.multi_reduction <add>, %34, %cst_54 [1] : vector<8x128xf32> to vector<8xf32>
    %36 = vector.shape_cast %35 : vector<8xf32> to vector<8x1xf32>
    %cst_55 = arith.constant 7.812500e-03 : f32
    %37 = vector.broadcast %cst_55 : f32 to vector<8x1xf32>
    %38 = arith.mulf %36, %37 : vector<8x1xf32>
    %cst_56 = arith.constant 9.99999974E-6 : f32
    %39 = vector.broadcast %cst_56 : f32 to vector<8x1xf32>
    %40 = arith.addf %38, %39 : vector<8x1xf32>
    %41 = math.rsqrt %40 : vector<8x1xf32>
    %42 = arith.mulf %26, %41 : vector<8x1xf32>
    %43 = vector.broadcast %42 : vector<8x1xf32> to vector<8x128xf32>
    %44 = arith.mulf %33, %43 : vector<8x128xf32>
    %45 = vector.broadcast %27 : vector<8x1xf32> to vector<8x128xf32>
    %46 = arith.addf %44, %45 : vector<8x128xf32>
    %cst_57 = arith.constant 0.000000e+00 : f32
    %47 = vector.broadcast %cst_57 : f32 to vector<8x128xf32>
    %48 = arith.cmpf ogt, %46, %47 : vector<8x128xf32>
    %cst_58 = arith.constant 0.00999999977 : f32
    %49 = vector.broadcast %cst_58 : f32 to vector<8x128xf32>
    %50 = arith.mulf %49, %46 : vector<8x128xf32>
    %51 = arith.select %48, %46, %50 : vector<8x128xi1>, vector<8x128xf32>
    %52 = tpu.transpose %51, [1, 0] : vector<8x128xf32> -> vector<128x8xf32>
    %53 = vector.shape_cast %52 : vector<128x8xf32> to vector<2x8x8x8xf32>
    %cst_59 = arith.constant 0.000000e+00 : bf16
    %54 = vector.broadcast %cst_59 : bf16 to vector<2x10x10x8xbf16>
    %c0_60 = arith.constant 0 : index
    %c0_61 = arith.constant 0 : index
    %c0_62 = arith.constant 0 : index
    %c0_63 = arith.constant 0 : index
    %55 = vector.load %arg9[%c0_60, %c0_61, %c0_62, %c0_63] : memref<2x10x10x8xbf16, #tpu.memory_space<vmem>>, vector<2x10x10x8xbf16>
    tpu.vector_store %arg9[%c0_60, %c0_61, %c0_62, %c0_63], %54 {strides = array<i32>} : memref<2x10x10x8xbf16, #tpu.memory_space<vmem>>, vector<2x10x10x8xbf16>,
    %56 = arith.truncf %53 : vector<2x8x8x8xf32> to vector<2x8x8x8xbf16>
    %c0_64 = arith.constant 0 : index
    %c1_65 = arith.constant 1 : index
    %c1_66 = arith.constant 1 : index
    %c0_67 = arith.constant 0 : index
    %57 = vector.load %arg9[%c0_64, %c1_65, %c1_66, %c0_67] : memref<2x10x10x8xbf16, #tpu.memory_space<vmem>>, vector<2x8x8x8xbf16>
    tpu.vector_store %arg9[%c0_64, %c1_65, %c1_66, %c0_67], %56 {strides = array<i32>} : memref<2x10x10x8xbf16, #tpu.memory_space<vmem>>, vector<2x8x8x8xbf16>,
    %c0_68 = arith.constant 0 : index
    %c0_69 = arith.constant 0 : index
    %c0_70 = arith.constant 0 : index
    %c0_71 = arith.constant 0 : index
    %58 = vector.load %arg9[%c0_68, %c0_69, %c0_70, %c0_71] : memref<2x10x10x8xbf16, #tpu.memory_space<vmem>>, vector<2x8x8x8xbf16>
    %c0_72 = arith.constant 0 : index
    %c0_73 = arith.constant 0 : index
    %c1_74 = arith.constant 1 : index
    %c0_75 = arith.constant 0 : index
    %59 = vector.load %arg9[%c0_72, %c0_73, %c1_74, %c0_75] : memref<2x10x10x8xbf16, #tpu.memory_space<vmem>>, vector<2x8x8x8xbf16>
    %c0_76 = arith.constant 0 : index
    %c0_77 = arith.constant 0 : index
    %c2_78 = arith.constant 2 : index
    %c0_79 = arith.constant 0 : index
    %60 = vector.load %arg9[%c0_76, %c0_77, %c2_78, %c0_79] : memref<2x10x10x8xbf16, #tpu.memory_space<vmem>>, vector<2x8x8x8xbf16>
    %c0_80 = arith.constant 0 : index
    %c1_81 = arith.constant 1 : index
    %c0_82 = arith.constant 0 : index
    %c0_83 = arith.constant 0 : index
    %61 = vector.load %arg9[%c0_80, %c1_81, %c0_82, %c0_83] : memref<2x10x10x8xbf16, #tpu.memory_space<vmem>>, vector<2x8x8x8xbf16>
    %c0_84 = arith.constant 0 : index
    %c1_85 = arith.constant 1 : index
    %c1_86 = arith.constant 1 : index
    %c0_87 = arith.constant 0 : index
    %62 = vector.load %arg9[%c0_84, %c1_85, %c1_86, %c0_87] : memref<2x10x10x8xbf16, #tpu.memory_space<vmem>>, vector<2x8x8x8xbf16>
    %c0_88 = arith.constant 0 : index
    %c1_89 = arith.constant 1 : index
    %c2_90 = arith.constant 2 : index
    %c0_91 = arith.constant 0 : index
    %63 = vector.load %arg9[%c0_88, %c1_89, %c2_90, %c0_91] : memref<2x10x10x8xbf16, #tpu.memory_space<vmem>>, vector<2x8x8x8xbf16>
    %c0_92 = arith.constant 0 : index
    %c2_93 = arith.constant 2 : index
    %c0_94 = arith.constant 0 : index
    %c0_95 = arith.constant 0 : index
    %64 = vector.load %arg9[%c0_92, %c2_93, %c0_94, %c0_95] : memref<2x10x10x8xbf16, #tpu.memory_space<vmem>>, vector<2x8x8x8xbf16>
    %c0_96 = arith.constant 0 : index
    %c2_97 = arith.constant 2 : index
    %c1_98 = arith.constant 1 : index
    %c0_99 = arith.constant 0 : index
    %65 = vector.load %arg9[%c0_96, %c2_97, %c1_98, %c0_99] : memref<2x10x10x8xbf16, #tpu.memory_space<vmem>>, vector<2x8x8x8xbf16>
    %c0_100 = arith.constant 0 : index
    %c2_101 = arith.constant 2 : index
    %c2_102 = arith.constant 2 : index
    %c0_103 = arith.constant 0 : index
    %66 = vector.load %arg9[%c0_100, %c2_101, %c2_102, %c0_103] : memref<2x10x10x8xbf16, #tpu.memory_space<vmem>>, vector<2x8x8x8xbf16>
    %67 = tpu.concatenate %58, %59, %60, %61, %62, %63, %64, %65, %66 in 3 : vector<2x8x8x8xbf16>, vector<2x8x8x8xbf16>, vector<2x8x8x8xbf16>, vector<2x8x8x8xbf16>, vector<2x8x8x8xbf16>, vector<2x8x8x8xbf16>, vector<2x8x8x8xbf16>, vector<2x8x8x8xbf16>, vector<2x8x8x8xbf16> -> vector<2x8x8x72xbf16>
    %68 = vector.shape_cast %67 : vector<2x8x8x72xbf16> to vector<128x72xbf16>
    %c0_104 = arith.constant 0 : index
    %c0_105 = arith.constant 0 : index
    %69 = vector.load %arg4[%c0_104, %c0_105] : memref<8x72xbf16, #tpu.memory_space<vmem>>, vector<8x72xbf16>
    %cst_106 = arith.constant dense<0.000000e+00> : vector<8x128xf32>
    %70 = tpu.matmul %69, %68, %cst_106 {dimension_numbers = #tpu.dot_dimension_numbers<[1], [1], [0], [0], [0, 0, 1, 0], [], []>} : vector<8x72xbf16>, vector<128x72xbf16>, vector<8x128xf32> -> vector<8x128xf32>
    %c0_107 = arith.constant 0 : index
    %c0_108 = arith.constant 0 : index
    %71 = vector.load %arg5[%c0_107, %c0_108] : memref<8x1xf32, #tpu.memory_space<vmem>>, vector<8x1xf32>
    %c0_109 = arith.constant 0 : index
    %c0_110 = arith.constant 0 : index
    %72 = vector.load %arg6[%c0_109, %c0_110] : memref<8x1xf32, #tpu.memory_space<vmem>>, vector<8x1xf32>
    %cst_111 = arith.constant dense<0.000000e+00> : vector<8xf32>
    %73 = vector.multi_reduction <add>, %70, %cst_111 [1] : vector<8x128xf32> to vector<8xf32>
    %74 = vector.shape_cast %73 : vector<8xf32> to vector<8x1xf32>
    %cst_112 = arith.constant 7.812500e-03 : f32
    %75 = vector.broadcast %cst_112 : f32 to vector<8x1xf32>
    %76 = arith.mulf %74, %75 : vector<8x1xf32>
    %77 = vector.broadcast %76 : vector<8x1xf32> to vector<8x128xf32>
    %78 = arith.subf %70, %77 : vector<8x128xf32>
    %79 = arith.mulf %78, %78 : vector<8x128xf32>
    %cst_113 = arith.constant dense<0.000000e+00> : vector<8xf32>
    %80 = vector.multi_reduction <add>, %79, %cst_113 [1] : vector<8x128xf32> to vector<8xf32>
    %81 = vector.shape_cast %80 : vector<8xf32> to vector<8x1xf32>
    %cst_114 = arith.constant 7.812500e-03 : f32
    %82 = vector.broadcast %cst_114 : f32 to vector<8x1xf32>
    %83 = arith.mulf %81, %82 : vector<8x1xf32>
    %cst_115 = arith.constant 9.99999974E-6 : f32
    %84 = vector.broadcast %cst_115 : f32 to vector<8x1xf32>
    %85 = arith.addf %83, %84 : vector<8x1xf32>
    %86 = math.rsqrt %85 : vector<8x1xf32>
    %87 = arith.mulf %71, %86 : vector<8x1xf32>
    %88 = vector.broadcast %87 : vector<8x1xf32> to vector<8x128xf32>
    %89 = arith.mulf %78, %88 : vector<8x128xf32>
    %90 = vector.broadcast %72 : vector<8x1xf32> to vector<8x128xf32>
    %91 = arith.addf %89, %90 : vector<8x128xf32>
    %cst_116 = arith.constant 0.000000e+00 : f32
    %92 = vector.broadcast %cst_116 : f32 to vector<8x128xf32>
    %93 = arith.cmpf ogt, %91, %92 : vector<8x128xf32>
    %cst_117 = arith.constant 0.00999999977 : f32
    %94 = vector.broadcast %cst_117 : f32 to vector<8x128xf32>
    %95 = arith.mulf %94, %91 : vector<8x128xf32>
    %96 = arith.select %93, %91, %95 : vector<8x128xi1>, vector<8x128xf32>
    %c0_118 = arith.constant 0 : index
    %c0_119 = arith.constant 0 : index
    %97 = vector.load %arg7[%c0_118, %c0_119] : memref<8x128xf32, #tpu.memory_space<vmem>>, vector<8x128xf32>
    tpu.vector_store %arg7[%c0_118, %c0_119], %96 {strides = array<i32>} : memref<8x128xf32, #tpu.memory_space<vmem>>, vector<8x128xf32>,
    return
  }
}

</mosaic_0001>

<llo_original>
// kernel: tpu_custom_call.1
$region0: #{tpu_custom_call.1}
  #allocation0 [shape = 'u32[]', space=smem, size = 0x4, offset = 0x4, fixed_abs, tag = 'smem constant byte address 0x4 - core index']
  #allocation1 [shape = 'u32[72,128]{1,0:T(1,128)}', space=vmem, size = 0x9000, scoped, tag = 'internal scratch']
  #allocation2 [shape = 'bf16[2,10,10,4]{3,2,1,0:T(8,128)(2,1)}', space=vmem, size = 0x14000, scoped, tag = 'scratch operand']
  #allocation3 [shape = 'bf16[2,10,10,8]{3,2,1,0:T(8,128)(2,1)}', space=vmem, size = 0x14000, scoped, tag = 'scratch operand']
  %s0 = inlined_call_operand.vmem [shape: bf16[2,16,8,8], index: 0, kind: input, shape index: {}]
  %s1 = inlined_call_operand.vmem [shape: bf16[8,36], index: 1, kind: input, shape index: {}]
  %s2 = inlined_call_operand.vmem [shape: f32[8,1], index: 2, kind: input, shape index: {}]
  %s3 = inlined_call_operand.vmem [shape: f32[8,1], index: 3, kind: input, shape index: {}]
  %s4 = inlined_call_operand.vmem [shape: bf16[8,72], index: 4, kind: input, shape index: {}]
  %s5 = inlined_call_operand.vmem [shape: f32[8,1], index: 5, kind: input, shape index: {}]
  %s6 = inlined_call_operand.vmem [shape: f32[8,1], index: 6, kind: input, shape index: {}]
  %s7 = inlined_call_operand.hbm [shape: f32[8,128], index: 7, kind: output, shape index: {}]
  %s8 = sld [smem:[#allocation0]]
  $region38: #{tpu_custom_call.1} parent=0
    _
  %s10 = ssub.s32 1, %s8
  %s11 = scalar_select 0, %s10, %s8
  $region1: #{tpu_custom_call.1} parent=0
    #allocation4 [shape = 'u8[4096]{0}', space=vmem, size = 0x1000, scoped, tag = 'output window, operand 0, single buffered']
    #allocation5 [shape = 's32[1]{0}', space=sflag, size = 0x4, scoped, tag = 'scoped memory for tpu_custom_call.1']
    %12 = vsyncpa [#allocation5], 0
    // Predicated region
    $region2: #{tpu_custom_call.1} parent=1 // pred_check
      _
    $region3: #{tpu_custom_call.1} parent=1 // pred_check_branch
      %14 = sbr.rel (0) target = $region5
    $region4: #{tpu_custom_call.1} parent=1 // pred_region
      _
    $region5: #{tpu_custom_call.1} parent=1 // pred_fallthru
      _
    // Predicated region
    $region6: #{tpu_custom_call.1} parent=1 // pred_check
      _
    $region7: #{tpu_custom_call.1} parent=1 // pred_check_branch
      %16 = sbr.rel (0) target = $region9
    $region8: #{tpu_custom_call.1} parent=1 // pred_region
      _
    $region9: #{tpu_custom_call.1} parent=1 // pred_fallthru
      _
    // Predicated region
    $region10: #{tpu_custom_call.1} parent=1 // pred_check
      _
    $region11: #{tpu_custom_call.1} parent=1 // pred_check_branch
      %18 = sbr.rel (0) target = $region13
    $region12: #{tpu_custom_call.1} parent=1 // pred_region
      _
    $region13: #{tpu_custom_call.1} parent=1 // pred_fallthru
      _
    // Predicated region
    $region14: #{tpu_custom_call.1} parent=1 // pred_check
      _
    $region15: #{tpu_custom_call.1} parent=1 // pred_check_branch
      %20 = sbr.rel (0) target = $region17
    $region16: #{tpu_custom_call.1} parent=1 // pred_region
      _
    $region17: #{tpu_custom_call.1} parent=1 // pred_fallthru
      _
    // Predicated region
    $region18: #{tpu_custom_call.1} parent=1 // pred_check
      _
    $region19: #{tpu_custom_call.1} parent=1 // pred_check_branch
      %22 = sbr.rel (0) target = $region21
    $region20: #{tpu_custom_call.1} parent=1 // pred_region
      _
    $region21: #{tpu_custom_call.1} parent=1 // pred_fallthru
      _
    // Predicated region
    $region22: #{tpu_custom_call.1} parent=1 // pred_check
      _
    $region23: #{tpu_custom_call.1} parent=1 // pred_check_branch
      %24 = sbr.rel (0) target = $region25
    $region24: #{tpu_custom_call.1} parent=1 // pred_region
      _
    $region25: #{tpu_custom_call.1} parent=1 // pred_fallthru
      _
    // Predicated region
    $region26: #{tpu_custom_call.1} parent=1 // pred_check
      _
    $region27: #{tpu_custom_call.1} parent=1 // pred_check_branch
      %26 = sbr.rel (0) target = $region29
    $region28: #{tpu_custom_call.1} parent=1 // pred_region
      _
    $region29: #{tpu_custom_call.1} parent=1 // pred_fallthru
      _
    %v28 = vld [vmem:[%s0] sm:$0xf]
    %v29 = vld [vmem:[%s0 + $0x4] sm:$0xf]
    %v30 = vld [vmem:[%s0 + $0x8] sm:$0xf]
    %v31 = vld [vmem:[%s0 + $0xc] sm:$0xf]
    %v32 = vld [vmem:[%s0 + $0x10] sm:$0xf]
    %v33 = vld [vmem:[%s0 + $0x14] sm:$0xf]
    %v34 = vld [vmem:[%s0 + $0x18] sm:$0xf]
    %v35 = vld [vmem:[%s0 + $0x1c] sm:$0xf]
    %v36 = vld [vmem:[%s0 + $0x20] sm:$0xf]
    %v37 = vld [vmem:[%s0 + $0x24] sm:$0xf]
    %v38 = vld [vmem:[%s0 + $0x28] sm:$0xf]
    %v39 = vld [vmem:[%s0 + $0x2c] sm:$0xf]
    %v40 = vld [vmem:[%s0 + $0x30] sm:$0xf]
    %v41 = vld [vmem:[%s0 + $0x34] sm:$0xf]
    %v42 = vld [vmem:[%s0 + $0x38] sm:$0xf]
    %v43 = vld [vmem:[%s0 + $0x3c] sm:$0xf]
    %v44 = vld [vmem:[%s0 + $0x40] sm:$0xf]
    %v45 = vld [vmem:[%s0 + $0x44] sm:$0xf]
    %v46 = vld [vmem:[%s0 + $0x48] sm:$0xf]
    %v47 = vld [vmem:[%s0 + $0x4c] sm:$0xf]
    %v48 = vld [vmem:[%s0 + $0x50] sm:$0xf]
    %v49 = vld [vmem:[%s0 + $0x54] sm:$0xf]
    %v50 = vld [vmem:[%s0 + $0x58] sm:$0xf]
    %v51 = vld [vmem:[%s0 + $0x5c] sm:$0xf]
    %v52 = vld [vmem:[%s0 + $0x60] sm:$0xf]
    %v53 = vld [vmem:[%s0 + $0x64] sm:$0xf]
    %v54 = vld [vmem:[%s0 + $0x68] sm:$0xf]
    %v55 = vld [vmem:[%s0 + $0x6c] sm:$0xf]
    %v56 = vld [vmem:[%s0 + $0x70] sm:$0xf]
    %v57 = vld [vmem:[%s0 + $0x74] sm:$0xf]
    %v58 = vld [vmem:[%s0 + $0x78] sm:$0xf]
    %v59 = vld [vmem:[%s0 + $0x7c] sm:$0xf]
    %v60 = vunpack.c.l.bf16 %v28
    %v61 = vunpack.c.l.bf16 %v29
    %v62 = vunpack.c.l.bf16 %v30
    %v63 = vunpack.c.l.bf16 %v31
    %v64 = vunpack.c.l.bf16 %v32
    %v65 = vunpack.c.l.bf16 %v33
    %v66 = vunpack.c.l.bf16 %v34
    %v67 = vunpack.c.l.bf16 %v35
    %v68 = vunpack.c.l.bf16 %v36
    %v69 = vunpack.c.l.bf16 %v37
    %v70 = vunpack.c.l.bf16 %v38
    %v71 = vunpack.c.l.bf16 %v39
    %v72 = vunpack.c.l.bf16 %v40
    %v73 = vunpack.c.l.bf16 %v41
    %v74 = vunpack.c.l.bf16 %v42
    %v75 = vunpack.c.l.bf16 %v43
    %v76 = vunpack.c.l.bf16 %v44
    %v77 = vunpack.c.l.bf16 %v45
    %v78 = vunpack.c.l.bf16 %v46
    %v79 = vunpack.c.l.bf16 %v47
    %v80 = vunpack.c.l.bf16 %v48
    %v81 = vunpack.c.l.bf16 %v49
    %v82 = vunpack.c.l.bf16 %v50
    %v83 = vunpack.c.l.bf16 %v51
    %v84 = vunpack.c.l.bf16 %v52
    %v85 = vunpack.c.l.bf16 %v53
    %v86 = vunpack.c.l.bf16 %v54
    %v87 = vunpack.c.l.bf16 %v55
    %v88 = vunpack.c.l.bf16 %v56
    %v89 = vunpack.c.l.bf16 %v57
    %v90 = vunpack.c.l.bf16 %v58
    %v91 = vunpack.c.l.bf16 %v59
    %124 = vrot.lane.b32.xlu0 %v60, 124
    %v125 = vpop.permute.xlu0 %124
    %126 = vrot.lane.b32.xlu0 %v61, 124
    %v127 = vpop.permute.xlu0 %126
    %128 = vrot.lane.b32.xlu0 %v62, 124
    %v129 = vpop.permute.xlu0 %128
    %130 = vrot.lane.b32.xlu0 %v63, 124
    %v131 = vpop.permute.xlu0 %130
    %132 = vrot.lane.b32.xlu0 %v64, 124
    %v133 = vpop.permute.xlu0 %132
    %134 = vrot.lane.b32.xlu0 %v65, 124
    %v135 = vpop.permute.xlu0 %134
    %136 = vrot.lane.b32.xlu0 %v66, 124
    %v137 = vpop.permute.xlu0 %136
    %138 = vrot.lane.b32.xlu0 %v67, 124
    %v139 = vpop.permute.xlu0 %138
    %140 = vrot.lane.b32.xlu0 %v68, 124
    %v141 = vpop.permute.xlu0 %140
    %142 = vrot.lane.b32.xlu0 %v69, 124
    %v143 = vpop.permute.xlu0 %142
    %144 = vrot.lane.b32.xlu0 %v70, 124
    %v145 = vpop.permute.xlu0 %144
    %146 = vrot.lane.b32.xlu0 %v71, 124
    %v147 = vpop.permute.xlu0 %146
    %148 = vrot.lane.b32.xlu0 %v72, 124
    %v149 = vpop.permute.xlu0 %148
    %150 = vrot.lane.b32.xlu0 %v73, 124
    %v151 = vpop.permute.xlu0 %150
    %152 = vrot.lane.b32.xlu0 %v74, 124
    %v153 = vpop.permute.xlu0 %152
    %154 = vrot.lane.b32.xlu0 %v75, 124
    %v155 = vpop.permute.xlu0 %154
    %156 = vrot.lane.b32.xlu0 %v76, 124
    %v157 = vpop.permute.xlu0 %156
    %158 = vrot.lane.b32.xlu0 %v77, 124
    %v159 = vpop.permute.xlu0 %158
    %160 = vrot.lane.b32.xlu0 %v78, 124
    %v161 = vpop.permute.xlu0 %160
    %162 = vrot.lane.b32.xlu0 %v79, 124
    %v163 = vpop.permute.xlu0 %162
    %164 = vrot.lane.b32.xlu0 %v80, 124
    %v165 = vpop.permute.xlu0 %164
    %166 = vrot.lane.b32.xlu0 %v81, 124
    %v167 = vpop.permute.xlu0 %166
    %168 = vrot.lane.b32.xlu0 %v82, 124
    %v169 = vpop.permute.xlu0 %168
    %170 = vrot.lane.b32.xlu0 %v83, 124
    %v171 = vpop.permute.xlu0 %170
    %172 = vrot.lane.b32.xlu0 %v84, 124
    %v173 = vpop.permute.xlu0 %172
    %174 = vrot.lane.b32.xlu0 %v85, 124
    %v175 = vpop.permute.xlu0 %174
    %176 = vrot.lane.b32.xlu0 %v86, 124
    %v177 = vpop.permute.xlu0 %176
    %178 = vrot.lane.b32.xlu0 %v87, 124
    %v179 = vpop.permute.xlu0 %178
    %180 = vrot.lane.b32.xlu0 %v88, 124
    %v181 = vpop.permute.xlu0 %180
    %182 = vrot.lane.b32.xlu0 %v89, 124
    %v183 = vpop.permute.xlu0 %182
    %184 = vrot.lane.b32.xlu0 %v90, 124
    %v185 = vpop.permute.xlu0 %184
    %186 = vrot.lane.b32.xlu0 %v91, 124
    %v187 = vpop.permute.xlu0 %186
    %v220 = vmax.f32 %v60, %v125
    %v221 = vmax.f32 %v61, %v127
    %v222 = vmax.f32 %v62, %v129
    %v223 = vmax.f32 %v63, %v131
    %v224 = vmax.f32 %v64, %v133
    %v225 = vmax.f32 %v65, %v135
    %v226 = vmax.f32 %v66, %v137
    %v227 = vmax.f32 %v67, %v139
    %v228 = vmax.f32 %v68, %v141
    %v229 = vmax.f32 %v69, %v143
    %v230 = vmax.f32 %v70, %v145
    %v231 = vmax.f32 %v71, %v147
    %v232 = vmax.f32 %v72, %v149
    %v233 = vmax.f32 %v73, %v151
    %v234 = vmax.f32 %v74, %v153
    %v235 = vmax.f32 %v75, %v155
    %v236 = vmax.f32 %v76, %v157
    %v237 = vmax.f32 %v77, %v159
    %v238 = vmax.f32 %v78, %v161
    %v239 = vmax.f32 %v79, %v163
    %v240 = vmax.f32 %v80, %v165
    %v241 = vmax.f32 %v81, %v167
    %v242 = vmax.f32 %v82, %v169
    %v243 = vmax.f32 %v83, %v171
    %v244 = vmax.f32 %v84, %v173
    %v245 = vmax.f32 %v85, %v175
    %v246 = vmax.f32 %v86, %v177
    %v247 = vmax.f32 %v87, %v179
    %v248 = vmax.f32 %v88, %v181
    %v249 = vmax.f32 %v89, %v183
    %v250 = vmax.f32 %v90, %v185
    %v251 = vmax.f32 %v91, %v187
    %v252 = vpack.c.bf16 %v220, %v220
    %v253 = vpack.c.bf16 %v221, %v221
    %v254 = vpack.c.bf16 %v222, %v222
    %v255 = vpack.c.bf16 %v223, %v223
    %v256 = vpack.c.bf16 %v224, %v224
    %v257 = vpack.c.bf16 %v225, %v225
    %v258 = vpack.c.bf16 %v226, %v226
    %v259 = vpack.c.bf16 %v227, %v227
    %v260 = vpack.c.bf16 %v228, %v228
    %v261 = vpack.c.bf16 %v229, %v229
    %v262 = vpack.c.bf16 %v230, %v230
    %v263 = vpack.c.bf16 %v231, %v231
    %v264 = vpack.c.bf16 %v232, %v232
    %v265 = vpack.c.bf16 %v233, %v233
    %v266 = vpack.c.bf16 %v234, %v234
    %v267 = vpack.c.bf16 %v235, %v235
    %v268 = vpack.c.bf16 %v236, %v236
    %v269 = vpack.c.bf16 %v237, %v237
    %v270 = vpack.c.bf16 %v238, %v238
    %v271 = vpack.c.bf16 %v239, %v239
    %v272 = vpack.c.bf16 %v240, %v240
    %v273 = vpack.c.bf16 %v241, %v241
    %v274 = vpack.c.bf16 %v242, %v242
    %v275 = vpack.c.bf16 %v243, %v243
    %v276 = vpack.c.bf16 %v244, %v244
    %v277 = vpack.c.bf16 %v245, %v245
    %v278 = vpack.c.bf16 %v246, %v246
    %v279 = vpack.c.bf16 %v247, %v247
    %v280 = vpack.c.bf16 %v248, %v248
    %v281 = vpack.c.bf16 %v249, %v249
    %v282 = vpack.c.bf16 %v250, %v250
    %v283 = vpack.c.bf16 %v251, %v251
    %v284 = vunpack.c.l.bf16 %v252
    %v285 = vunpack.c.l.bf16 %v254
    %v286 = vunpack.c.l.bf16 %v256
    %v287 = vunpack.c.l.bf16 %v258
    %v288 = vunpack.c.l.bf16 %v260
    %v289 = vunpack.c.l.bf16 %v262
    %v290 = vunpack.c.l.bf16 %v264
    %v291 = vunpack.c.l.bf16 %v266
    %v292 = vunpack.c.l.bf16 %v268
    %v293 = vunpack.c.l.bf16 %v270
    %v294 = vunpack.c.l.bf16 %v272
    %v295 = vunpack.c.l.bf16 %v274
    %v296 = vunpack.c.l.bf16 %v276
    %v297 = vunpack.c.l.bf16 %v278
    %v298 = vunpack.c.l.bf16 %v280
    %v299 = vunpack.c.l.bf16 %v282
    %v300 = vunpack.c.l.bf16 %v253
    %v301 = vunpack.c.l.bf16 %v255
    %v302 = vunpack.c.l.bf16 %v257
    %v303 = vunpack.c.l.bf16 %v259
    %v304 = vunpack.c.l.bf16 %v261
    %v305 = vunpack.c.l.bf16 %v263
    %v306 = vunpack.c.l.bf16 %v265
    %v307 = vunpack.c.l.bf16 %v267
    %v308 = vunpack.c.l.bf16 %v269
    %v309 = vunpack.c.l.bf16 %v271
    %v310 = vunpack.c.l.bf16 %v273
    %v311 = vunpack.c.l.bf16 %v275
    %v312 = vunpack.c.l.bf16 %v277
    %v313 = vunpack.c.l.bf16 %v279
    %v314 = vunpack.c.l.bf16 %v281
    %v315 = vunpack.c.l.bf16 %v283
    %v316 = vmax.f32 %v284, %v300
    %v317 = vmax.f32 %v285, %v301
    %v318 = vmax.f32 %v286, %v302
    %v319 = vmax.f32 %v287, %v303
    %v320 = vmax.f32 %v288, %v304
    %v321 = vmax.f32 %v289, %v305
    %v322 = vmax.f32 %v290, %v306
    %v323 = vmax.f32 %v291, %v307
    %v324 = vmax.f32 %v292, %v308
    %v325 = vmax.f32 %v293, %v309
    %v326 = vmax.f32 %v294, %v310
    %v327 = vmax.f32 %v295, %v311
    %v328 = vmax.f32 %v296, %v312
    %v329 = vmax.f32 %v297, %v313
    %v330 = vmax.f32 %v298, %v314
    %v331 = vmax.f32 %v299, %v315
    %v332 = vpack.c.bf16 %v316, %v316
    %v333 = vpack.c.bf16 %v317, %v317
    %v334 = vpack.c.bf16 %v318, %v318
    %v335 = vpack.c.bf16 %v319, %v319
    %v336 = vpack.c.bf16 %v320, %v320
    %v337 = vpack.c.bf16 %v321, %v321
    %v338 = vpack.c.bf16 %v322, %v322
    %v339 = vpack.c.bf16 %v323, %v323
    %v340 = vpack.c.bf16 %v324, %v324
    %v341 = vpack.c.bf16 %v325, %v325
    %v342 = vpack.c.bf16 %v326, %v326
    %v343 = vpack.c.bf16 %v327, %v327
    %v344 = vpack.c.bf16 %v328, %v328
    %v345 = vpack.c.bf16 %v329, %v329
    %v346 = vpack.c.bf16 %v330, %v330
    %v347 = vpack.c.bf16 %v331, %v331
    %vm348 = vcmask 27648
    %349 = vst.msk [vmem:[#allocation2] sm:$0xf] %vm348, 0
    %vm350 = vcmask 24576
    %351 = vst.msk [vmem:[#allocation2 + $0x4] sm:$0x1] %vm350, 0
    %352 = vst.msk [vmem:[#allocation2 + $0x8] sm:$0xf] %vm348, 0
    %353 = vst.msk [vmem:[#allocation2 + $0xc] sm:$0x1] %vm350, 0
    %354 = vst.msk [vmem:[#allocation2 + $0x10] sm:$0xf] %vm348, 0
    %355 = vst.msk [vmem:[#allocation2 + $0x14] sm:$0x1] %vm350, 0
    %356 = vst.msk [vmem:[#allocation2 + $0x18] sm:$0xf] %vm348, 0
    %357 = vst.msk [vmem:[#allocation2 + $0x1c] sm:$0x1] %vm350, 0
    %358 = vst.msk [vmem:[#allocation2 + $0x20] sm:$0xf] %vm348, 0
    %359 = vst.msk [vmem:[#allocation2 + $0x24] sm:$0x1] %vm350, 0
    %360 = vst.msk [vmem:[#allocation2 + $0x28] sm:$0xf] %vm348, 0
    %361 = vst.msk [vmem:[#allocation2 + $0x2c] sm:$0x1] %vm350, 0
    %362 = vst.msk [vmem:[#allocation2 + $0x30] sm:$0xf] %vm348, 0
    %363 = vst.msk [vmem:[#allocation2 + $0x34] sm:$0x1] %vm350, 0
    %364 = vst.msk [vmem:[#allocation2 + $0x38] sm:$0xf] %vm348, 0
    %365 = vst.msk [vmem:[#allocation2 + $0x3c] sm:$0x1] %vm350, 0
    %366 = vst.msk [vmem:[#allocation2 + $0x40] sm:$0xf] %vm348, 0
    %367 = vst.msk [vmem:[#allocation2 + $0x44] sm:$0x1] %vm350, 0
    %368 = vst.msk [vmem:[#allocation2 + $0x48] sm:$0xf] %vm348, 0
    %369 = vst.msk [vmem:[#allocation2 + $0x4c] sm:$0x1] %vm350, 0
    %370 = vst.msk [vmem:[#allocation2 + $0x50] sm:$0xf] %vm348, 0
    %371 = vst.msk [vmem:[#allocation2 + $0x54] sm:$0x1] %vm350, 0
    %372 = vst.msk [vmem:[#allocation2 + $0x58] sm:$0xf] %vm348, 0
    %373 = vst.msk [vmem:[#allocation2 + $0x5c] sm:$0x1] %vm350, 0
    %374 = vst.msk [vmem:[#allocation2 + $0x60] sm:$0xf] %vm348, 0
    %375 = vst.msk [vmem:[#allocation2 + $0x64] sm:$0x1] %vm350, 0
    %376 = vst.msk [vmem:[#allocation2 + $0x68] sm:$0xf] %vm348, 0
    %377 = vst.msk [vmem:[#allocation2 + $0x6c] sm:$0x1] %vm350, 0
    %378 = vst.msk [vmem:[#allocation2 + $0x70] sm:$0xf] %vm348, 0
    %379 = vst.msk [vmem:[#allocation2 + $0x74] sm:$0x1] %vm350, 0
    %380 = vst.msk [vmem:[#allocation2 + $0x78] sm:$0xf] %vm348, 0
    %381 = vst.msk [vmem:[#allocation2 + $0x7c] sm:$0x1] %vm350, 0
    %382 = vst.msk [vmem:[#allocation2 + $0x80] sm:$0xf] %vm348, 0
    %383 = vst.msk [vmem:[#allocation2 + $0x84] sm:$0x1] %vm350, 0
    %384 = vst.msk [vmem:[#allocation2 + $0x88] sm:$0xf] %vm348, 0
    %385 = vst.msk [vmem:[#allocation2 + $0x8c] sm:$0x1] %vm350, 0
    %386 = vst.msk [vmem:[#allocation2 + $0x90] sm:$0xf] %vm348, 0
    %387 = vst.msk [vmem:[#allocation2 + $0x94] sm:$0x1] %vm350, 0
    %388 = vst.msk [vmem:[#allocation2 + $0x98] sm:$0xf] %vm348, 0
    %389 = vst.msk [vmem:[#allocation2 + $0x9c] sm:$0x1] %vm350, 0
    %v391 = vshrl.u32 %v332, 16
    %v393 = vrot.slane %v391, 7
    %v394 = vshll.u32 %v332, 16
    %v396 = vor.u32 %v393, %v394
    %v397 = vrot.slane %v393, 4
    %v399 = vshrl.u32 %v333, 16
    %v401 = vrot.slane %v399, 7
    %v402 = vshll.u32 %v333, 16
    %v404 = vor.u32 %v401, %v402
    %v405 = vrot.slane %v401, 4
    %v407 = vshrl.u32 %v334, 16
    %v409 = vrot.slane %v407, 7
    %v410 = vshll.u32 %v334, 16
    %v412 = vor.u32 %v409, %v410
    %v413 = vrot.slane %v409, 4
    %v415 = vshrl.u32 %v335, 16
    %v417 = vrot.slane %v415, 7
    %v418 = vshll.u32 %v335, 16
    %v420 = vor.u32 %v417, %v418
    %v421 = vrot.slane %v417, 4
    %v423 = vshrl.u32 %v336, 16
    %v425 = vrot.slane %v423, 7
    %v426 = vshll.u32 %v336, 16
    %v428 = vor.u32 %v425, %v426
    %v429 = vrot.slane %v425, 4
    %v431 = vshrl.u32 %v337, 16
    %v433 = vrot.slane %v431, 7
    %v434 = vshll.u32 %v337, 16
    %v436 = vor.u32 %v433, %v434
    %v437 = vrot.slane %v433, 4
    %v439 = vshrl.u32 %v338, 16
    %v441 = vrot.slane %v439, 7
    %v442 = vshll.u32 %v338, 16
    %v444 = vor.u32 %v441, %v442
    %v445 = vrot.slane %v441, 4
    %v447 = vshrl.u32 %v339, 16
    %v449 = vrot.slane %v447, 7
    %v450 = vshll.u32 %v339, 16
    %v452 = vor.u32 %v449, %v450
    %v453 = vrot.slane %v449, 4
    %v455 = vshrl.u32 %v340, 16
    %v457 = vrot.slane %v455, 7
    %v458 = vshll.u32 %v340, 16
    %v460 = vor.u32 %v457, %v458
    %v461 = vrot.slane %v457, 4
    %v463 = vshrl.u32 %v341, 16
    %v465 = vrot.slane %v463, 7
    %v466 = vshll.u32 %v341, 16
    %v468 = vor.u32 %v465, %v466
    %v469 = vrot.slane %v465, 4
    %v471 = vshrl.u32 %v342, 16
    %v473 = vrot.slane %v471, 7
    %v474 = vshll.u32 %v342, 16
    %v476 = vor.u32 %v473, %v474
    %v477 = vrot.slane %v473, 4
    %v479 = vshrl.u32 %v343, 16
    %v481 = vrot.slane %v479, 7
    %v482 = vshll.u32 %v343, 16
    %v484 = vor.u32 %v481, %v482
    %v485 = vrot.slane %v481, 4
    %v487 = vshrl.u32 %v344, 16
    %v489 = vrot.slane %v487, 7
    %v490 = vshll.u32 %v344, 16
    %v492 = vor.u32 %v489, %v490
    %v493 = vrot.slane %v489, 4
    %v495 = vshrl.u32 %v345, 16
    %v497 = vrot.slane %v495, 7
    %v498 = vshll.u32 %v345, 16
    %v500 = vor.u32 %v497, %v498
    %v501 = vrot.slane %v497, 4
    %v503 = vshrl.u32 %v346, 16
    %v505 = vrot.slane %v503, 7
    %v506 = vshll.u32 %v346, 16
    %v508 = vor.u32 %v505, %v506
    %v509 = vrot.slane %v505, 4
    %v511 = vshrl.u32 %v347, 16
    %v513 = vrot.slane %v511, 7
    %v514 = vshll.u32 %v347, 16
    %v516 = vor.u32 %v513, %v514
    %v517 = vrot.slane %v513, 4
    %s550 = scalar_lea.vmem [#allocation2], 8
    %vm551 = vcmask 27648
    %vm552 = vsmask.f32 7938
    %vm553 = vmand %vm551, %vm552
    %v554 = vld [vmem:[%s550] sm:$0xf]
    %v555 = vsel %vm553, %v396, %v554
    %556 = vst [vmem:[%s550] sm:$0xf] %v555
    %vm557 = vcmask 24576
    %vm558 = vsmask.f32 256
    %vm559 = vmand %vm557, %vm558
    %v560 = vld [vmem:[%s550 + $0x4] sm:$0x1]
    %v561 = vsel %vm559, %v397, %v560
    %562 = vst [vmem:[%s550 + $0x4] sm:$0x1] %v561
    %v563 = vld [vmem:[%s550 + $0x8] sm:$0xf]
    %v564 = vsel %vm553, %v404, %v563
    %565 = vst [vmem:[%s550 + $0x8] sm:$0xf] %v564
    %v566 = vld [vmem:[%s550 + $0xc] sm:$0x1]
    %v567 = vsel %vm559, %v405, %v566
    %568 = vst [vmem:[%s550 + $0xc] sm:$0x1] %v567
    %v569 = vld [vmem:[%s550 + $0x10] sm:$0xf]
    %v570 = vsel %vm553, %v412, %v569
    %571 = vst [vmem:[%s550 + $0x10] sm:$0xf] %v570
    %v572 = vld [vmem:[%s550 + $0x14] sm:$0x1]
    %v573 = vsel %vm559, %v413, %v572
    %574 = vst [vmem:[%s550 + $0x14] sm:$0x1] %v573
    %v575 = vld [vmem:[%s550 + $0x18] sm:$0xf]
    %v576 = vsel %vm553, %v420, %v575
    %577 = vst [vmem:[%s550 + $0x18] sm:$0xf] %v576
    %v578 = vld [vmem:[%s550 + $0x1c] sm:$0x1]
    %v579 = vsel %vm559, %v421, %v578
    %580 = vst [vmem:[%s550 + $0x1c] sm:$0x1] %v579
    %v581 = vld [vmem:[%s550 + $0x20] sm:$0xf]
    %v582 = vsel %vm553, %v428, %v581
    %583 = vst [vmem:[%s550 + $0x20] sm:$0xf] %v582
    %v584 = vld [vmem:[%s550 + $0x24] sm:$0x1]
    %v585 = vsel %vm559, %v429, %v584
    %586 = vst [vmem:[%s550 + $0x24] sm:$0x1] %v585
    %v587 = vld [vmem:[%s550 + $0x28] sm:$0xf]
    %v588 = vsel %vm553, %v436, %v587
    %589 = vst [vmem:[%s550 + $0x28] sm:$0xf] %v588
    %v590 = vld [vmem:[%s550 + $0x2c] sm:$0x1]
    %v591 = vsel %vm559, %v437, %v590
    %592 = vst [vmem:[%s550 + $0x2c] sm:$0x1] %v591
    %v593 = vld [vmem:[%s550 + $0x30] sm:$0xf]
    %v594 = vsel %vm553, %v444, %v593
    %595 = vst [vmem:[%s550 + $0x30] sm:$0xf] %v594
    %v596 = vld [vmem:[%s550 + $0x34] sm:$0x1]
    %v597 = vsel %vm559, %v445, %v596
    %598 = vst [vmem:[%s550 + $0x34] sm:$0x1] %v597
    %v599 = vld [vmem:[%s550 + $0x38] sm:$0xf]
    %v600 = vsel %vm553, %v452, %v599
    %601 = vst [vmem:[%s550 + $0x38] sm:$0xf] %v600
    %v602 = vld [vmem:[%s550 + $0x3c] sm:$0x1]
    %v603 = vsel %vm559, %v453, %v602
    %604 = vst [vmem:[%s550 + $0x3c] sm:$0x1] %v603
    %v605 = vld [vmem:[%s550 + $0x50] sm:$0xf]
    %v606 = vsel %vm553, %v460, %v605
    %607 = vst [vmem:[%s550 + $0x50] sm:$0xf] %v606
    %v608 = vld [vmem:[%s550 + $0x54] sm:$0x1]
    %v609 = vsel %vm559, %v461, %v608
    %610 = vst [vmem:[%s550 + $0x54] sm:$0x1] %v609
    %v611 = vld [vmem:[%s550 + $0x58] sm:$0xf]
    %v612 = vsel %vm553, %v468, %v611
    %613 = vst [vmem:[%s550 + $0x58] sm:$0xf] %v612
    %v614 = vld [vmem:[%s550 + $0x5c] sm:$0x1]
    %v615 = vsel %vm559, %v469, %v614
    %616 = vst [vmem:[%s550 + $0x5c] sm:$0x1] %v615
    %v617 = vld [vmem:[%s550 + $0x60] sm:$0xf]
    %v618 = vsel %vm553, %v476, %v617
    %619 = vst [vmem:[%s550 + $0x60] sm:$0xf] %v618
    %v620 = vld [vmem:[%s550 + $0x64] sm:$0x1]
    %v621 = vsel %vm559, %v477, %v620
    %622 = vst [vmem:[%s550 + $0x64] sm:$0x1] %v621
    %v623 = vld [vmem:[%s550 + $0x68] sm:$0xf]
    %v624 = vsel %vm553, %v484, %v623
    %625 = vst [vmem:[%s550 + $0x68] sm:$0xf] %v624
    %v626 = vld [vmem:[%s550 + $0x6c] sm:$0x1]
    %v627 = vsel %vm559, %v485, %v626
    %628 = vst [vmem:[%s550 + $0x6c] sm:$0x1] %v627
    %v629 = vld [vmem:[%s550 + $0x70] sm:$0xf]
    %v630 = vsel %vm553, %v492, %v629
    %631 = vst [vmem:[%s550 + $0x70] sm:$0xf] %v630
    %v632 = vld [vmem:[%s550 + $0x74] sm:$0x1]
    %v633 = vsel %vm559, %v493, %v632
    %634 = vst [vmem:[%s550 + $0x74] sm:$0x1] %v633
    %v635 = vld [vmem:[%s550 + $0x78] sm:$0xf]
    %v636 = vsel %vm553, %v500, %v635
    %637 = vst [vmem:[%s550 + $0x78] sm:$0xf] %v636
    %v638 = vld [vmem:[%s550 + $0x7c] sm:$0x1]
    %v639 = vsel %vm559, %v501, %v638
    %640 = vst [vmem:[%s550 + $0x7c] sm:$0x1] %v639
    %v641 = vld [vmem:[%s550 + $0x80] sm:$0xf]
    %v642 = vsel %vm553, %v508, %v641
    %643 = vst [vmem:[%s550 + $0x80] sm:$0xf] %v642
    %v644 = vld [vmem:[%s550 + $0x84] sm:$0x1]
    %v645 = vsel %vm559, %v509, %v644
    %646 = vst [vmem:[%s550 + $0x84] sm:$0x1] %v645
    %v647 = vld [vmem:[%s550 + $0x88] sm:$0xf]
    %v648 = vsel %vm553, %v516, %v647
    %649 = vst [vmem:[%s550 + $0x88] sm:$0xf] %v648
    %v650 = vld [vmem:[%s550 + $0x8c] sm:$0x1]
    %v651 = vsel %vm559, %v517, %v650
    %652 = vst [vmem:[%s550 + $0x8c] sm:$0x1] %v651
    %v653 = vld [vmem:[#allocation2] sm:$0xf]
    %v654 = vld [vmem:[#allocation2 + $0x8] sm:$0xf]
    %v655 = vld [vmem:[#allocation2 + $0x10] sm:$0xf]
    %v656 = vld [vmem:[#allocation2 + $0x18] sm:$0xf]
    %v657 = vld [vmem:[#allocation2 + $0x20] sm:$0xf]
    %v658 = vld [vmem:[#allocation2 + $0x28] sm:$0xf]
    %v659 = vld [vmem:[#allocation2 + $0x30] sm:$0xf]
    %v660 = vld [vmem:[#allocation2 + $0x38] sm:$0xf]
    %v661 = vld [vmem:[#allocation2 + $0x50] sm:$0xf]
    %v662 = vld [vmem:[#allocation2 + $0x58] sm:$0xf]
    %v663 = vld [vmem:[#allocation2 + $0x60] sm:$0xf]
    %v664 = vld [vmem:[#allocation2 + $0x68] sm:$0xf]
    %v665 = vld [vmem:[#allocation2 + $0x70] sm:$0xf]
    %v666 = vld [vmem:[#allocation2 + $0x78] sm:$0xf]
    %v667 = vld [vmem:[#allocation2 + $0x80] sm:$0xf]
    %v668 = vld [vmem:[#allocation2 + $0x88] sm:$0xf]
    %v669 = vld [vmem:[#allocation2 + $0x4] sm:$0x1]
    %v670 = vld [vmem:[#allocation2 + $0xc] sm:$0x1]
    %v671 = vld [vmem:[#allocation2 + $0x14] sm:$0x1]
    %v672 = vld [vmem:[#allocation2 + $0x1c] sm:$0x1]
    %v673 = vld [vmem:[#allocation2 + $0x24] sm:$0x1]
    %v674 = vld [vmem:[#allocation2 + $0x2c] sm:$0x1]
    %v675 = vld [vmem:[#allocation2 + $0x34] sm:$0x1]
    %v676 = vld [vmem:[#allocation2 + $0x3c] sm:$0x1]
    %v677 = vld [vmem:[#allocation2 + $0x54] sm:$0x1]
    %v678 = vld [vmem:[#allocation2 + $0x5c] sm:$0x1]
    %v679 = vld [vmem:[#allocation2 + $0x64] sm:$0x1]
    %v680 = vld [vmem:[#allocation2 + $0x6c] sm:$0x1]
    %v681 = vld [vmem:[#allocation2 + $0x74] sm:$0x1]
    %v682 = vld [vmem:[#allocation2 + $0x7c] sm:$0x1]
    %v683 = vld [vmem:[#allocation2 + $0x84] sm:$0x1]
    %v684 = vld [vmem:[#allocation2 + $0x8c] sm:$0x1]
    %v685 = vld [vmem:[#allocation2] sm:$0xe]
    %v686 = vld [vmem:[#allocation2 + $0x8] sm:$0xe]
    %v687 = vld [vmem:[#allocation2 + $0x10] sm:$0xe]
    %v688 = vld [vmem:[#allocation2 + $0x18] sm:$0xe]
    %v689 = vld [vmem:[#allocation2 + $0x20] sm:$0xe]
    %v690 = vld [vmem:[#allocation2 + $0x28] sm:$0xe]
    %v691 = vld [vmem:[#allocation2 + $0x30] sm:$0xe]
    %v692 = vld [vmem:[#allocation2 + $0x38] sm:$0xe]
    %v693 = vld [vmem:[#allocation2 + $0x50] sm:$0xe]
    %v694 = vld [vmem:[#allocation2 + $0x58] sm:$0xe]
    %v695 = vld [vmem:[#allocation2 + $0x60] sm:$0xe]
    %v696 = vld [vmem:[#allocation2 + $0x68] sm:$0xe]
    %v697 = vld [vmem:[#allocation2 + $0x70] sm:$0xe]
    %v698 = vld [vmem:[#allocation2 + $0x78] sm:$0xe]
    %v699 = vld [vmem:[#allocation2 + $0x80] sm:$0xe]
    %v700 = vld [vmem:[#allocation2 + $0x88] sm:$0xe]
    %v701 = vld [vmem:[%s550] sm:$0xf]
    %v702 = vld [vmem:[%s550 + $0x8] sm:$0xf]
    %v703 = vld [vmem:[%s550 + $0x10] sm:$0xf]
    %v704 = vld [vmem:[%s550 + $0x18] sm:$0xf]
    %v705 = vld [vmem:[%s550 + $0x20] sm:$0xf]
    %v706 = vld [vmem:[%s550 + $0x28] sm:$0xf]
    %v707 = vld [vmem:[%s550 + $0x30] sm:$0xf]
    %v708 = vld [vmem:[%s550 + $0x38] sm:$0xf]
    %v709 = vld [vmem:[%s550 + $0x50] sm:$0xf]
    %v710 = vld [vmem:[%s550 + $0x58] sm:$0xf]
    %v711 = vld [vmem:[%s550 + $0x60] sm:$0xf]
    %v712 = vld [vmem:[%s550 + $0x68] sm:$0xf]
    %v713 = vld [vmem:[%s550 + $0x70] sm:$0xf]
    %v714 = vld [vmem:[%s550 + $0x78] sm:$0xf]
    %v715 = vld [vmem:[%s550 + $0x80] sm:$0xf]
    %v716 = vld [vmem:[%s550 + $0x88] sm:$0xf]
    %v717 = vld [vmem:[%s550 + $0x4] sm:$0x1]
    %v718 = vld [vmem:[%s550 + $0xc] sm:$0x1]
    %v719 = vld [vmem:[%s550 + $0x14] sm:$0x1]
    %v720 = vld [vmem:[%s550 + $0x1c] sm:$0x1]
    %v721 = vld [vmem:[%s550 + $0x24] sm:$0x1]
    %v722 = vld [vmem:[%s550 + $0x2c] sm:$0x1]
    %v723 = vld [vmem:[%s550 + $0x34] sm:$0x1]
    %v724 = vld [vmem:[%s550 + $0x3c] sm:$0x1]
    %v725 = vld [vmem:[%s550 + $0x54] sm:$0x1]
    %v726 = vld [vmem:[%s550 + $0x5c] sm:$0x1]
    %v727 = vld [vmem:[%s550 + $0x64] sm:$0x1]
    %v728 = vld [vmem:[%s550 + $0x6c] sm:$0x1]
    %v729 = vld [vmem:[%s550 + $0x74] sm:$0x1]
    %v730 = vld [vmem:[%s550 + $0x7c] sm:$0x1]
    %v731 = vld [vmem:[%s550 + $0x84] sm:$0x1]
    %v732 = vld [vmem:[%s550 + $0x8c] sm:$0x1]
    %v733 = vld [vmem:[%s550] sm:$0xe]
    %v734 = vld [vmem:[%s550 + $0x8] sm:$0xe]
    %v735 = vld [vmem:[%s550 + $0x10] sm:$0xe]
    %v736 = vld [vmem:[%s550 + $0x18] sm:$0xe]
    %v737 = vld [vmem:[%s550 + $0x20] sm:$0xe]
    %v738 = vld [vmem:[%s550 + $0x28] sm:$0xe]
    %v739 = vld [vmem:[%s550 + $0x30] sm:$0xe]
    %v740 = vld [vmem:[%s550 + $0x38] sm:$0xe]
    %v741 = vld [vmem:[%s550 + $0x50] sm:$0xe]
    %v742 = vld [vmem:[%s550 + $0x58] sm:$0xe]
    %v743 = vld [vmem:[%s550 + $0x60] sm:$0xe]
    %v744 = vld [vmem:[%s550 + $0x68] sm:$0xe]
    %v745 = vld [vmem:[%s550 + $0x70] sm:$0xe]
    %v746 = vld [vmem:[%s550 + $0x78] sm:$0xe]
    %v747 = vld [vmem:[%s550 + $0x80] sm:$0xe]
    %v748 = vld [vmem:[%s550 + $0x88] sm:$0xe]
    %s749 = scalar_lea.vmem [#allocation2], 16
    %v750 = vld [vmem:[%s749] sm:$0xf]
    %v751 = vld [vmem:[%s749 + $0x8] sm:$0xf]
    %v752 = vld [vmem:[%s749 + $0x10] sm:$0xf]
    %v753 = vld [vmem:[%s749 + $0x18] sm:$0xf]
    %v754 = vld [vmem:[%s749 + $0x20] sm:$0xf]
    %v755 = vld [vmem:[%s749 + $0x28] sm:$0xf]
    %v756 = vld [vmem:[%s749 + $0x30] sm:$0xf]
    %v757 = vld [vmem:[%s749 + $0x38] sm:$0xf]
    %v758 = vld [vmem:[%s749 + $0x50] sm:$0xf]
    %v759 = vld [vmem:[%s749 + $0x58] sm:$0xf]
    %v760 = vld [vmem:[%s749 + $0x60] sm:$0xf]
    %v761 = vld [vmem:[%s749 + $0x68] sm:$0xf]
    %v762 = vld [vmem:[%s749 + $0x70] sm:$0xf]
    %v763 = vld [vmem:[%s749 + $0x78] sm:$0xf]
    %v764 = vld [vmem:[%s749 + $0x80] sm:$0xf]
    %v765 = vld [vmem:[%s749 + $0x88] sm:$0xf]
    %v766 = vld [vmem:[%s749 + $0x4] sm:$0x1]
    %v767 = vld [vmem:[%s749 + $0xc] sm:$0x1]
    %v768 = vld [vmem:[%s749 + $0x14] sm:$0x1]
    %v769 = vld [vmem:[%s749 + $0x1c] sm:$0x1]
    %v770 = vld [vmem:[%s749 + $0x24] sm:$0x1]
    %v771 = vld [vmem:[%s749 + $0x2c] sm:$0x1]
    %v772 = vld [vmem:[%s749 + $0x34] sm:$0x1]
    %v773 = vld [vmem:[%s749 + $0x3c] sm:$0x1]
    %v774 = vld [vmem:[%s749 + $0x54] sm:$0x1]
    %v775 = vld [vmem:[%s749 + $0x5c] sm:$0x1]
    %v776 = vld [vmem:[%s749 + $0x64] sm:$0x1]
    %v777 = vld [vmem:[%s749 + $0x6c] sm:$0x1]
    %v778 = vld [vmem:[%s749 + $0x74] sm:$0x1]
    %v779 = vld [vmem:[%s749 + $0x7c] sm:$0x1]
    %v780 = vld [vmem:[%s749 + $0x84] sm:$0x1]
    %v781 = vld [vmem:[%s749 + $0x8c] sm:$0x1]
    %v782 = vld [vmem:[%s749] sm:$0xe]
    %v783 = vld [vmem:[%s749 + $0x8] sm:$0xe]
    %v784 = vld [vmem:[%s749 + $0x10] sm:$0xe]
    %v785 = vld [vmem:[%s749 + $0x18] sm:$0xe]
    %v786 = vld [vmem:[%s749 + $0x20] sm:$0xe]
    %v787 = vld [vmem:[%s749 + $0x28] sm:$0xe]
    %v788 = vld [vmem:[%s749 + $0x30] sm:$0xe]
    %v789 = vld [vmem:[%s749 + $0x38] sm:$0xe]
    %v790 = vld [vmem:[%s749 + $0x50] sm:$0xe]
    %v791 = vld [vmem:[%s749 + $0x58] sm:$0xe]
    %v792 = vld [vmem:[%s749 + $0x60] sm:$0xe]
    %v793 = vld [vmem:[%s749 + $0x68] sm:$0xe]
    %v794 = vld [vmem:[%s749 + $0x70] sm:$0xe]
    %v795 = vld [vmem:[%s749 + $0x78] sm:$0xe]
    %v796 = vld [vmem:[%s749 + $0x80] sm:$0xe]
    %v797 = vld [vmem:[%s749 + $0x88] sm:$0xe]
    %v830 = vunpack.c.l.b16 %v653
    %v831 = vunpack.c.l.b16 %v669
    %v832 = vunpack.c.l.b16 %v654
    %v833 = vunpack.c.l.b16 %v670
    %v834 = vunpack.c.l.b16 %v655
    %v835 = vunpack.c.l.b16 %v671
    %v836 = vunpack.c.l.b16 %v656
    %v837 = vunpack.c.l.b16 %v672
    %v838 = vunpack.c.l.b16 %v657
    %v839 = vunpack.c.l.b16 %v673
    %v840 = vunpack.c.l.b16 %v658
    %v841 = vunpack.c.l.b16 %v674
    %v842 = vunpack.c.l.b16 %v659
    %v843 = vunpack.c.l.b16 %v675
    %v844 = vunpack.c.l.b16 %v660
    %v845 = vunpack.c.l.b16 %v676
    %v846 = vunpack.c.l.b16 %v661
    %v847 = vunpack.c.l.b16 %v677
    %v848 = vunpack.c.l.b16 %v662
    %v849 = vunpack.c.l.b16 %v678
    %v850 = vunpack.c.l.b16 %v663
    %v851 = vunpack.c.l.b16 %v679
    %v852 = vunpack.c.l.b16 %v664
    %v853 = vunpack.c.l.b16 %v680
    %v854 = vunpack.c.l.b16 %v665
    %v855 = vunpack.c.l.b16 %v681
    %v856 = vunpack.c.l.b16 %v666
    %v857 = vunpack.c.l.b16 %v682
    %v858 = vunpack.c.l.b16 %v667
    %v859 = vunpack.c.l.b16 %v683
    %v860 = vunpack.c.l.b16 %v668
    %v861 = vunpack.c.l.b16 %v684
    %v862 = vpack.c.b16 %v831, %v830
    %v863 = vpack.c.b16 %v833, %v832
    %v864 = vpack.c.b16 %v835, %v834
    %v865 = vpack.c.b16 %v837, %v836
    %v866 = vpack.c.b16 %v839, %v838
    %v867 = vpack.c.b16 %v841, %v840
    %v868 = vpack.c.b16 %v843, %v842
    %v869 = vpack.c.b16 %v845, %v844
    %v870 = vpack.c.b16 %v847, %v846
    %v871 = vpack.c.b16 %v849, %v848
    %v872 = vpack.c.b16 %v851, %v850
    %v873 = vpack.c.b16 %v853, %v852
    %v874 = vpack.c.b16 %v855, %v854
    %v875 = vpack.c.b16 %v857, %v856
    %v876 = vpack.c.b16 %v859, %v858
    %v877 = vpack.c.b16 %v861, %v860
    %v879 = vshrl.u32 %v862, 16
    %v881 = vshll.u32 %v862, 16
    %v883 = vrot.slane %v881, 1
    %v884 = vor.u32 %v879, %v883
    %v886 = vshrl.u32 %v863, 16
    %v888 = vshll.u32 %v863, 16
    %v890 = vrot.slane %v888, 1
    %v891 = vor.u32 %v886, %v890
    %v893 = vshrl.u32 %v864, 16
    %v895 = vshll.u32 %v864, 16
    %v897 = vrot.slane %v895, 1
    %v898 = vor.u32 %v893, %v897
    %v900 = vshrl.u32 %v865, 16
    %v902 = vshll.u32 %v865, 16
    %v904 = vrot.slane %v902, 1
    %v905 = vor.u32 %v900, %v904
    %v907 = vshrl.u32 %v866, 16
    %v909 = vshll.u32 %v866, 16
    %v911 = vrot.slane %v909, 1
    %v912 = vor.u32 %v907, %v911
    %v914 = vshrl.u32 %v867, 16
    %v916 = vshll.u32 %v867, 16
    %v918 = vrot.slane %v916, 1
    %v919 = vor.u32 %v914, %v918
    %v921 = vshrl.u32 %v868, 16
    %v923 = vshll.u32 %v868, 16
    %v925 = vrot.slane %v923, 1
    %v926 = vor.u32 %v921, %v925
    %v928 = vshrl.u32 %v869, 16
    %v930 = vshll.u32 %v869, 16
    %v932 = vrot.slane %v930, 1
    %v933 = vor.u32 %v928, %v932
    %v935 = vshrl.u32 %v870, 16
    %v937 = vshll.u32 %v870, 16
    %v939 = vrot.slane %v937, 1
    %v940 = vor.u32 %v935, %v939
    %v942 = vshrl.u32 %v871, 16
    %v944 = vshll.u32 %v871, 16
    %v946 = vrot.slane %v944, 1
    %v947 = vor.u32 %v942, %v946
    %v949 = vshrl.u32 %v872, 16
    %v951 = vshll.u32 %v872, 16
    %v953 = vrot.slane %v951, 1
    %v954 = vor.u32 %v949, %v953
    %v956 = vshrl.u32 %v873, 16
    %v958 = vshll.u32 %v873, 16
    %v960 = vrot.slane %v958, 1
    %v961 = vor.u32 %v956, %v960
    %v963 = vshrl.u32 %v874, 16
    %v965 = vshll.u32 %v874, 16
    %v967 = vrot.slane %v965, 1
    %v968 = vor.u32 %v963, %v967
    %v970 = vshrl.u32 %v875, 16
    %v972 = vshll.u32 %v875, 16
    %v974 = vrot.slane %v972, 1
    %v975 = vor.u32 %v970, %v974
    %v977 = vshrl.u32 %v876, 16
    %v979 = vshll.u32 %v876, 16
    %v981 = vrot.slane %v979, 1
    %v982 = vor.u32 %v977, %v981
    %v984 = vshrl.u32 %v877, 16
    %v986 = vshll.u32 %v877, 16
    %v988 = vrot.slane %v986, 1
    %v989 = vor.u32 %v984, %v988
    %990 = vrot.lane.b32.xlu0 %v884, 4
    %v991 = vpop.permute.xlu0 %990
    %992 = vrot.lane.b32.xlu0 %v891, 4
    %v993 = vpop.permute.xlu0 %992
    %994 = vrot.lane.b32.xlu0 %v898, 4
    %v995 = vpop.permute.xlu0 %994
    %996 = vrot.lane.b32.xlu0 %v905, 4
    %v997 = vpop.permute.xlu0 %996
    %998 = vrot.lane.b32.xlu0 %v912, 4
    %v999 = vpop.permute.xlu0 %998
    %1000 = vrot.lane.b32.xlu0 %v919, 4
    %v1001 = vpop.permute.xlu0 %1000
    %1002 = vrot.lane.b32.xlu0 %v926, 4
    %v1003 = vpop.permute.xlu0 %1002
    %1004 = vrot.lane.b32.xlu0 %v933, 4
    %v1005 = vpop.permute.xlu0 %1004
    %1006 = vrot.lane.b32.xlu0 %v940, 4
    %v1007 = vpop.permute.xlu0 %1006
    %1008 = vrot.lane.b32.xlu0 %v947, 4
    %v1009 = vpop.permute.xlu0 %1008
    %1010 = vrot.lane.b32.xlu0 %v954, 4
    %v1011 = vpop.permute.xlu0 %1010
    %1012 = vrot.lane.b32.xlu0 %v961, 4
    %v1013 = vpop.permute.xlu0 %1012
    %1014 = vrot.lane.b32.xlu0 %v968, 4
    %v1015 = vpop.permute.xlu0 %1014
    %1016 = vrot.lane.b32.xlu0 %v975, 4
    %v1017 = vpop.permute.xlu0 %1016
    %1018 = vrot.lane.b32.xlu0 %v982, 4
    %v1019 = vpop.permute.xlu0 %1018
    %1020 = vrot.lane.b32.xlu0 %v989, 4
    %v1021 = vpop.permute.xlu0 %1020
    %v1038 = vunpack.c.l.b16 %v685
    %v1039 = vunpack.c.l.b16 %v686
    %v1040 = vunpack.c.l.b16 %v687
    %v1041 = vunpack.c.l.b16 %v688
    %v1042 = vunpack.c.l.b16 %v689
    %v1043 = vunpack.c.l.b16 %v690
    %v1044 = vunpack.c.l.b16 %v691
    %v1045 = vunpack.c.l.b16 %v692
    %v1046 = vunpack.c.l.b16 %v693
    %v1047 = vunpack.c.l.b16 %v694
    %v1048 = vunpack.c.l.b16 %v695
    %v1049 = vunpack.c.l.b16 %v696
    %v1050 = vunpack.c.l.b16 %v697
    %v1051 = vunpack.c.l.b16 %v698
    %v1052 = vunpack.c.l.b16 %v699
    %v1053 = vunpack.c.l.b16 %v700
    %v1054 = vpack.c.b16 %v831, %v1038
    %v1055 = vpack.c.b16 %v833, %v1039
    %v1056 = vpack.c.b16 %v835, %v1040
    %v1057 = vpack.c.b16 %v837, %v1041
    %v1058 = vpack.c.b16 %v839, %v1042
    %v1059 = vpack.c.b16 %v841, %v1043
    %v1060 = vpack.c.b16 %v843, %v1044
    %v1061 = vpack.c.b16 %v845, %v1045
    %v1062 = vpack.c.b16 %v847, %v1046
    %v1063 = vpack.c.b16 %v849, %v1047
    %v1064 = vpack.c.b16 %v851, %v1048
    %v1065 = vpack.c.b16 %v853, %v1049
    %v1066 = vpack.c.b16 %v855, %v1050
    %v1067 = vpack.c.b16 %v857, %v1051
    %v1068 = vpack.c.b16 %v859, %v1052
    %v1069 = vpack.c.b16 %v861, %v1053
    %v1070 = vrot.slane %v1054, 1
    %v1071 = vrot.slane %v1055, 1
    %v1072 = vrot.slane %v1056, 1
    %v1073 = vrot.slane %v1057, 1
    %v1074 = vrot.slane %v1058, 1
    %v1075 = vrot.slane %v1059, 1
    %v1076 = vrot.slane %v1060, 1
    %v1077 = vrot.slane %v1061, 1
    %v1078 = vrot.slane %v1062, 1
    %v1079 = vrot.slane %v1063, 1
    %v1080 = vrot.slane %v1064, 1
    %v1081 = vrot.slane %v1065, 1
    %v1082 = vrot.slane %v1066, 1
    %v1083 = vrot.slane %v1067, 1
    %v1084 = vrot.slane %v1068, 1
    %v1085 = vrot.slane %v1069, 1
    %1086 = vrot.lane.b32.xlu0 %v1070, 8
    %v1087 = vpop.permute.xlu0 %1086
    %1088 = vrot.lane.b32.xlu0 %v1071, 8
    %v1089 = vpop.permute.xlu0 %1088
    %1090 = vrot.lane.b32.xlu0 %v1072, 8
    %v1091 = vpop.permute.xlu0 %1090
    %1092 = vrot.lane.b32.xlu0 %v1073, 8
    %v1093 = vpop.permute.xlu0 %1092
    %1094 = vrot.lane.b32.xlu0 %v1074, 8
    %v1095 = vpop.permute.xlu0 %1094
    %1096 = vrot.lane.b32.xlu0 %v1075, 8
    %v1097 = vpop.permute.xlu0 %1096
    %1098 = vrot.lane.b32.xlu0 %v1076, 8
    %v1099 = vpop.permute.xlu0 %1098
    %1100 = vrot.lane.b32.xlu0 %v1077, 8
    %v1101 = vpop.permute.xlu0 %1100
    %1102 = vrot.lane.b32.xlu0 %v1078, 8
    %v1103 = vpop.permute.xlu0 %1102
    %1104 = vrot.lane.b32.xlu0 %v1079, 8
    %v1105 = vpop.permute.xlu0 %1104
    %1106 = vrot.lane.b32.xlu0 %v1080, 8
    %v1107 = vpop.permute.xlu0 %1106
    %1108 = vrot.lane.b32.xlu0 %v1081, 8
    %v1109 = vpop.permute.xlu0 %1108
    %1110 = vrot.lane.b32.xlu0 %v1082, 8
    %v1111 = vpop.permute.xlu0 %1110
    %1112 = vrot.lane.b32.xlu0 %v1083, 8
    %v1113 = vpop.permute.xlu0 %1112
    %1114 = vrot.lane.b32.xlu0 %v1084, 8
    %v1115 = vpop.permute.xlu0 %1114
    %1116 = vrot.lane.b32.xlu0 %v1085, 8
    %v1117 = vpop.permute.xlu0 %1116
    %v1134 = vunpack.c.l.b16 %v701
    %v1135 = vunpack.c.l.b16 %v702
    %v1136 = vunpack.c.l.b16 %v703
    %v1137 = vunpack.c.l.b16 %v704
    %v1138 = vunpack.c.l.b16 %v705
    %v1139 = vunpack.c.l.b16 %v706
    %v1140 = vunpack.c.l.b16 %v707
    %v1141 = vunpack.c.l.b16 %v708
    %v1142 = vunpack.c.l.b16 %v709
    %v1143 = vunpack.c.l.b16 %v710
    %v1144 = vunpack.c.l.b16 %v711
    %v1145 = vunpack.c.l.b16 %v712
    %v1146 = vunpack.c.l.b16 %v713
    %v1147 = vunpack.c.l.b16 %v714
    %v1148 = vunpack.c.l.b16 %v715
    %v1149 = vunpack.c.l.b16 %v716
    %v1150 = vpack.c.b16 %v1134, %v1134
    %v1151 = vpack.c.b16 %v1135, %v1135
    %v1152 = vpack.c.b16 %v1136, %v1136
    %v1153 = vpack.c.b16 %v1137, %v1137
    %v1154 = vpack.c.b16 %v1138, %v1138
    %v1155 = vpack.c.b16 %v1139, %v1139
    %v1156 = vpack.c.b16 %v1140, %v1140
    %v1157 = vpack.c.b16 %v1141, %v1141
    %v1158 = vpack.c.b16 %v1142, %v1142
    %v1159 = vpack.c.b16 %v1143, %v1143
    %v1160 = vpack.c.b16 %v1144, %v1144
    %v1161 = vpack.c.b16 %v1145, %v1145
    %v1162 = vpack.c.b16 %v1146, %v1146
    %v1163 = vpack.c.b16 %v1147, %v1147
    %v1164 = vpack.c.b16 %v1148, %v1148
    %v1165 = vpack.c.b16 %v1149, %v1149
    %1166 = vrot.lane.b32.xlu0 %v1150, 12
    %v1167 = vpop.permute.xlu0 %1166
    %1168 = vrot.lane.b32.xlu0 %v1151, 12
    %v1169 = vpop.permute.xlu0 %1168
    %1170 = vrot.lane.b32.xlu0 %v1152, 12
    %v1171 = vpop.permute.xlu0 %1170
    %1172 = vrot.lane.b32.xlu0 %v1153, 12
    %v1173 = vpop.permute.xlu0 %1172
    %1174 = vrot.lane.b32.xlu0 %v1154, 12
    %v1175 = vpop.permute.xlu0 %1174
    %1176 = vrot.lane.b32.xlu0 %v1155, 12
    %v1177 = vpop.permute.xlu0 %1176
    %1178 = vrot.lane.b32.xlu0 %v1156, 12
    %v1179 = vpop.permute.xlu0 %1178
    %1180 = vrot.lane.b32.xlu0 %v1157, 12
    %v1181 = vpop.permute.xlu0 %1180
    %1182 = vrot.lane.b32.xlu0 %v1158, 12
    %v1183 = vpop.permute.xlu0 %1182
    %1184 = vrot.lane.b32.xlu0 %v1159, 12
    %v1185 = vpop.permute.xlu0 %1184
    %1186 = vrot.lane.b32.xlu0 %v1160, 12
    %v1187 = vpop.permute.xlu0 %1186
    %1188 = vrot.lane.b32.xlu0 %v1161, 12
    %v1189 = vpop.permute.xlu0 %1188
    %1190 = vrot.lane.b32.xlu0 %v1162, 12
    %v1191 = vpop.permute.xlu0 %1190
    %1192 = vrot.lane.b32.xlu0 %v1163, 12
    %v1193 = vpop.permute.xlu0 %1192
    %1194 = vrot.lane.b32.xlu0 %v1164, 12
    %v1195 = vpop.permute.xlu0 %1194
    %1196 = vrot.lane.b32.xlu0 %v1165, 12
    %v1197 = vpop.permute.xlu0 %1196
    %v1214 = vunpack.c.l.b16 %v717
    %v1215 = vunpack.c.l.b16 %v718
    %v1216 = vunpack.c.l.b16 %v719
    %v1217 = vunpack.c.l.b16 %v720
    %v1218 = vunpack.c.l.b16 %v721
    %v1219 = vunpack.c.l.b16 %v722
    %v1220 = vunpack.c.l.b16 %v723
    %v1221 = vunpack.c.l.b16 %v724
    %v1222 = vunpack.c.l.b16 %v725
    %v1223 = vunpack.c.l.b16 %v726
    %v1224 = vunpack.c.l.b16 %v727
    %v1225 = vunpack.c.l.b16 %v728
    %v1226 = vunpack.c.l.b16 %v729
    %v1227 = vunpack.c.l.b16 %v730
    %v1228 = vunpack.c.l.b16 %v731
    %v1229 = vunpack.c.l.b16 %v732
    %v1230 = vpack.c.b16 %v1214, %v1134
    %v1231 = vpack.c.b16 %v1215, %v1135
    %v1232 = vpack.c.b16 %v1216, %v1136
    %v1233 = vpack.c.b16 %v1217, %v1137
    %v1234 = vpack.c.b16 %v1218, %v1138
    %v1235 = vpack.c.b16 %v1219, %v1139
    %v1236 = vpack.c.b16 %v1220, %v1140
    %v1237 = vpack.c.b16 %v1221, %v1141
    %v1238 = vpack.c.b16 %v1222, %v1142
    %v1239 = vpack.c.b16 %v1223, %v1143
    %v1240 = vpack.c.b16 %v1224, %v1144
    %v1241 = vpack.c.b16 %v1225, %v1145
    %v1242 = vpack.c.b16 %v1226, %v1146
    %v1243 = vpack.c.b16 %v1227, %v1147
    %v1244 = vpack.c.b16 %v1228, %v1148
    %v1245 = vpack.c.b16 %v1229, %v1149
    %v1247 = vshrl.u32 %v1230, 16
    %v1249 = vshll.u32 %v1230, 16
    %v1251 = vrot.slane %v1249, 1
    %v1252 = vor.u32 %v1247, %v1251
    %v1254 = vshrl.u32 %v1231, 16
    %v1256 = vshll.u32 %v1231, 16
    %v1258 = vrot.slane %v1256, 1
    %v1259 = vor.u32 %v1254, %v1258
    %v1261 = vshrl.u32 %v1232, 16
    %v1263 = vshll.u32 %v1232, 16
    %v1265 = vrot.slane %v1263, 1
    %v1266 = vor.u32 %v1261, %v1265
    %v1268 = vshrl.u32 %v1233, 16
    %v1270 = vshll.u32 %v1233, 16
    %v1272 = vrot.slane %v1270, 1
    %v1273 = vor.u32 %v1268, %v1272
    %v1275 = vshrl.u32 %v1234, 16
    %v1277 = vshll.u32 %v1234, 16
    %v1279 = vrot.slane %v1277, 1
    %v1280 = vor.u32 %v1275, %v1279
    %v1282 = vshrl.u32 %v1235, 16
    %v1284 = vshll.u32 %v1235, 16
    %v1286 = vrot.slane %v1284, 1
    %v1287 = vor.u32 %v1282, %v1286
    %v1289 = vshrl.u32 %v1236, 16
    %v1291 = vshll.u32 %v1236, 16
    %v1293 = vrot.slane %v1291, 1
    %v1294 = vor.u32 %v1289, %v1293
    %v1296 = vshrl.u32 %v1237, 16
    %v1298 = vshll.u32 %v1237, 16
    %v1300 = vrot.slane %v1298, 1
    %v1301 = vor.u32 %v1296, %v1300
    %v1303 = vshrl.u32 %v1238, 16
    %v1305 = vshll.u32 %v1238, 16
    %v1307 = vrot.slane %v1305, 1
    %v1308 = vor.u32 %v1303, %v1307
    %v1310 = vshrl.u32 %v1239, 16
    %v1312 = vshll.u32 %v1239, 16
    %v1314 = vrot.slane %v1312, 1
    %v1315 = vor.u32 %v1310, %v1314
    %v1317 = vshrl.u32 %v1240, 16
    %v1319 = vshll.u32 %v1240, 16
    %v1321 = vrot.slane %v1319, 1
    %v1322 = vor.u32 %v1317, %v1321
    %v1324 = vshrl.u32 %v1241, 16
    %v1326 = vshll.u32 %v1241, 16
    %v1328 = vrot.slane %v1326, 1
    %v1329 = vor.u32 %v1324, %v1328
    %v1331 = vshrl.u32 %v1242, 16
    %v1333 = vshll.u32 %v1242, 16
    %v1335 = vrot.slane %v1333, 1
    %v1336 = vor.u32 %v1331, %v1335
    %v1338 = vshrl.u32 %v1243, 16
    %v1340 = vshll.u32 %v1243, 16
    %v1342 = vrot.slane %v1340, 1
    %v1343 = vor.u32 %v1338, %v1342
    %v1345 = vshrl.u32 %v1244, 16
    %v1347 = vshll.u32 %v1244, 16
    %v1349 = vrot.slane %v1347, 1
    %v1350 = vor.u32 %v1345, %v1349
    %v1352 = vshrl.u32 %v1245, 16
    %v1354 = vshll.u32 %v1245, 16
    %v1356 = vrot.slane %v1354, 1
    %v1357 = vor.u32 %v1352, %v1356
    %1358 = vrot.lane.b32.xlu0 %v1252, 16
    %v1359 = vpop.permute.xlu0 %1358
    %1360 = vrot.lane.b32.xlu0 %v1259, 16
    %v1361 = vpop.permute.xlu0 %1360
    %1362 = vrot.lane.b32.xlu0 %v1266, 16
    %v1363 = vpop.permute.xlu0 %1362
    %1364 = vrot.lane.b32.xlu0 %v1273, 16
    %v1365 = vpop.permute.xlu0 %1364
    %1366 = vrot.lane.b32.xlu0 %v1280, 16
    %v1367 = vpop.permute.xlu0 %1366
    %1368 = vrot.lane.b32.xlu0 %v1287, 16
    %v1369 = vpop.permute.xlu0 %1368
    %1370 = vrot.lane.b32.xlu0 %v1294, 16
    %v1371 = vpop.permute.xlu0 %1370
    %1372 = vrot.lane.b32.xlu0 %v1301, 16
    %v1373 = vpop.permute.xlu0 %1372
    %1374 = vrot.lane.b32.xlu0 %v1308, 16
    %v1375 = vpop.permute.xlu0 %1374
    %1376 = vrot.lane.b32.xlu0 %v1315, 16
    %v1377 = vpop.permute.xlu0 %1376
    %1378 = vrot.lane.b32.xlu0 %v1322, 16
    %v1379 = vpop.permute.xlu0 %1378
    %1380 = vrot.lane.b32.xlu0 %v1329, 16
    %v1381 = vpop.permute.xlu0 %1380
    %1382 = vrot.lane.b32.xlu0 %v1336, 16
    %v1383 = vpop.permute.xlu0 %1382
    %1384 = vrot.lane.b32.xlu0 %v1343, 16
    %v1385 = vpop.permute.xlu0 %1384
    %1386 = vrot.lane.b32.xlu0 %v1350, 16
    %v1387 = vpop.permute.xlu0 %1386
    %1388 = vrot.lane.b32.xlu0 %v1357, 16
    %v1389 = vpop.permute.xlu0 %1388
    %v1406 = vunpack.c.l.b16 %v733
    %v1407 = vunpack.c.l.b16 %v734
    %v1408 = vunpack.c.l.b16 %v735
    %v1409 = vunpack.c.l.b16 %v736
    %v1410 = vunpack.c.l.b16 %v737
    %v1411 = vunpack.c.l.b16 %v738
    %v1412 = vunpack.c.l.b16 %v739
    %v1413 = vunpack.c.l.b16 %v740
    %v1414 = vunpack.c.l.b16 %v741
    %v1415 = vunpack.c.l.b16 %v742
    %v1416 = vunpack.c.l.b16 %v743
    %v1417 = vunpack.c.l.b16 %v744
    %v1418 = vunpack.c.l.b16 %v745
    %v1419 = vunpack.c.l.b16 %v746
    %v1420 = vunpack.c.l.b16 %v747
    %v1421 = vunpack.c.l.b16 %v748
    %v1422 = vpack.c.b16 %v1214, %v1406
    %v1423 = vpack.c.b16 %v1215, %v1407
    %v1424 = vpack.c.b16 %v1216, %v1408
    %v1425 = vpack.c.b16 %v1217, %v1409
    %v1426 = vpack.c.b16 %v1218, %v1410
    %v1427 = vpack.c.b16 %v1219, %v1411
    %v1428 = vpack.c.b16 %v1220, %v1412
    %v1429 = vpack.c.b16 %v1221, %v1413
    %v1430 = vpack.c.b16 %v1222, %v1414
    %v1431 = vpack.c.b16 %v1223, %v1415
    %v1432 = vpack.c.b16 %v1224, %v1416
    %v1433 = vpack.c.b16 %v1225, %v1417
    %v1434 = vpack.c.b16 %v1226, %v1418
    %v1435 = vpack.c.b16 %v1227, %v1419
    %v1436 = vpack.c.b16 %v1228, %v1420
    %v1437 = vpack.c.b16 %v1229, %v1421
    %v1438 = vrot.slane %v1422, 1
    %v1439 = vrot.slane %v1423, 1
    %v1440 = vrot.slane %v1424, 1
    %v1441 = vrot.slane %v1425, 1
    %v1442 = vrot.slane %v1426, 1
    %v1443 = vrot.slane %v1427, 1
    %v1444 = vrot.slane %v1428, 1
    %v1445 = vrot.slane %v1429, 1
    %v1446 = vrot.slane %v1430, 1
    %v1447 = vrot.slane %v1431, 1
    %v1448 = vrot.slane %v1432, 1
    %v1449 = vrot.slane %v1433, 1
    %v1450 = vrot.slane %v1434, 1
    %v1451 = vrot.slane %v1435, 1
    %v1452 = vrot.slane %v1436, 1
    %v1453 = vrot.slane %v1437, 1
    %1454 = vrot.lane.b32.xlu0 %v1438, 20
    %v1455 = vpop.permute.xlu0 %1454
    %1456 = vrot.lane.b32.xlu0 %v1439, 20
    %v1457 = vpop.permute.xlu0 %1456
    %1458 = vrot.lane.b32.xlu0 %v1440, 20
    %v1459 = vpop.permute.xlu0 %1458
    %1460 = vrot.lane.b32.xlu0 %v1441, 20
    %v1461 = vpop.permute.xlu0 %1460
    %1462 = vrot.lane.b32.xlu0 %v1442, 20
    %v1463 = vpop.permute.xlu0 %1462
    %1464 = vrot.lane.b32.xlu0 %v1443, 20
    %v1465 = vpop.permute.xlu0 %1464
    %1466 = vrot.lane.b32.xlu0 %v1444, 20
    %v1467 = vpop.permute.xlu0 %1466
    %1468 = vrot.lane.b32.xlu0 %v1445, 20
    %v1469 = vpop.permute.xlu0 %1468
    %1470 = vrot.lane.b32.xlu0 %v1446, 20
    %v1471 = vpop.permute.xlu0 %1470
    %1472 = vrot.lane.b32.xlu0 %v1447, 20
    %v1473 = vpop.permute.xlu0 %1472
    %1474 = vrot.lane.b32.xlu0 %v1448, 20
    %v1475 = vpop.permute.xlu0 %1474
    %1476 = vrot.lane.b32.xlu0 %v1449, 20
    %v1477 = vpop.permute.xlu0 %1476
    %1478 = vrot.lane.b32.xlu0 %v1450, 20
    %v1479 = vpop.permute.xlu0 %1478
    %1480 = vrot.lane.b32.xlu0 %v1451, 20
    %v1481 = vpop.permute.xlu0 %1480
    %1482 = vrot.lane.b32.xlu0 %v1452, 20
    %v1483 = vpop.permute.xlu0 %1482
    %1484 = vrot.lane.b32.xlu0 %v1453, 20
    %v1485 = vpop.permute.xlu0 %1484
    %v1502 = vunpack.c.l.b16 %v750
    %v1503 = vunpack.c.l.b16 %v751
    %v1504 = vunpack.c.l.b16 %v752
    %v1505 = vunpack.c.l.b16 %v753
    %v1506 = vunpack.c.l.b16 %v754
    %v1507 = vunpack.c.l.b16 %v755
    %v1508 = vunpack.c.l.b16 %v756
    %v1509 = vunpack.c.l.b16 %v757
    %v1510 = vunpack.c.l.b16 %v758
    %v1511 = vunpack.c.l.b16 %v759
    %v1512 = vunpack.c.l.b16 %v760
    %v1513 = vunpack.c.l.b16 %v761
    %v1514 = vunpack.c.l.b16 %v762
    %v1515 = vunpack.c.l.b16 %v763
    %v1516 = vunpack.c.l.b16 %v764
    %v1517 = vunpack.c.l.b16 %v765
    %v1518 = vpack.c.b16 %v1502, %v1502
    %v1519 = vpack.c.b16 %v1503, %v1503
    %v1520 = vpack.c.b16 %v1504, %v1504
    %v1521 = vpack.c.b16 %v1505, %v1505
    %v1522 = vpack.c.b16 %v1506, %v1506
    %v1523 = vpack.c.b16 %v1507, %v1507
    %v1524 = vpack.c.b16 %v1508, %v1508
    %v1525 = vpack.c.b16 %v1509, %v1509
    %v1526 = vpack.c.b16 %v1510, %v1510
    %v1527 = vpack.c.b16 %v1511, %v1511
    %v1528 = vpack.c.b16 %v1512, %v1512
    %v1529 = vpack.c.b16 %v1513, %v1513
    %v1530 = vpack.c.b16 %v1514, %v1514
    %v1531 = vpack.c.b16 %v1515, %v1515
    %v1532 = vpack.c.b16 %v1516, %v1516
    %v1533 = vpack.c.b16 %v1517, %v1517
    %1534 = vrot.lane.b32.xlu0 %v1518, 24
    %v1535 = vpop.permute.xlu0 %1534
    %1536 = vrot.lane.b32.xlu0 %v1519, 24
    %v1537 = vpop.permute.xlu0 %1536
    %1538 = vrot.lane.b32.xlu0 %v1520, 24
    %v1539 = vpop.permute.xlu0 %1538
    %1540 = vrot.lane.b32.xlu0 %v1521, 24
    %v1541 = vpop.permute.xlu0 %1540
    %1542 = vrot.lane.b32.xlu0 %v1522, 24
    %v1543 = vpop.permute.xlu0 %1542
    %1544 = vrot.lane.b32.xlu0 %v1523, 24
    %v1545 = vpop.permute.xlu0 %1544
    %1546 = vrot.lane.b32.xlu0 %v1524, 24
    %v1547 = vpop.permute.xlu0 %1546
    %1548 = vrot.lane.b32.xlu0 %v1525, 24
    %v1549 = vpop.permute.xlu0 %1548
    %1550 = vrot.lane.b32.xlu0 %v1526, 24
    %v1551 = vpop.permute.xlu0 %1550
    %1552 = vrot.lane.b32.xlu0 %v1527, 24
    %v1553 = vpop.permute.xlu0 %1552
    %1554 = vrot.lane.b32.xlu0 %v1528, 24
    %v1555 = vpop.permute.xlu0 %1554
    %1556 = vrot.lane.b32.xlu0 %v1529, 24
    %v1557 = vpop.permute.xlu0 %1556
    %1558 = vrot.lane.b32.xlu0 %v1530, 24
    %v1559 = vpop.permute.xlu0 %1558
    %1560 = vrot.lane.b32.xlu0 %v1531, 24
    %v1561 = vpop.permute.xlu0 %1560
    %1562 = vrot.lane.b32.xlu0 %v1532, 24
    %v1563 = vpop.permute.xlu0 %1562
    %1564 = vrot.lane.b32.xlu0 %v1533, 24
    %v1565 = vpop.permute.xlu0 %1564
    %v1582 = vunpack.c.l.b16 %v766
    %v1583 = vunpack.c.l.b16 %v767
    %v1584 = vunpack.c.l.b16 %v768
    %v1585 = vunpack.c.l.b16 %v769
    %v1586 = vunpack.c.l.b16 %v770
    %v1587 = vunpack.c.l.b16 %v771
    %v1588 = vunpack.c.l.b16 %v772
    %v1589 = vunpack.c.l.b16 %v773
    %v1590 = vunpack.c.l.b16 %v774
    %v1591 = vunpack.c.l.b16 %v775
    %v1592 = vunpack.c.l.b16 %v776
    %v1593 = vunpack.c.l.b16 %v777
    %v1594 = vunpack.c.l.b16 %v778
    %v1595 = vunpack.c.l.b16 %v779
    %v1596 = vunpack.c.l.b16 %v780
    %v1597 = vunpack.c.l.b16 %v781
    %v1598 = vpack.c.b16 %v1582, %v1502
    %v1599 = vpack.c.b16 %v1583, %v1503
    %v1600 = vpack.c.b16 %v1584, %v1504
    %v1601 = vpack.c.b16 %v1585, %v1505
    %v1602 = vpack.c.b16 %v1586, %v1506
    %v1603 = vpack.c.b16 %v1587, %v1507
    %v1604 = vpack.c.b16 %v1588, %v1508
    %v1605 = vpack.c.b16 %v1589, %v1509
    %v1606 = vpack.c.b16 %v1590, %v1510
    %v1607 = vpack.c.b16 %v1591, %v1511
    %v1608 = vpack.c.b16 %v1592, %v1512
    %v1609 = vpack.c.b16 %v1593, %v1513
    %v1610 = vpack.c.b16 %v1594, %v1514
    %v1611 = vpack.c.b16 %v1595, %v1515
    %v1612 = vpack.c.b16 %v1596, %v1516
    %v1613 = vpack.c.b16 %v1597, %v1517
    %v1615 = vshrl.u32 %v1598, 16
    %v1617 = vshll.u32 %v1598, 16
    %v1619 = vrot.slane %v1617, 1
    %v1620 = vor.u32 %v1615, %v1619
    %v1622 = vshrl.u32 %v1599, 16
    %v1624 = vshll.u32 %v1599, 16
    %v1626 = vrot.slane %v1624, 1
    %v1627 = vor.u32 %v1622, %v1626
    %v1629 = vshrl.u32 %v1600, 16
    %v1631 = vshll.u32 %v1600, 16
    %v1633 = vrot.slane %v1631, 1
    %v1634 = vor.u32 %v1629, %v1633
    %v1636 = vshrl.u32 %v1601, 16
    %v1638 = vshll.u32 %v1601, 16
    %v1640 = vrot.slane %v1638, 1
    %v1641 = vor.u32 %v1636, %v1640
    %v1643 = vshrl.u32 %v1602, 16
    %v1645 = vshll.u32 %v1602, 16
    %v1647 = vrot.slane %v1645, 1
    %v1648 = vor.u32 %v1643, %v1647
    %v1650 = vshrl.u32 %v1603, 16
    %v1652 = vshll.u32 %v1603, 16
    %v1654 = vrot.slane %v1652, 1
    %v1655 = vor.u32 %v1650, %v1654
    %v1657 = vshrl.u32 %v1604, 16
    %v1659 = vshll.u32 %v1604, 16
    %v1661 = vrot.slane %v1659, 1
    %v1662 = vor.u32 %v1657, %v1661
    %v1664 = vshrl.u32 %v1605, 16
    %v1666 = vshll.u32 %v1605, 16
    %v1668 = vrot.slane %v1666, 1
    %v1669 = vor.u32 %v1664, %v1668
    %v1671 = vshrl.u32 %v1606, 16
    %v1673 = vshll.u32 %v1606, 16
    %v1675 = vrot.slane %v1673, 1
    %v1676 = vor.u32 %v1671, %v1675
    %v1678 = vshrl.u32 %v1607, 16
    %v1680 = vshll.u32 %v1607, 16
    %v1682 = vrot.slane %v1680, 1
    %v1683 = vor.u32 %v1678, %v1682
    %v1685 = vshrl.u32 %v1608, 16
    %v1687 = vshll.u32 %v1608, 16
    %v1689 = vrot.slane %v1687, 1
    %v1690 = vor.u32 %v1685, %v1689
    %v1692 = vshrl.u32 %v1609, 16
    %v1694 = vshll.u32 %v1609, 16
    %v1696 = vrot.slane %v1694, 1
    %v1697 = vor.u32 %v1692, %v1696
    %v1699 = vshrl.u32 %v1610, 16
    %v1701 = vshll.u32 %v1610, 16
    %v1703 = vrot.slane %v1701, 1
    %v1704 = vor.u32 %v1699, %v1703
    %v1706 = vshrl.u32 %v1611, 16
    %v1708 = vshll.u32 %v1611, 16
    %v1710 = vrot.slane %v1708, 1
    %v1711 = vor.u32 %v1706, %v1710
    %v1713 = vshrl.u32 %v1612, 16
    %v1715 = vshll.u32 %v1612, 16
    %v1717 = vrot.slane %v1715, 1
    %v1718 = vor.u32 %v1713, %v1717
    %v1720 = vshrl.u32 %v1613, 16
    %v1722 = vshll.u32 %v1613, 16
    %v1724 = vrot.slane %v1722, 1
    %v1725 = vor.u32 %v1720, %v1724
    %1726 = vrot.lane.b32.xlu0 %v1620, 28
    %v1727 = vpop.permute.xlu0 %1726
    %1728 = vrot.lane.b32.xlu0 %v1627, 28
    %v1729 = vpop.permute.xlu0 %1728
    %1730 = vrot.lane.b32.xlu0 %v1634, 28
    %v1731 = vpop.permute.xlu0 %1730
    %1732 = vrot.lane.b32.xlu0 %v1641, 28
    %v1733 = vpop.permute.xlu0 %1732
    %1734 = vrot.lane.b32.xlu0 %v1648, 28
    %v1735 = vpop.permute.xlu0 %1734
    %1736 = vrot.lane.b32.xlu0 %v1655, 28
    %v1737 = vpop.permute.xlu0 %1736
    %1738 = vrot.lane.b32.xlu0 %v1662, 28
    %v1739 = vpop.permute.xlu0 %1738
    %1740 = vrot.lane.b32.xlu0 %v1669, 28
    %v1741 = vpop.permute.xlu0 %1740
    %1742 = vrot.lane.b32.xlu0 %v1676, 28
    %v1743 = vpop.permute.xlu0 %1742
    %1744 = vrot.lane.b32.xlu0 %v1683, 28
    %v1745 = vpop.permute.xlu0 %1744
    %1746 = vrot.lane.b32.xlu0 %v1690, 28
    %v1747 = vpop.permute.xlu0 %1746
    %1748 = vrot.lane.b32.xlu0 %v1697, 28
    %v1749 = vpop.permute.xlu0 %1748
    %1750 = vrot.lane.b32.xlu0 %v1704, 28
    %v1751 = vpop.permute.xlu0 %1750
    %1752 = vrot.lane.b32.xlu0 %v1711, 28
    %v1753 = vpop.permute.xlu0 %1752
    %1754 = vrot.lane.b32.xlu0 %v1718, 28
    %v1755 = vpop.permute.xlu0 %1754
    %1756 = vrot.lane.b32.xlu0 %v1725, 28
    %v1757 = vpop.permute.xlu0 %1756
    %v1774 = vunpack.c.l.b16 %v782
    %v1775 = vunpack.c.l.b16 %v783
    %v1776 = vunpack.c.l.b16 %v784
    %v1777 = vunpack.c.l.b16 %v785
    %v1778 = vunpack.c.l.b16 %v786
    %v1779 = vunpack.c.l.b16 %v787
    %v1780 = vunpack.c.l.b16 %v788
    %v1781 = vunpack.c.l.b16 %v789
    %v1782 = vunpack.c.l.b16 %v790
    %v1783 = vunpack.c.l.b16 %v791
    %v1784 = vunpack.c.l.b16 %v792
    %v1785 = vunpack.c.l.b16 %v793
    %v1786 = vunpack.c.l.b16 %v794
    %v1787 = vunpack.c.l.b16 %v795
    %v1788 = vunpack.c.l.b16 %v796
    %v1789 = vunpack.c.l.b16 %v797
    %v1790 = vpack.c.b16 %v1582, %v1774
    %v1791 = vpack.c.b16 %v1583, %v1775
    %v1792 = vpack.c.b16 %v1584, %v1776
    %v1793 = vpack.c.b16 %v1585, %v1777
    %v1794 = vpack.c.b16 %v1586, %v1778
    %v1795 = vpack.c.b16 %v1587, %v1779
    %v1796 = vpack.c.b16 %v1588, %v1780
    %v1797 = vpack.c.b16 %v1589, %v1781
    %v1798 = vpack.c.b16 %v1590, %v1782
    %v1799 = vpack.c.b16 %v1591, %v1783
    %v1800 = vpack.c.b16 %v1592, %v1784
    %v1801 = vpack.c.b16 %v1593, %v1785
    %v1802 = vpack.c.b16 %v1594, %v1786
    %v1803 = vpack.c.b16 %v1595, %v1787
    %v1804 = vpack.c.b16 %v1596, %v1788
    %v1805 = vpack.c.b16 %v1597, %v1789
    %v1806 = vrot.slane %v1790, 1
    %v1807 = vrot.slane %v1791, 1
    %v1808 = vrot.slane %v1792, 1
    %v1809 = vrot.slane %v1793, 1
    %v1810 = vrot.slane %v1794, 1
    %v1811 = vrot.slane %v1795, 1
    %v1812 = vrot.slane %v1796, 1
    %v1813 = vrot.slane %v1797, 1
    %v1814 = vrot.slane %v1798, 1
    %v1815 = vrot.slane %v1799, 1
    %v1816 = vrot.slane %v1800, 1
    %v1817 = vrot.slane %v1801, 1
    %v1818 = vrot.slane %v1802, 1
    %v1819 = vrot.slane %v1803, 1
    %v1820 = vrot.slane %v1804, 1
    %v1821 = vrot.slane %v1805, 1
    %1822 = vrot.lane.b32.xlu0 %v1806, 32
    %v1823 = vpop.permute.xlu0 %1822
    %1824 = vrot.lane.b32.xlu0 %v1807, 32
    %v1825 = vpop.permute.xlu0 %1824
    %1826 = vrot.lane.b32.xlu0 %v1808, 32
    %v1827 = vpop.permute.xlu0 %1826
    %1828 = vrot.lane.b32.xlu0 %v1809, 32
    %v1829 = vpop.permute.xlu0 %1828
    %1830 = vrot.lane.b32.xlu0 %v1810, 32
    %v1831 = vpop.permute.xlu0 %1830
    %1832 = vrot.lane.b32.xlu0 %v1811, 32
    %v1833 = vpop.permute.xlu0 %1832
    %1834 = vrot.lane.b32.xlu0 %v1812, 32
    %v1835 = vpop.permute.xlu0 %1834
    %1836 = vrot.lane.b32.xlu0 %v1813, 32
    %v1837 = vpop.permute.xlu0 %1836
    %1838 = vrot.lane.b32.xlu0 %v1814, 32
    %v1839 = vpop.permute.xlu0 %1838
    %1840 = vrot.lane.b32.xlu0 %v1815, 32
    %v1841 = vpop.permute.xlu0 %1840
    %1842 = vrot.lane.b32.xlu0 %v1816, 32
    %v1843 = vpop.permute.xlu0 %1842
    %1844 = vrot.lane.b32.xlu0 %v1817, 32
    %v1845 = vpop.permute.xlu0 %1844
    %1846 = vrot.lane.b32.xlu0 %v1818, 32
    %v1847 = vpop.permute.xlu0 %1846
    %1848 = vrot.lane.b32.xlu0 %v1819, 32
    %v1849 = vpop.permute.xlu0 %1848
    %1850 = vrot.lane.b32.xlu0 %v1820, 32
    %v1851 = vpop.permute.xlu0 %1850
    %1852 = vrot.lane.b32.xlu0 %v1821, 32
    %v1853 = vpop.permute.xlu0 %1852
    %vm1854 = vcmask 31744
    %v1857 = vsel %vm1854, %v653, %v991
    %v1860 = vsel %vm1854, %v654, %v993
    %v1863 = vsel %vm1854, %v655, %v995
    %v1866 = vsel %vm1854, %v656, %v997
    %v1869 = vsel %vm1854, %v657, %v999
    %v1872 = vsel %vm1854, %v658, %v1001
    %v1875 = vsel %vm1854, %v659, %v1003
    %v1878 = vsel %vm1854, %v660, %v1005
    %v1881 = vsel %vm1854, %v661, %v1007
    %v1884 = vsel %vm1854, %v662, %v1009
    %v1887 = vsel %vm1854, %v663, %v1011
    %v1890 = vsel %vm1854, %v664, %v1013
    %v1893 = vsel %vm1854, %v665, %v1015
    %v1896 = vsel %vm1854, %v666, %v1017
    %v1899 = vsel %vm1854, %v667, %v1019
    %v1902 = vsel %vm1854, %v668, %v1021
    %vm1903 = vcmask 64512
    %v1905 = vsel %vm1903, %v1857, %v1087
    %v1907 = vsel %vm1903, %v1860, %v1089
    %v1909 = vsel %vm1903, %v1863, %v1091
    %v1911 = vsel %vm1903, %v1866, %v1093
    %v1913 = vsel %vm1903, %v1869, %v1095
    %v1915 = vsel %vm1903, %v1872, %v1097
    %v1917 = vsel %vm1903, %v1875, %v1099
    %v1919 = vsel %vm1903, %v1878, %v1101
    %v1921 = vsel %vm1903, %v1881, %v1103
    %v1923 = vsel %vm1903, %v1884, %v1105
    %v1925 = vsel %vm1903, %v1887, %v1107
    %v1927 = vsel %vm1903, %v1890, %v1109
    %v1929 = vsel %vm1903, %v1893, %v1111
    %v1931 = vsel %vm1903, %v1896, %v1113
    %v1933 = vsel %vm1903, %v1899, %v1115
    %v1935 = vsel %vm1903, %v1902, %v1117
    %vm1936 = vcmask 97280
    %v1938 = vsel %vm1936, %v1905, %v1167
    %v1940 = vsel %vm1936, %v1907, %v1169
    %v1942 = vsel %vm1936, %v1909, %v1171
    %v1944 = vsel %vm1936, %v1911, %v1173
    %v1946 = vsel %vm1936, %v1913, %v1175
    %v1948 = vsel %vm1936, %v1915, %v1177
    %v1950 = vsel %vm1936, %v1917, %v1179
    %v1952 = vsel %vm1936, %v1919, %v1181
    %v1954 = vsel %vm1936, %v1921, %v1183
    %v1956 = vsel %vm1936, %v1923, %v1185
    %v1958 = vsel %vm1936, %v1925, %v1187
    %v1960 = vsel %vm1936, %v1927, %v1189
    %v1962 = vsel %vm1936, %v1929, %v1191
    %v1964 = vsel %vm1936, %v1931, %v1193
    %v1966 = vsel %vm1936, %v1933, %v1195
    %v1968 = vsel %vm1936, %v1935, %v1197
    %vm1969 = vcmask 130048
    %v1971 = vsel %vm1969, %v1938, %v1359
    %v1973 = vsel %vm1969, %v1940, %v1361
    %v1975 = vsel %vm1969, %v1942, %v1363
    %v1977 = vsel %vm1969, %v1944, %v1365
    %v1979 = vsel %vm1969, %v1946, %v1367
    %v1981 = vsel %vm1969, %v1948, %v1369
    %v1983 = vsel %vm1969, %v1950, %v1371
    %v1985 = vsel %vm1969, %v1952, %v1373
    %v1987 = vsel %vm1969, %v1954, %v1375
    %v1989 = vsel %vm1969, %v1956, %v1377
    %v1991 = vsel %vm1969, %v1958, %v1379
    %v1993 = vsel %vm1969, %v1960, %v1381
    %v1995 = vsel %vm1969, %v1962, %v1383
    %v1997 = vsel %vm1969, %v1964, %v1385
    %v1999 = vsel %vm1969, %v1966, %v1387
    %v2001 = vsel %vm1969, %v1968, %v1389
    %vm2002 = vcmask 162816
    %v2004 = vsel %vm2002, %v1971, %v1455
    %v2006 = vsel %vm2002, %v1973, %v1457
    %v2008 = vsel %vm2002, %v1975, %v1459
    %v2010 = vsel %vm2002, %v1977, %v1461
    %v2012 = vsel %vm2002, %v1979, %v1463
    %v2014 = vsel %vm2002, %v1981, %v1465
    %v2016 = vsel %vm2002, %v1983, %v1467
    %v2018 = vsel %vm2002, %v1985, %v1469
    %v2020 = vsel %vm2002, %v1987, %v1471
    %v2022 = vsel %vm2002, %v1989, %v1473
    %v2024 = vsel %vm2002, %v1991, %v1475
    %v2026 = vsel %vm2002, %v1993, %v1477
    %v2028 = vsel %vm2002, %v1995, %v1479
    %v2030 = vsel %vm2002, %v1997, %v1481
    %v2032 = vsel %vm2002, %v1999, %v1483
    %v2034 = vsel %vm2002, %v2001, %v1485
    %vm2035 = vcmask 195584
    %v2037 = vsel %vm2035, %v2004, %v1535
    %v2039 = vsel %vm2035, %v2006, %v1537
    %v2041 = vsel %vm2035, %v2008, %v1539
    %v2043 = vsel %vm2035, %v2010, %v1541
    %v2045 = vsel %vm2035, %v2012, %v1543
    %v2047 = vsel %vm2035, %v2014, %v1545
    %v2049 = vsel %vm2035, %v2016, %v1547
    %v2051 = vsel %vm2035, %v2018, %v1549
    %v2053 = vsel %vm2035, %v2020, %v1551
    %v2055 = vsel %vm2035, %v2022, %v1553
    %v2057 = vsel %vm2035, %v2024, %v1555
    %v2059 = vsel %vm2035, %v2026, %v1557
    %v2061 = vsel %vm2035, %v2028, %v1559
    %v2063 = vsel %vm2035, %v2030, %v1561
    %v2065 = vsel %vm2035, %v2032, %v1563
    %v2067 = vsel %vm2035, %v2034, %v1565
    %vm2068 = vcmask 228352
    %v2070 = vsel %vm2068, %v2037, %v1727
    %v2072 = vsel %vm2068, %v2039, %v1729
    %v2074 = vsel %vm2068, %v2041, %v1731
    %v2076 = vsel %vm2068, %v2043, %v1733
    %v2078 = vsel %vm2068, %v2045, %v1735
    %v2080 = vsel %vm2068, %v2047, %v1737
    %v2082 = vsel %vm2068, %v2049, %v1739
    %v2084 = vsel %vm2068, %v2051, %v1741
    %v2086 = vsel %vm2068, %v2053, %v1743
    %v2088 = vsel %vm2068, %v2055, %v1745
    %v2090 = vsel %vm2068, %v2057, %v1747
    %v2092 = vsel %vm2068, %v2059, %v1749
    %v2094 = vsel %vm2068, %v2061, %v1751
    %v2096 = vsel %vm2068, %v2063, %v1753
    %v2098 = vsel %vm2068, %v2065, %v1755
    %v2100 = vsel %vm2068, %v2067, %v1757
    %vm2101 = vcmask 261120
    %v2103 = vsel %vm2101, %v2070, %v1823
    %v2105 = vsel %vm2101, %v2072, %v1825
    %v2107 = vsel %vm2101, %v2074, %v1827
    %v2109 = vsel %vm2101, %v2076, %v1829
    %v2111 = vsel %vm2101, %v2078, %v1831
    %v2113 = vsel %vm2101, %v2080, %v1833
    %v2115 = vsel %vm2101, %v2082, %v1835
    %v2117 = vsel %vm2101, %v2084, %v1837
    %v2119 = vsel %vm2101, %v2086, %v1839
    %v2121 = vsel %vm2101, %v2088, %v1841
    %v2123 = vsel %vm2101, %v2090, %v1843
    %v2125 = vsel %vm2101, %v2092, %v1845
    %v2127 = vsel %vm2101, %v2094, %v1847
    %v2129 = vsel %vm2101, %v2096, %v1849
    %v2131 = vsel %vm2101, %v2098, %v1851
    %v2133 = vsel %vm2101, %v2100, %v1853
    %v2134 = vld [vmem:[%s1] sm:$0xf]
    %v2151 = vunpack.c.l.b16 %v2103
    %v2152 = vunpack.c.l.b16 %v2105
    %v2153 = vunpack.c.l.b16 %v2107
    %v2154 = vunpack.c.l.b16 %v2109
    %v2155 = vunpack.c.l.b16 %v2111
    %v2156 = vunpack.c.l.b16 %v2113
    %v2157 = vunpack.c.l.b16 %v2115
    %v2158 = vunpack.c.l.b16 %v2117
    %v2159 = vunpack.c.l.b16 %v2119
    %v2160 = vunpack.c.l.b16 %v2121
    %v2161 = vunpack.c.l.b16 %v2123
    %v2162 = vunpack.c.l.b16 %v2125
    %v2163 = vunpack.c.l.b16 %v2127
    %v2164 = vunpack.c.l.b16 %v2129
    %v2165 = vunpack.c.l.b16 %v2131
    %v2166 = vunpack.c.l.b16 %v2133
    %v2167 = vpack.c.b16 %v2152, %v2151
    %v2168 = vpack.c.b16 %v2154, %v2153
    %v2169 = vpack.c.b16 %v2156, %v2155
    %v2170 = vpack.c.b16 %v2158, %v2157
    %v2171 = vpack.c.b16 %v2160, %v2159
    %v2172 = vpack.c.b16 %v2162, %v2161
    %v2173 = vpack.c.b16 %v2164, %v2163
    %v2174 = vpack.c.b16 %v2166, %v2165
    %vm2175 = vcmask 293888
    %v2177 = vsel %vm2175, %v2134, 0
    %v2180 = vsel %vm2175, %v2167, 0
    %v2183 = vsel %vm2175, %v2168, 0
    %v2186 = vsel %vm2175, %v2169, 0
    %v2189 = vsel %vm2175, %v2170, 0
    %v2192 = vsel %vm2175, %v2171, 0
    %v2195 = vsel %vm2175, %v2172, 0
    %v2198 = vsel %vm2175, %v2173, 0
    %v2201 = vsel %vm2175, %v2174, 0
    %2203 = vmatpush.bf16.xpose.msra.mxu0 %v2201
    %2204 = vmatpush.bf16.xpose.msra.mxu0 %v2198
    %2205 = vmatpush.bf16.xpose.msra.mxu0 %v2195
    %2206 = vmatpush.bf16.xpose.msra.mxu0 %v2192
    %2207 = vmatpush.bf16.xpose.msra.mxu0 %v2189
    %2208 = vmatpush.bf16.xpose.msra.mxu0 %v2186
    %2209 = vmatpush.bf16.xpose.msra.mxu0 %v2183
    %2210 = vmatpush.bf16.xpose.msra.mxu0 %v2180
    %2211 = vmatmul.bf16.gmra.mxu0 %v2177
    %v2212 = vpop.f32.mrf.mxu0
    %v2213 = vadd.f32 0.0, %v2212
    %v2214 = vpop.f32.mrf.mxu0
    %2215 = vdwg.mxu0
    %v2216 = vld [vmem:[%s2] sm:$0xff]
    %v2217 = vld [vmem:[%s3] sm:$0xff]
    %2218 = vadd.xlane.f32.xlu0 %v2213
    %v2219 = vpop.xlane.xlu0 %2218
    %v2220 = vmul.f32 %v2219, 0.0078125
    %v2221 = vsub.f32 %v2213, %v2220
    %v2222 = vmul.f32 %v2221, %v2221
    %2223 = vadd.xlane.f32.xlu0 %v2222
    %v2224 = vpop.xlane.xlu0 %2223
    %v2225 = vmul.f32 %v2224, 0.0078125
    %v2226 = vadd.f32 %v2225, 1e-05
    %v2227 = vrsqrt.pop %v2226
    %v2228 = vmul.f32 %v2227, %v2226
    %v2229 = vmul.f32 %v2228, %v2227
    %v2230 = vmul.f32 0.5, %v2229
    %v2231 = vsub.f32 1.5, %v2230
    %v2232 = vmul.f32 %v2227, %v2231
    %vm2233 = vweird.f32 %v2226
    %vm2234 = vweird.f32 %v2227
    %vm2235 = vmor %vm2233, %vm2234
    %v2236 = vsel %vm2235, %v2227, %v2232
    %v2237 = vmul.f32 %v2216, %v2236
    %2239 = vset.pattern.permute.xlu0 0
    %2240 = vperm.xlu0 %2239, %v2237
    %v2241 = vpop.permute.xlu0 %2240
    %v2243 = vmul.f32 %v2221, %v2241
    %2245 = vset.pattern.permute.xlu0 0
    %2246 = vperm.xlu0 %2245, %v2217
    %v2247 = vpop.permute.xlu0 %2246
    %v2249 = vadd.f32 %v2243, %v2247
    %vm2250 = vcmp.gt.f32.partialorder %v2249, 0.0
    %v2251 = vmul.f32 %v2249, 0.01
    %v2252 = vsel %vm2250, %v2249, %v2251
    %2253 = vxpose.xlu0.b32.start [1/16] %v2252, 128
    %2254 = vxpose.xlu0.b32.cont [2/16] 0.0, 128
    %2255 = vxpose.xlu0.b32.cont [3/16] 0.0, 128
    %2256 = vxpose.xlu0.b32.cont [4/16] 0.0, 128
    %2257 = vxpose.xlu0.b32.cont [5/16] 0.0, 128
    %2258 = vxpose.xlu0.b32.cont [6/16] 0.0, 128
    %2259 = vxpose.xlu0.b32.cont [7/16] 0.0, 128
    %2260 = vxpose.xlu0.b32.cont [8/16] 0.0, 128
    %2261 = vxpose.xlu0.b32.cont [9/16] 0.0, 128
    %2262 = vxpose.xlu0.b32.cont [10/16] 0.0, 128
    %2263 = vxpose.xlu0.b32.cont [11/16] 0.0, 128
    %2264 = vxpose.xlu0.b32.cont [12/16] 0.0, 128
    %2265 = vxpose.xlu0.b32.cont [13/16] 0.0, 128
    %2266 = vxpose.xlu0.b32.cont [14/16] 0.0, 128
    %2267 = vxpose.xlu0.b32.cont [15/16] 0.0, 128
    %2268 = vxpose.xlu0.b32.end [16/16] 0.0, 128
    %v2269 = vpop.trf.xlu0
    %v2270 = vpop.trf.xlu0
    %v2271 = vpop.trf.xlu0
    %v2272 = vpop.trf.xlu0
    %v2273 = vpop.trf.xlu0
    %v2274 = vpop.trf.xlu0
    %v2275 = vpop.trf.xlu0
    %v2276 = vpop.trf.xlu0
    %v2277 = vpop.trf.xlu0
    %v2278 = vpop.trf.xlu0
    %v2279 = vpop.trf.xlu0
    %v2280 = vpop.trf.xlu0
    %v2281 = vpop.trf.xlu0
    %v2282 = vpop.trf.xlu0
    %v2283 = vpop.trf.xlu0
    %v2284 = vpop.trf.xlu0
    %vm2285 = vcmask 60416
    %2286 = vst.msk [vmem:[#allocation3] sm:$0xf] %vm2285, 0
    %vm2287 = vcmask 57344
    %2288 = vst.msk [vmem:[#allocation3 + $0x4] sm:$0x1] %vm2287, 0
    %2289 = vst.msk [vmem:[#allocation3 + $0x8] sm:$0xf] %vm2285, 0
    %2290 = vst.msk [vmem:[#allocation3 + $0xc] sm:$0x1] %vm2287, 0
    %2291 = vst.msk [vmem:[#allocation3 + $0x10] sm:$0xf] %vm2285, 0
    %2292 = vst.msk [vmem:[#allocation3 + $0x14] sm:$0x1] %vm2287, 0
    %2293 = vst.msk [vmem:[#allocation3 + $0x18] sm:$0xf] %vm2285, 0
    %2294 = vst.msk [vmem:[#allocation3 + $0x1c] sm:$0x1] %vm2287, 0
    %2295 = vst.msk [vmem:[#allocation3 + $0x20] sm:$0xf] %vm2285, 0
    %2296 = vst.msk [vmem:[#allocation3 + $0x24] sm:$0x1] %vm2287, 0
    %2297 = vst.msk [vmem:[#allocation3 + $0x28] sm:$0xf] %vm2285, 0
    %2298 = vst.msk [vmem:[#allocation3 + $0x2c] sm:$0x1] %vm2287, 0
    %2299 = vst.msk [vmem:[#allocation3 + $0x30] sm:$0xf] %vm2285, 0
    %2300 = vst.msk [vmem:[#allocation3 + $0x34] sm:$0x1] %vm2287, 0
    %2301 = vst.msk [vmem:[#allocation3 + $0x38] sm:$0xf] %vm2285, 0
    %2302 = vst.msk [vmem:[#allocation3 + $0x3c] sm:$0x1] %vm2287, 0
    %2303 = vst.msk [vmem:[#allocation3 + $0x40] sm:$0xf] %vm2285, 0
    %2304 = vst.msk [vmem:[#allocation3 + $0x44] sm:$0x1] %vm2287, 0
    %2305 = vst.msk [vmem:[#allocation3 + $0x48] sm:$0xf] %vm2285, 0
    %2306 = vst.msk [vmem:[#allocation3 + $0x4c] sm:$0x1] %vm2287, 0
    %2307 = vst.msk [vmem:[#allocation3 + $0x50] sm:$0xf] %vm2285, 0
    %2308 = vst.msk [vmem:[#allocation3 + $0x54] sm:$0x1] %vm2287, 0
    %2309 = vst.msk [vmem:[#allocation3 + $0x58] sm:$0xf] %vm2285, 0
    %2310 = vst.msk [vmem:[#allocation3 + $0x5c] sm:$0x1] %vm2287, 0
    %2311 = vst.msk [vmem:[#allocation3 + $0x60] sm:$0xf] %vm2285, 0
    %2312 = vst.msk [vmem:[#allocation3 + $0x64] sm:$0x1] %vm2287, 0
    %2313 = vst.msk [vmem:[#allocation3 + $0x68] sm:$0xf] %vm2285, 0
    %2314 = vst.msk [vmem:[#allocation3 + $0x6c] sm:$0x1] %vm2287, 0
    %2315 = vst.msk [vmem:[#allocation3 + $0x70] sm:$0xf] %vm2285, 0
    %2316 = vst.msk [vmem:[#allocation3 + $0x74] sm:$0x1] %vm2287, 0
    %2317 = vst.msk [vmem:[#allocation3 + $0x78] sm:$0xf] %vm2285, 0
    %2318 = vst.msk [vmem:[#allocation3 + $0x7c] sm:$0x1] %vm2287, 0
    %2319 = vst.msk [vmem:[#allocation3 + $0x80] sm:$0xf] %vm2285, 0
    %2320 = vst.msk [vmem:[#allocation3 + $0x84] sm:$0x1] %vm2287, 0
    %2321 = vst.msk [vmem:[#allocation3 + $0x88] sm:$0xf] %vm2285, 0
    %2322 = vst.msk [vmem:[#allocation3 + $0x8c] sm:$0x1] %vm2287, 0
    %2323 = vst.msk [vmem:[#allocation3 + $0x90] sm:$0xf] %vm2285, 0
    %2324 = vst.msk [vmem:[#allocation3 + $0x94] sm:$0x1] %vm2287, 0
    %2325 = vst.msk [vmem:[#allocation3 + $0x98] sm:$0xf] %vm2285, 0
    %2326 = vst.msk [vmem:[#allocation3 + $0x9c] sm:$0x1] %vm2287, 0
    %v2327 = vpack.c.bf16 %v2269, %v2269
    %v2328 = vpack.c.bf16 %v2270, %v2270
    %v2329 = vpack.c.bf16 %v2271, %v2271
    %v2330 = vpack.c.bf16 %v2272, %v2272
    %v2331 = vpack.c.bf16 %v2273, %v2273
    %v2332 = vpack.c.bf16 %v2274, %v2274
    %v2333 = vpack.c.bf16 %v2275, %v2275
    %v2334 = vpack.c.bf16 %v2276, %v2276
    %v2335 = vpack.c.bf16 %v2277, %v2277
    %v2336 = vpack.c.bf16 %v2278, %v2278
    %v2337 = vpack.c.bf16 %v2279, %v2279
    %v2338 = vpack.c.bf16 %v2280, %v2280
    %v2339 = vpack.c.bf16 %v2281, %v2281
    %v2340 = vpack.c.bf16 %v2282, %v2282
    %v2341 = vpack.c.bf16 %v2283, %v2283
    %v2342 = vpack.c.bf16 %v2284, %v2284
    %v2344 = vshrl.u32 %v2327, 16
    %v2346 = vrot.slane %v2344, 7
    %v2347 = vshll.u32 %v2327, 16
    %v2349 = vor.u32 %v2346, %v2347
    %v2350 = vrot.slane %v2346, 4
    %v2352 = vshrl.u32 %v2328, 16
    %v2354 = vrot.slane %v2352, 7
    %v2355 = vshll.u32 %v2328, 16
    %v2357 = vor.u32 %v2354, %v2355
    %v2358 = vrot.slane %v2354, 4
    %v2360 = vshrl.u32 %v2329, 16
    %v2362 = vrot.slane %v2360, 7
    %v2363 = vshll.u32 %v2329, 16
    %v2365 = vor.u32 %v2362, %v2363
    %v2366 = vrot.slane %v2362, 4
    %v2368 = vshrl.u32 %v2330, 16
    %v2370 = vrot.slane %v2368, 7
    %v2371 = vshll.u32 %v2330, 16
    %v2373 = vor.u32 %v2370, %v2371
    %v2374 = vrot.slane %v2370, 4
    %v2376 = vshrl.u32 %v2331, 16
    %v2378 = vrot.slane %v2376, 7
    %v2379 = vshll.u32 %v2331, 16
    %v2381 = vor.u32 %v2378, %v2379
    %v2382 = vrot.slane %v2378, 4
    %v2384 = vshrl.u32 %v2332, 16
    %v2386 = vrot.slane %v2384, 7
    %v2387 = vshll.u32 %v2332, 16
    %v2389 = vor.u32 %v2386, %v2387
    %v2390 = vrot.slane %v2386, 4
    %v2392 = vshrl.u32 %v2333, 16
    %v2394 = vrot.slane %v2392, 7
    %v2395 = vshll.u32 %v2333, 16
    %v2397 = vor.u32 %v2394, %v2395
    %v2398 = vrot.slane %v2394, 4
    %v2400 = vshrl.u32 %v2334, 16
    %v2402 = vrot.slane %v2400, 7
    %v2403 = vshll.u32 %v2334, 16
    %v2405 = vor.u32 %v2402, %v2403
    %v2406 = vrot.slane %v2402, 4
    %v2408 = vshrl.u32 %v2335, 16
    %v2410 = vrot.slane %v2408, 7
    %v2411 = vshll.u32 %v2335, 16
    %v2413 = vor.u32 %v2410, %v2411
    %v2414 = vrot.slane %v2410, 4
    %v2416 = vshrl.u32 %v2336, 16
    %v2418 = vrot.slane %v2416, 7
    %v2419 = vshll.u32 %v2336, 16
    %v2421 = vor.u32 %v2418, %v2419
    %v2422 = vrot.slane %v2418, 4
    %v2424 = vshrl.u32 %v2337, 16
    %v2426 = vrot.slane %v2424, 7
    %v2427 = vshll.u32 %v2337, 16
    %v2429 = vor.u32 %v2426, %v2427
    %v2430 = vrot.slane %v2426, 4
    %v2432 = vshrl.u32 %v2338, 16
    %v2434 = vrot.slane %v2432, 7
    %v2435 = vshll.u32 %v2338, 16
    %v2437 = vor.u32 %v2434, %v2435
    %v2438 = vrot.slane %v2434, 4
    %v2440 = vshrl.u32 %v2339, 16
    %v2442 = vrot.slane %v2440, 7
    %v2443 = vshll.u32 %v2339, 16
    %v2445 = vor.u32 %v2442, %v2443
    %v2446 = vrot.slane %v2442, 4
    %v2448 = vshrl.u32 %v2340, 16
    %v2450 = vrot.slane %v2448, 7
    %v2451 = vshll.u32 %v2340, 16
    %v2453 = vor.u32 %v2450, %v2451
    %v2454 = vrot.slane %v2450, 4
    %v2456 = vshrl.u32 %v2341, 16
    %v2458 = vrot.slane %v2456, 7
    %v2459 = vshll.u32 %v2341, 16
    %v2461 = vor.u32 %v2458, %v2459
    %v2462 = vrot.slane %v2458, 4
    %v2464 = vshrl.u32 %v2342, 16
    %v2466 = vrot.slane %v2464, 7
    %v2467 = vshll.u32 %v2342, 16
    %v2469 = vor.u32 %v2466, %v2467
    %v2470 = vrot.slane %v2466, 4
    %s2503 = scalar_lea.vmem [#allocation3], 8
    %vm2504 = vcmask 60416
    %vm2505 = vmand %vm2504, %vm552
    %v2506 = vld [vmem:[%s2503] sm:$0xf]
    %v2507 = vsel %vm2505, %v2349, %v2506
    %2508 = vst [vmem:[%s2503] sm:$0xf] %v2507
    %vm2509 = vcmask 57344
    %vm2510 = vmand %vm2509, %vm558
    %v2511 = vld [vmem:[%s2503 + $0x4] sm:$0x1]
    %v2512 = vsel %vm2510, %v2350, %v2511
    %2513 = vst [vmem:[%s2503 + $0x4] sm:$0x1] %v2512
    %v2514 = vld [vmem:[%s2503 + $0x8] sm:$0xf]
    %v2515 = vsel %vm2505, %v2357, %v2514
    %2516 = vst [vmem:[%s2503 + $0x8] sm:$0xf] %v2515
    %v2517 = vld [vmem:[%s2503 + $0xc] sm:$0x1]
    %v2518 = vsel %vm2510, %v2358, %v2517
    %2519 = vst [vmem:[%s2503 + $0xc] sm:$0x1] %v2518
    %v2520 = vld [vmem:[%s2503 + $0x10] sm:$0xf]
    %v2521 = vsel %vm2505, %v2365, %v2520
    %2522 = vst [vmem:[%s2503 + $0x10] sm:$0xf] %v2521
    %v2523 = vld [vmem:[%s2503 + $0x14] sm:$0x1]
    %v2524 = vsel %vm2510, %v2366, %v2523
    %2525 = vst [vmem:[%s2503 + $0x14] sm:$0x1] %v2524
    %v2526 = vld [vmem:[%s2503 + $0x18] sm:$0xf]
    %v2527 = vsel %vm2505, %v2373, %v2526
    %2528 = vst [vmem:[%s2503 + $0x18] sm:$0xf] %v2527
    %v2529 = vld [vmem:[%s2503 + $0x1c] sm:$0x1]
    %v2530 = vsel %vm2510, %v2374, %v2529
    %2531 = vst [vmem:[%s2503 + $0x1c] sm:$0x1] %v2530
    %v2532 = vld [vmem:[%s2503 + $0x20] sm:$0xf]
    %v2533 = vsel %vm2505, %v2381, %v2532
    %2534 = vst [vmem:[%s2503 + $0x20] sm:$0xf] %v2533
    %v2535 = vld [vmem:[%s2503 + $0x24] sm:$0x1]
    %v2536 = vsel %vm2510, %v2382, %v2535
    %2537 = vst [vmem:[%s2503 + $0x24] sm:$0x1] %v2536
    %v2538 = vld [vmem:[%s2503 + $0x28] sm:$0xf]
    %v2539 = vsel %vm2505, %v2389, %v2538
    %2540 = vst [vmem:[%s2503 + $0x28] sm:$0xf] %v2539
    %v2541 = vld [vmem:[%s2503 + $0x2c] sm:$0x1]
    %v2542 = vsel %vm2510, %v2390, %v2541
    %2543 = vst [vmem:[%s2503 + $0x2c] sm:$0x1] %v2542
    %v2544 = vld [vmem:[%s2503 + $0x30] sm:$0xf]
    %v2545 = vsel %vm2505, %v2397, %v2544
    %2546 = vst [vmem:[%s2503 + $0x30] sm:$0xf] %v2545
    %v2547 = vld [vmem:[%s2503 + $0x34] sm:$0x1]
    %v2548 = vsel %vm2510, %v2398, %v2547
    %2549 = vst [vmem:[%s2503 + $0x34] sm:$0x1] %v2548
    %v2550 = vld [vmem:[%s2503 + $0x38] sm:$0xf]
    %v2551 = vsel %vm2505, %v2405, %v2550
    %2552 = vst [vmem:[%s2503 + $0x38] sm:$0xf] %v2551
    %v2553 = vld [vmem:[%s2503 + $0x3c] sm:$0x1]
    %v2554 = vsel %vm2510, %v2406, %v2553
    %2555 = vst [vmem:[%s2503 + $0x3c] sm:$0x1] %v2554
    %v2556 = vld [vmem:[%s2503 + $0x50] sm:$0xf]
    %v2557 = vsel %vm2505, %v2413, %v2556
    %2558 = vst [vmem:[%s2503 + $0x50] sm:$0xf] %v2557
    %v2559 = vld [vmem:[%s2503 + $0x54] sm:$0x1]
    %v2560 = vsel %vm2510, %v2414, %v2559
    %2561 = vst [vmem:[%s2503 + $0x54] sm:$0x1] %v2560
    %v2562 = vld [vmem:[%s2503 + $0x58] sm:$0xf]
    %v2563 = vsel %vm2505, %v2421, %v2562
    %2564 = vst [vmem:[%s2503 + $0x58] sm:$0xf] %v2563
    %v2565 = vld [vmem:[%s2503 + $0x5c] sm:$0x1]
    %v2566 = vsel %vm2510, %v2422, %v2565
    %2567 = vst [vmem:[%s2503 + $0x5c] sm:$0x1] %v2566
    %v2568 = vld [vmem:[%s2503 + $0x60] sm:$0xf]
    %v2569 = vsel %vm2505, %v2429, %v2568
    %2570 = vst [vmem:[%s2503 + $0x60] sm:$0xf] %v2569
    %v2571 = vld [vmem:[%s2503 + $0x64] sm:$0x1]
    %v2572 = vsel %vm2510, %v2430, %v2571
    %2573 = vst [vmem:[%s2503 + $0x64] sm:$0x1] %v2572
    %v2574 = vld [vmem:[%s2503 + $0x68] sm:$0xf]
    %v2575 = vsel %vm2505, %v2437, %v2574
    %2576 = vst [vmem:[%s2503 + $0x68] sm:$0xf] %v2575
    %v2577 = vld [vmem:[%s2503 + $0x6c] sm:$0x1]
    %v2578 = vsel %vm2510, %v2438, %v2577
    %2579 = vst [vmem:[%s2503 + $0x6c] sm:$0x1] %v2578
    %v2580 = vld [vmem:[%s2503 + $0x70] sm:$0xf]
    %v2581 = vsel %vm2505, %v2445, %v2580
    %2582 = vst [vmem:[%s2503 + $0x70] sm:$0xf] %v2581
    %v2583 = vld [vmem:[%s2503 + $0x74] sm:$0x1]
    %v2584 = vsel %vm2510, %v2446, %v2583
    %2585 = vst [vmem:[%s2503 + $0x74] sm:$0x1] %v2584
    %v2586 = vld [vmem:[%s2503 + $0x78] sm:$0xf]
    %v2587 = vsel %vm2505, %v2453, %v2586
    %2588 = vst [vmem:[%s2503 + $0x78] sm:$0xf] %v2587
    %v2589 = vld [vmem:[%s2503 + $0x7c] sm:$0x1]
    %v2590 = vsel %vm2510, %v2454, %v2589
    %2591 = vst [vmem:[%s2503 + $0x7c] sm:$0x1] %v2590
    %v2592 = vld [vmem:[%s2503 + $0x80] sm:$0xf]
    %v2593 = vsel %vm2505, %v2461, %v2592
    %2594 = vst [vmem:[%s2503 + $0x80] sm:$0xf] %v2593
    %v2595 = vld [vmem:[%s2503 + $0x84] sm:$0x1]
    %v2596 = vsel %vm2510, %v2462, %v2595
    %2597 = vst [vmem:[%s2503 + $0x84] sm:$0x1] %v2596
    %v2598 = vld [vmem:[%s2503 + $0x88] sm:$0xf]
    %v2599 = vsel %vm2505, %v2469, %v2598
    %2600 = vst [vmem:[%s2503 + $0x88] sm:$0xf] %v2599
    %v2601 = vld [vmem:[%s2503 + $0x8c] sm:$0x1]
    %v2602 = vsel %vm2510, %v2470, %v2601
    %2603 = vst [vmem:[%s2503 + $0x8c] sm:$0x1] %v2602
    %v2604 = vld [vmem:[#allocation3] sm:$0xf]
    %v2605 = vld [vmem:[#allocation3 + $0x8] sm:$0xf]
    %v2606 = vld [vmem:[#allocation3 + $0x10] sm:$0xf]
    %v2607 = vld [vmem:[#allocation3 + $0x18] sm:$0xf]
    %v2608 = vld [vmem:[#allocation3 + $0x20] sm:$0xf]
    %v2609 = vld [vmem:[#allocation3 + $0x28] sm:$0xf]
    %v2610 = vld [vmem:[#allocation3 + $0x30] sm:$0xf]
    %v2611 = vld [vmem:[#allocation3 + $0x38] sm:$0xf]
    %v2612 = vld [vmem:[#allocation3 + $0x50] sm:$0xf]
    %v2613 = vld [vmem:[#allocation3 + $0x58] sm:$0xf]
    %v2614 = vld [vmem:[#allocation3 + $0x60] sm:$0xf]
    %v2615 = vld [vmem:[#allocation3 + $0x68] sm:$0xf]
    %v2616 = vld [vmem:[#allocation3 + $0x70] sm:$0xf]
    %v2617 = vld [vmem:[#allocation3 + $0x78] sm:$0xf]
    %v2618 = vld [vmem:[#allocation3 + $0x80] sm:$0xf]
    %v2619 = vld [vmem:[#allocation3 + $0x88] sm:$0xf]
    %v2620 = vld [vmem:[#allocation3 + $0x4] sm:$0x1]
    %v2621 = vld [vmem:[#allocation3 + $0xc] sm:$0x1]
    %v2622 = vld [vmem:[#allocation3 + $0x14] sm:$0x1]
    %v2623 = vld [vmem:[#allocation3 + $0x1c] sm:$0x1]
    %v2624 = vld [vmem:[#allocation3 + $0x24] sm:$0x1]
    %v2625 = vld [vmem:[#allocation3 + $0x2c] sm:$0x1]
    %v2626 = vld [vmem:[#allocation3 + $0x34] sm:$0x1]
    %v2627 = vld [vmem:[#allocation3 + $0x3c] sm:$0x1]
    %v2628 = vld [vmem:[#allocation3 + $0x54] sm:$0x1]
    %v2629 = vld [vmem:[#allocation3 + $0x5c] sm:$0x1]
    %v2630 = vld [vmem:[#allocation3 + $0x64] sm:$0x1]
    %v2631 = vld [vmem:[#allocation3 + $0x6c] sm:$0x1]
    %v2632 = vld [vmem:[#allocation3 + $0x74] sm:$0x1]
    %v2633 = vld [vmem:[#allocation3 + $0x7c] sm:$0x1]
    %v2634 = vld [vmem:[#allocation3 + $0x84] sm:$0x1]
    %v2635 = vld [vmem:[#allocation3 + $0x8c] sm:$0x1]
    %v2636 = vld [vmem:[#allocation3] sm:$0xe]
    %v2637 = vld [vmem:[#allocation3 + $0x8] sm:$0xe]
    %v2638 = vld [vmem:[#allocation3 + $0x10] sm:$0xe]
    %v2639 = vld [vmem:[#allocation3 + $0x18] sm:$0xe]
    %v2640 = vld [vmem:[#allocation3 + $0x20] sm:$0xe]
    %v2641 = vld [vmem:[#allocation3 + $0x28] sm:$0xe]
    %v2642 = vld [vmem:[#allocation3 + $0x30] sm:$0xe]
    %v2643 = vld [vmem:[#allocation3 + $0x38] sm:$0xe]
    %v2644 = vld [vmem:[#allocation3 + $0x50] sm:$0xe]
    %v2645 = vld [vmem:[#allocation3 + $0x58] sm:$0xe]
    %v2646 = vld [vmem:[#allocation3 + $0x60] sm:$0xe]
    %v2647 = vld [vmem:[#allocation3 + $0x68] sm:$0xe]
    %v2648 = vld [vmem:[#allocation3 + $0x70] sm:$0xe]
    %v2649 = vld [vmem:[#allocation3 + $0x78] sm:$0xe]
    %v2650 = vld [vmem:[#allocation3 + $0x80] sm:$0xe]
    %v2651 = vld [vmem:[#allocation3 + $0x88] sm:$0xe]
    %v2652 = vld [vmem:[%s2503] sm:$0xf]
    %v2653 = vld [vmem:[%s2503 + $0x8] sm:$0xf]
    %v2654 = vld [vmem:[%s2503 + $0x10] sm:$0xf]
    %v2655 = vld [vmem:[%s2503 + $0x18] sm:$0xf]
    %v2656 = vld [vmem:[%s2503 + $0x20] sm:$0xf]
    %v2657 = vld [vmem:[%s2503 + $0x28] sm:$0xf]
    %v2658 = vld [vmem:[%s2503 + $0x30] sm:$0xf]
    %v2659 = vld [vmem:[%s2503 + $0x38] sm:$0xf]
    %v2660 = vld [vmem:[%s2503 + $0x50] sm:$0xf]
    %v2661 = vld [vmem:[%s2503 + $0x58] sm:$0xf]
    %v2662 = vld [vmem:[%s2503 + $0x60] sm:$0xf]
    %v2663 = vld [vmem:[%s2503 + $0x68] sm:$0xf]
    %v2664 = vld [vmem:[%s2503 + $0x70] sm:$0xf]
    %v2665 = vld [vmem:[%s2503 + $0x78] sm:$0xf]
    %v2666 = vld [vmem:[%s2503 + $0x80] sm:$0xf]
    %v2667 = vld [vmem:[%s2503 + $0x88] sm:$0xf]
    %v2668 = vld [vmem:[%s2503 + $0x4] sm:$0x1]
    %v2669 = vld [vmem:[%s2503 + $0xc] sm:$0x1]
    %v2670 = vld [vmem:[%s2503 + $0x14] sm:$0x1]
    %v2671 = vld [vmem:[%s2503 + $0x1c] sm:$0x1]
    %v2672 = vld [vmem:[%s2503 + $0x24] sm:$0x1]
    %v2673 = vld [vmem:[%s2503 + $0x2c] sm:$0x1]
    %v2674 = vld [vmem:[%s2503 + $0x34] sm:$0x1]
    %v2675 = vld [vmem:[%s2503 + $0x3c] sm:$0x1]
    %v2676 = vld [vmem:[%s2503 + $0x54] sm:$0x1]
    %v2677 = vld [vmem:[%s2503 + $0x5c] sm:$0x1]
    %v2678 = vld [vmem:[%s2503 + $0x64] sm:$0x1]
    %v2679 = vld [vmem:[%s2503 + $0x6c] sm:$0x1]
    %v2680 = vld [vmem:[%s2503 + $0x74] sm:$0x1]
    %v2681 = vld [vmem:[%s2503 + $0x7c] sm:$0x1]
    %v2682 = vld [vmem:[%s2503 + $0x84] sm:$0x1]
    %v2683 = vld [vmem:[%s2503 + $0x8c] sm:$0x1]
    %v2684 = vld [vmem:[%s2503] sm:$0xe]
    %v2685 = vld [vmem:[%s2503 + $0x8] sm:$0xe]
    %v2686 = vld [vmem:[%s2503 + $0x10] sm:$0xe]
    %v2687 = vld [vmem:[%s2503 + $0x18] sm:$0xe]
    %v2688 = vld [vmem:[%s2503 + $0x20] sm:$0xe]
    %v2689 = vld [vmem:[%s2503 + $0x28] sm:$0xe]
    %v2690 = vld [vmem:[%s2503 + $0x30] sm:$0xe]
    %v2691 = vld [vmem:[%s2503 + $0x38] sm:$0xe]
    %v2692 = vld [vmem:[%s2503 + $0x50] sm:$0xe]
    %v2693 = vld [vmem:[%s2503 + $0x58] sm:$0xe]
    %v2694 = vld [vmem:[%s2503 + $0x60] sm:$0xe]
    %v2695 = vld [vmem:[%s2503 + $0x68] sm:$0xe]
    %v2696 = vld [vmem:[%s2503 + $0x70] sm:$0xe]
    %v2697 = vld [vmem:[%s2503 + $0x78] sm:$0xe]
    %v2698 = vld [vmem:[%s2503 + $0x80] sm:$0xe]
    %v2699 = vld [vmem:[%s2503 + $0x88] sm:$0xe]
    %s2700 = scalar_lea.vmem [#allocation3], 16
    %v2701 = vld [vmem:[%s2700] sm:$0xf]
    %v2702 = vld [vmem:[%s2700 + $0x8] sm:$0xf]
    %v2703 = vld [vmem:[%s2700 + $0x10] sm:$0xf]
    %v2704 = vld [vmem:[%s2700 + $0x18] sm:$0xf]
    %v2705 = vld [vmem:[%s2700 + $0x20] sm:$0xf]
    %v2706 = vld [vmem:[%s2700 + $0x28] sm:$0xf]
    %v2707 = vld [vmem:[%s2700 + $0x30] sm:$0xf]
    %v2708 = vld [vmem:[%s2700 + $0x38] sm:$0xf]
    %v2709 = vld [vmem:[%s2700 + $0x50] sm:$0xf]
    %v2710 = vld [vmem:[%s2700 + $0x58] sm:$0xf]
    %v2711 = vld [vmem:[%s2700 + $0x60] sm:$0xf]
    %v2712 = vld [vmem:[%s2700 + $0x68] sm:$0xf]
    %v2713 = vld [vmem:[%s2700 + $0x70] sm:$0xf]
    %v2714 = vld [vmem:[%s2700 + $0x78] sm:$0xf]
    %v2715 = vld [vmem:[%s2700 + $0x80] sm:$0xf]
    %v2716 = vld [vmem:[%s2700 + $0x88] sm:$0xf]
    %v2717 = vld [vmem:[%s2700 + $0x4] sm:$0x1]
    %v2718 = vld [vmem:[%s2700 + $0xc] sm:$0x1]
    %v2719 = vld [vmem:[%s2700 + $0x14] sm:$0x1]
    %v2720 = vld [vmem:[%s2700 + $0x1c] sm:$0x1]
    %v2721 = vld [vmem:[%s2700 + $0x24] sm:$0x1]
    %v2722 = vld [vmem:[%s2700 + $0x2c] sm:$0x1]
    %v2723 = vld [vmem:[%s2700 + $0x34] sm:$0x1]
    %v2724 = vld [vmem:[%s2700 + $0x3c] sm:$0x1]
    %v2725 = vld [vmem:[%s2700 + $0x54] sm:$0x1]
    %v2726 = vld [vmem:[%s2700 + $0x5c] sm:$0x1]
    %v2727 = vld [vmem:[%s2700 + $0x64] sm:$0x1]
    %v2728 = vld [vmem:[%s2700 + $0x6c] sm:$0x1]
    %v2729 = vld [vmem:[%s2700 + $0x74] sm:$0x1]
    %v2730 = vld [vmem:[%s2700 + $0x7c] sm:$0x1]
    %v2731 = vld [vmem:[%s2700 + $0x84] sm:$0x1]
    %v2732 = vld [vmem:[%s2700 + $0x8c] sm:$0x1]
    %v2733 = vld [vmem:[%s2700] sm:$0xe]
    %v2734 = vld [vmem:[%s2700 + $0x8] sm:$0xe]
    %v2735 = vld [vmem:[%s2700 + $0x10] sm:$0xe]
    %v2736 = vld [vmem:[%s2700 + $0x18] sm:$0xe]
    %v2737 = vld [vmem:[%s2700 + $0x20] sm:$0xe]
    %v2738 = vld [vmem:[%s2700 + $0x28] sm:$0xe]
    %v2739 = vld [vmem:[%s2700 + $0x30] sm:$0xe]
    %v2740 = vld [vmem:[%s2700 + $0x38] sm:$0xe]
    %v2741 = vld [vmem:[%s2700 + $0x50] sm:$0xe]
    %v2742 = vld [vmem:[%s2700 + $0x58] sm:$0xe]
    %v2743 = vld [vmem:[%s2700 + $0x60] sm:$0xe]
    %v2744 = vld [vmem:[%s2700 + $0x68] sm:$0xe]
    %v2745 = vld [vmem:[%s2700 + $0x70] sm:$0xe]
    %v2746 = vld [vmem:[%s2700 + $0x78] sm:$0xe]
    %v2747 = vld [vmem:[%s2700 + $0x80] sm:$0xe]
    %v2748 = vld [vmem:[%s2700 + $0x88] sm:$0xe]
    %v2781 = vunpack.c.l.b16 %v2604
    %v2782 = vunpack.c.l.b16 %v2620
    %v2783 = vunpack.c.l.b16 %v2605
    %v2784 = vunpack.c.l.b16 %v2621
    %v2785 = vunpack.c.l.b16 %v2606
    %v2786 = vunpack.c.l.b16 %v2622
    %v2787 = vunpack.c.l.b16 %v2607
    %v2788 = vunpack.c.l.b16 %v2623
    %v2789 = vunpack.c.l.b16 %v2608
    %v2790 = vunpack.c.l.b16 %v2624
    %v2791 = vunpack.c.l.b16 %v2609
    %v2792 = vunpack.c.l.b16 %v2625
    %v2793 = vunpack.c.l.b16 %v2610
    %v2794 = vunpack.c.l.b16 %v2626
    %v2795 = vunpack.c.l.b16 %v2611
    %v2796 = vunpack.c.l.b16 %v2627
    %v2797 = vunpack.c.l.b16 %v2612
    %v2798 = vunpack.c.l.b16 %v2628
    %v2799 = vunpack.c.l.b16 %v2613
    %v2800 = vunpack.c.l.b16 %v2629
    %v2801 = vunpack.c.l.b16 %v2614
    %v2802 = vunpack.c.l.b16 %v2630
    %v2803 = vunpack.c.l.b16 %v2615
    %v2804 = vunpack.c.l.b16 %v2631
    %v2805 = vunpack.c.l.b16 %v2616
    %v2806 = vunpack.c.l.b16 %v2632
    %v2807 = vunpack.c.l.b16 %v2617
    %v2808 = vunpack.c.l.b16 %v2633
    %v2809 = vunpack.c.l.b16 %v2618
    %v2810 = vunpack.c.l.b16 %v2634
    %v2811 = vunpack.c.l.b16 %v2619
    %v2812 = vunpack.c.l.b16 %v2635
    %v2813 = vpack.c.b16 %v2782, %v2781
    %v2814 = vpack.c.b16 %v2784, %v2783
    %v2815 = vpack.c.b16 %v2786, %v2785
    %v2816 = vpack.c.b16 %v2788, %v2787
    %v2817 = vpack.c.b16 %v2790, %v2789
    %v2818 = vpack.c.b16 %v2792, %v2791
    %v2819 = vpack.c.b16 %v2794, %v2793
    %v2820 = vpack.c.b16 %v2796, %v2795
    %v2821 = vpack.c.b16 %v2798, %v2797
    %v2822 = vpack.c.b16 %v2800, %v2799
    %v2823 = vpack.c.b16 %v2802, %v2801
    %v2824 = vpack.c.b16 %v2804, %v2803
    %v2825 = vpack.c.b16 %v2806, %v2805
    %v2826 = vpack.c.b16 %v2808, %v2807
    %v2827 = vpack.c.b16 %v2810, %v2809
    %v2828 = vpack.c.b16 %v2812, %v2811
    %v2830 = vshrl.u32 %v2813, 16
    %v2832 = vshll.u32 %v2813, 16
    %v2834 = vrot.slane %v2832, 1
    %v2835 = vor.u32 %v2830, %v2834
    %v2837 = vshrl.u32 %v2814, 16
    %v2839 = vshll.u32 %v2814, 16
    %v2841 = vrot.slane %v2839, 1
    %v2842 = vor.u32 %v2837, %v2841
    %v2844 = vshrl.u32 %v2815, 16
    %v2846 = vshll.u32 %v2815, 16
    %v2848 = vrot.slane %v2846, 1
    %v2849 = vor.u32 %v2844, %v2848
    %v2851 = vshrl.u32 %v2816, 16
    %v2853 = vshll.u32 %v2816, 16
    %v2855 = vrot.slane %v2853, 1
    %v2856 = vor.u32 %v2851, %v2855
    %v2858 = vshrl.u32 %v2817, 16
    %v2860 = vshll.u32 %v2817, 16
    %v2862 = vrot.slane %v2860, 1
    %v2863 = vor.u32 %v2858, %v2862
    %v2865 = vshrl.u32 %v2818, 16
    %v2867 = vshll.u32 %v2818, 16
    %v2869 = vrot.slane %v2867, 1
    %v2870 = vor.u32 %v2865, %v2869
    %v2872 = vshrl.u32 %v2819, 16
    %v2874 = vshll.u32 %v2819, 16
    %v2876 = vrot.slane %v2874, 1
    %v2877 = vor.u32 %v2872, %v2876
    %v2879 = vshrl.u32 %v2820, 16
    %v2881 = vshll.u32 %v2820, 16
    %v2883 = vrot.slane %v2881, 1
    %v2884 = vor.u32 %v2879, %v2883
    %v2886 = vshrl.u32 %v2821, 16
    %v2888 = vshll.u32 %v2821, 16
    %v2890 = vrot.slane %v2888, 1
    %v2891 = vor.u32 %v2886, %v2890
    %v2893 = vshrl.u32 %v2822, 16
    %v2895 = vshll.u32 %v2822, 16
    %v2897 = vrot.slane %v2895, 1
    %v2898 = vor.u32 %v2893, %v2897
    %v2900 = vshrl.u32 %v2823, 16
    %v2902 = vshll.u32 %v2823, 16
    %v2904 = vrot.slane %v2902, 1
    %v2905 = vor.u32 %v2900, %v2904
    %v2907 = vshrl.u32 %v2824, 16
    %v2909 = vshll.u32 %v2824, 16
    %v2911 = vrot.slane %v2909, 1
    %v2912 = vor.u32 %v2907, %v2911
    %v2914 = vshrl.u32 %v2825, 16
    %v2916 = vshll.u32 %v2825, 16
    %v2918 = vrot.slane %v2916, 1
    %v2919 = vor.u32 %v2914, %v2918
    %v2921 = vshrl.u32 %v2826, 16
    %v2923 = vshll.u32 %v2826, 16
    %v2925 = vrot.slane %v2923, 1
    %v2926 = vor.u32 %v2921, %v2925
    %v2928 = vshrl.u32 %v2827, 16
    %v2930 = vshll.u32 %v2827, 16
    %v2932 = vrot.slane %v2930, 1
    %v2933 = vor.u32 %v2928, %v2932
    %v2935 = vshrl.u32 %v2828, 16
    %v2937 = vshll.u32 %v2828, 16
    %v2939 = vrot.slane %v2937, 1
    %v2940 = vor.u32 %v2935, %v2939
    %2941 = vrot.lane.b32.xlu0 %v2835, 8
    %v2942 = vpop.permute.xlu0 %2941
    %2943 = vrot.lane.b32.xlu0 %v2842, 8
    %v2944 = vpop.permute.xlu0 %2943
    %2945 = vrot.lane.b32.xlu0 %v2849, 8
    %v2946 = vpop.permute.xlu0 %2945
    %2947 = vrot.lane.b32.xlu0 %v2856, 8
    %v2948 = vpop.permute.xlu0 %2947
    %2949 = vrot.lane.b32.xlu0 %v2863, 8
    %v2950 = vpop.permute.xlu0 %2949
    %2951 = vrot.lane.b32.xlu0 %v2870, 8
    %v2952 = vpop.permute.xlu0 %2951
    %2953 = vrot.lane.b32.xlu0 %v2877, 8
    %v2954 = vpop.permute.xlu0 %2953
    %2955 = vrot.lane.b32.xlu0 %v2884, 8
    %v2956 = vpop.permute.xlu0 %2955
    %2957 = vrot.lane.b32.xlu0 %v2891, 8
    %v2958 = vpop.permute.xlu0 %2957
    %2959 = vrot.lane.b32.xlu0 %v2898, 8
    %v2960 = vpop.permute.xlu0 %2959
    %2961 = vrot.lane.b32.xlu0 %v2905, 8
    %v2962 = vpop.permute.xlu0 %2961
    %2963 = vrot.lane.b32.xlu0 %v2912, 8
    %v2964 = vpop.permute.xlu0 %2963
    %2965 = vrot.lane.b32.xlu0 %v2919, 8
    %v2966 = vpop.permute.xlu0 %2965
    %2967 = vrot.lane.b32.xlu0 %v2926, 8
    %v2968 = vpop.permute.xlu0 %2967
    %2969 = vrot.lane.b32.xlu0 %v2933, 8
    %v2970 = vpop.permute.xlu0 %2969
    %2971 = vrot.lane.b32.xlu0 %v2940, 8
    %v2972 = vpop.permute.xlu0 %2971
    %v2989 = vunpack.c.l.b16 %v2636
    %v2990 = vunpack.c.l.b16 %v2637
    %v2991 = vunpack.c.l.b16 %v2638
    %v2992 = vunpack.c.l.b16 %v2639
    %v2993 = vunpack.c.l.b16 %v2640
    %v2994 = vunpack.c.l.b16 %v2641
    %v2995 = vunpack.c.l.b16 %v2642
    %v2996 = vunpack.c.l.b16 %v2643
    %v2997 = vunpack.c.l.b16 %v2644
    %v2998 = vunpack.c.l.b16 %v2645
    %v2999 = vunpack.c.l.b16 %v2646
    %v3000 = vunpack.c.l.b16 %v2647
    %v3001 = vunpack.c.l.b16 %v2648
    %v3002 = vunpack.c.l.b16 %v2649
    %v3003 = vunpack.c.l.b16 %v2650
    %v3004 = vunpack.c.l.b16 %v2651
    %v3005 = vpack.c.b16 %v2782, %v2989
    %v3006 = vpack.c.b16 %v2784, %v2990
    %v3007 = vpack.c.b16 %v2786, %v2991
    %v3008 = vpack.c.b16 %v2788, %v2992
    %v3009 = vpack.c.b16 %v2790, %v2993
    %v3010 = vpack.c.b16 %v2792, %v2994
    %v3011 = vpack.c.b16 %v2794, %v2995
    %v3012 = vpack.c.b16 %v2796, %v2996
    %v3013 = vpack.c.b16 %v2798, %v2997
    %v3014 = vpack.c.b16 %v2800, %v2998
    %v3015 = vpack.c.b16 %v2802, %v2999
    %v3016 = vpack.c.b16 %v2804, %v3000
    %v3017 = vpack.c.b16 %v2806, %v3001
    %v3018 = vpack.c.b16 %v2808, %v3002
    %v3019 = vpack.c.b16 %v2810, %v3003
    %v3020 = vpack.c.b16 %v2812, %v3004
    %v3021 = vrot.slane %v3005, 1
    %v3022 = vrot.slane %v3006, 1
    %v3023 = vrot.slane %v3007, 1
    %v3024 = vrot.slane %v3008, 1
    %v3025 = vrot.slane %v3009, 1
    %v3026 = vrot.slane %v3010, 1
    %v3027 = vrot.slane %v3011, 1
    %v3028 = vrot.slane %v3012, 1
    %v3029 = vrot.slane %v3013, 1
    %v3030 = vrot.slane %v3014, 1
    %v3031 = vrot.slane %v3015, 1
    %v3032 = vrot.slane %v3016, 1
    %v3033 = vrot.slane %v3017, 1
    %v3034 = vrot.slane %v3018, 1
    %v3035 = vrot.slane %v3019, 1
    %v3036 = vrot.slane %v3020, 1
    %3037 = vrot.lane.b32.xlu0 %v3021, 16
    %v3038 = vpop.permute.xlu0 %3037
    %3039 = vrot.lane.b32.xlu0 %v3022, 16
    %v3040 = vpop.permute.xlu0 %3039
    %3041 = vrot.lane.b32.xlu0 %v3023, 16
    %v3042 = vpop.permute.xlu0 %3041
    %3043 = vrot.lane.b32.xlu0 %v3024, 16
    %v3044 = vpop.permute.xlu0 %3043
    %3045 = vrot.lane.b32.xlu0 %v3025, 16
    %v3046 = vpop.permute.xlu0 %3045
    %3047 = vrot.lane.b32.xlu0 %v3026, 16
    %v3048 = vpop.permute.xlu0 %3047
    %3049 = vrot.lane.b32.xlu0 %v3027, 16
    %v3050 = vpop.permute.xlu0 %3049
    %3051 = vrot.lane.b32.xlu0 %v3028, 16
    %v3052 = vpop.permute.xlu0 %3051
    %3053 = vrot.lane.b32.xlu0 %v3029, 16
    %v3054 = vpop.permute.xlu0 %3053
    %3055 = vrot.lane.b32.xlu0 %v3030, 16
    %v3056 = vpop.permute.xlu0 %3055
    %3057 = vrot.lane.b32.xlu0 %v3031, 16
    %v3058 = vpop.permute.xlu0 %3057
    %3059 = vrot.lane.b32.xlu0 %v3032, 16
    %v3060 = vpop.permute.xlu0 %3059
    %3061 = vrot.lane.b32.xlu0 %v3033, 16
    %v3062 = vpop.permute.xlu0 %3061
    %3063 = vrot.lane.b32.xlu0 %v3034, 16
    %v3064 = vpop.permute.xlu0 %3063
    %3065 = vrot.lane.b32.xlu0 %v3035, 16
    %v3066 = vpop.permute.xlu0 %3065
    %3067 = vrot.lane.b32.xlu0 %v3036, 16
    %v3068 = vpop.permute.xlu0 %3067
    %v3085 = vunpack.c.l.b16 %v2652
    %v3086 = vunpack.c.l.b16 %v2653
    %v3087 = vunpack.c.l.b16 %v2654
    %v3088 = vunpack.c.l.b16 %v2655
    %v3089 = vunpack.c.l.b16 %v2656
    %v3090 = vunpack.c.l.b16 %v2657
    %v3091 = vunpack.c.l.b16 %v2658
    %v3092 = vunpack.c.l.b16 %v2659
    %v3093 = vunpack.c.l.b16 %v2660
    %v3094 = vunpack.c.l.b16 %v2661
    %v3095 = vunpack.c.l.b16 %v2662
    %v3096 = vunpack.c.l.b16 %v2663
    %v3097 = vunpack.c.l.b16 %v2664
    %v3098 = vunpack.c.l.b16 %v2665
    %v3099 = vunpack.c.l.b16 %v2666
    %v3100 = vunpack.c.l.b16 %v2667
    %v3101 = vpack.c.b16 %v3085, %v3085
    %v3102 = vpack.c.b16 %v3086, %v3086
    %v3103 = vpack.c.b16 %v3087, %v3087
    %v3104 = vpack.c.b16 %v3088, %v3088
    %v3105 = vpack.c.b16 %v3089, %v3089
    %v3106 = vpack.c.b16 %v3090, %v3090
    %v3107 = vpack.c.b16 %v3091, %v3091
    %v3108 = vpack.c.b16 %v3092, %v3092
    %v3109 = vpack.c.b16 %v3093, %v3093
    %v3110 = vpack.c.b16 %v3094, %v3094
    %v3111 = vpack.c.b16 %v3095, %v3095
    %v3112 = vpack.c.b16 %v3096, %v3096
    %v3113 = vpack.c.b16 %v3097, %v3097
    %v3114 = vpack.c.b16 %v3098, %v3098
    %v3115 = vpack.c.b16 %v3099, %v3099
    %v3116 = vpack.c.b16 %v3100, %v3100
    %3117 = vrot.lane.b32.xlu0 %v3101, 24
    %v3118 = vpop.permute.xlu0 %3117
    %3119 = vrot.lane.b32.xlu0 %v3102, 24
    %v3120 = vpop.permute.xlu0 %3119
    %3121 = vrot.lane.b32.xlu0 %v3103, 24
    %v3122 = vpop.permute.xlu0 %3121
    %3123 = vrot.lane.b32.xlu0 %v3104, 24
    %v3124 = vpop.permute.xlu0 %3123
    %3125 = vrot.lane.b32.xlu0 %v3105, 24
    %v3126 = vpop.permute.xlu0 %3125
    %3127 = vrot.lane.b32.xlu0 %v3106, 24
    %v3128 = vpop.permute.xlu0 %3127
    %3129 = vrot.lane.b32.xlu0 %v3107, 24
    %v3130 = vpop.permute.xlu0 %3129
    %3131 = vrot.lane.b32.xlu0 %v3108, 24
    %v3132 = vpop.permute.xlu0 %3131
    %3133 = vrot.lane.b32.xlu0 %v3109, 24
    %v3134 = vpop.permute.xlu0 %3133
    %3135 = vrot.lane.b32.xlu0 %v3110, 24
    %v3136 = vpop.permute.xlu0 %3135
    %3137 = vrot.lane.b32.xlu0 %v3111, 24
    %v3138 = vpop.permute.xlu0 %3137
    %3139 = vrot.lane.b32.xlu0 %v3112, 24
    %v3140 = vpop.permute.xlu0 %3139
    %3141 = vrot.lane.b32.xlu0 %v3113, 24
    %v3142 = vpop.permute.xlu0 %3141
    %3143 = vrot.lane.b32.xlu0 %v3114, 24
    %v3144 = vpop.permute.xlu0 %3143
    %3145 = vrot.lane.b32.xlu0 %v3115, 24
    %v3146 = vpop.permute.xlu0 %3145
    %3147 = vrot.lane.b32.xlu0 %v3116, 24
    %v3148 = vpop.permute.xlu0 %3147
    %v3165 = vunpack.c.l.b16 %v2668
    %v3166 = vunpack.c.l.b16 %v2669
    %v3167 = vunpack.c.l.b16 %v2670
    %v3168 = vunpack.c.l.b16 %v2671
    %v3169 = vunpack.c.l.b16 %v2672
    %v3170 = vunpack.c.l.b16 %v2673
    %v3171 = vunpack.c.l.b16 %v2674
    %v3172 = vunpack.c.l.b16 %v2675
    %v3173 = vunpack.c.l.b16 %v2676
    %v3174 = vunpack.c.l.b16 %v2677
    %v3175 = vunpack.c.l.b16 %v2678
    %v3176 = vunpack.c.l.b16 %v2679
    %v3177 = vunpack.c.l.b16 %v2680
    %v3178 = vunpack.c.l.b16 %v2681
    %v3179 = vunpack.c.l.b16 %v2682
    %v3180 = vunpack.c.l.b16 %v2683
    %v3181 = vpack.c.b16 %v3165, %v3085
    %v3182 = vpack.c.b16 %v3166, %v3086
    %v3183 = vpack.c.b16 %v3167, %v3087
    %v3184 = vpack.c.b16 %v3168, %v3088
    %v3185 = vpack.c.b16 %v3169, %v3089
    %v3186 = vpack.c.b16 %v3170, %v3090
    %v3187 = vpack.c.b16 %v3171, %v3091
    %v3188 = vpack.c.b16 %v3172, %v3092
    %v3189 = vpack.c.b16 %v3173, %v3093
    %v3190 = vpack.c.b16 %v3174, %v3094
    %v3191 = vpack.c.b16 %v3175, %v3095
    %v3192 = vpack.c.b16 %v3176, %v3096
    %v3193 = vpack.c.b16 %v3177, %v3097
    %v3194 = vpack.c.b16 %v3178, %v3098
    %v3195 = vpack.c.b16 %v3179, %v3099
    %v3196 = vpack.c.b16 %v3180, %v3100
    %v3198 = vshrl.u32 %v3181, 16
    %v3200 = vshll.u32 %v3181, 16
    %v3202 = vrot.slane %v3200, 1
    %v3203 = vor.u32 %v3198, %v3202
    %v3205 = vshrl.u32 %v3182, 16
    %v3207 = vshll.u32 %v3182, 16
    %v3209 = vrot.slane %v3207, 1
    %v3210 = vor.u32 %v3205, %v3209
    %v3212 = vshrl.u32 %v3183, 16
    %v3214 = vshll.u32 %v3183, 16
    %v3216 = vrot.slane %v3214, 1
    %v3217 = vor.u32 %v3212, %v3216
    %v3219 = vshrl.u32 %v3184, 16
    %v3221 = vshll.u32 %v3184, 16
    %v3223 = vrot.slane %v3221, 1
    %v3224 = vor.u32 %v3219, %v3223
    %v3226 = vshrl.u32 %v3185, 16
    %v3228 = vshll.u32 %v3185, 16
    %v3230 = vrot.slane %v3228, 1
    %v3231 = vor.u32 %v3226, %v3230
    %v3233 = vshrl.u32 %v3186, 16
    %v3235 = vshll.u32 %v3186, 16
    %v3237 = vrot.slane %v3235, 1
    %v3238 = vor.u32 %v3233, %v3237
    %v3240 = vshrl.u32 %v3187, 16
    %v3242 = vshll.u32 %v3187, 16
    %v3244 = vrot.slane %v3242, 1
    %v3245 = vor.u32 %v3240, %v3244
    %v3247 = vshrl.u32 %v3188, 16
    %v3249 = vshll.u32 %v3188, 16
    %v3251 = vrot.slane %v3249, 1
    %v3252 = vor.u32 %v3247, %v3251
    %v3254 = vshrl.u32 %v3189, 16
    %v3256 = vshll.u32 %v3189, 16
    %v3258 = vrot.slane %v3256, 1
    %v3259 = vor.u32 %v3254, %v3258
    %v3261 = vshrl.u32 %v3190, 16
    %v3263 = vshll.u32 %v3190, 16
    %v3265 = vrot.slane %v3263, 1
    %v3266 = vor.u32 %v3261, %v3265
    %v3268 = vshrl.u32 %v3191, 16
    %v3270 = vshll.u32 %v3191, 16
    %v3272 = vrot.slane %v3270, 1
    %v3273 = vor.u32 %v3268, %v3272
    %v3275 = vshrl.u32 %v3192, 16
    %v3277 = vshll.u32 %v3192, 16
    %v3279 = vrot.slane %v3277, 1
    %v3280 = vor.u32 %v3275, %v3279
    %v3282 = vshrl.u32 %v3193, 16
    %v3284 = vshll.u32 %v3193, 16
    %v3286 = vrot.slane %v3284, 1
    %v3287 = vor.u32 %v3282, %v3286
    %v3289 = vshrl.u32 %v3194, 16
    %v3291 = vshll.u32 %v3194, 16
    %v3293 = vrot.slane %v3291, 1
    %v3294 = vor.u32 %v3289, %v3293
    %v3296 = vshrl.u32 %v3195, 16
    %v3298 = vshll.u32 %v3195, 16
    %v3300 = vrot.slane %v3298, 1
    %v3301 = vor.u32 %v3296, %v3300
    %v3303 = vshrl.u32 %v3196, 16
    %v3305 = vshll.u32 %v3196, 16
    %v3307 = vrot.slane %v3305, 1
    %v3308 = vor.u32 %v3303, %v3307
    %3309 = vrot.lane.b32.xlu0 %v3203, 32
    %v3310 = vpop.permute.xlu0 %3309
    %3311 = vrot.lane.b32.xlu0 %v3210, 32
    %v3312 = vpop.permute.xlu0 %3311
    %3313 = vrot.lane.b32.xlu0 %v3217, 32
    %v3314 = vpop.permute.xlu0 %3313
    %3315 = vrot.lane.b32.xlu0 %v3224, 32
    %v3316 = vpop.permute.xlu0 %3315
    %3317 = vrot.lane.b32.xlu0 %v3231, 32
    %v3318 = vpop.permute.xlu0 %3317
    %3319 = vrot.lane.b32.xlu0 %v3238, 32
    %v3320 = vpop.permute.xlu0 %3319
    %3321 = vrot.lane.b32.xlu0 %v3245, 32
    %v3322 = vpop.permute.xlu0 %3321
    %3323 = vrot.lane.b32.xlu0 %v3252, 32
    %v3324 = vpop.permute.xlu0 %3323
    %3325 = vrot.lane.b32.xlu0 %v3259, 32
    %v3326 = vpop.permute.xlu0 %3325
    %3327 = vrot.lane.b32.xlu0 %v3266, 32
    %v3328 = vpop.permute.xlu0 %3327
    %3329 = vrot.lane.b32.xlu0 %v3273, 32
    %v3330 = vpop.permute.xlu0 %3329
    %3331 = vrot.lane.b32.xlu0 %v3280, 32
    %v3332 = vpop.permute.xlu0 %3331
    %3333 = vrot.lane.b32.xlu0 %v3287, 32
    %v3334 = vpop.permute.xlu0 %3333
    %3335 = vrot.lane.b32.xlu0 %v3294, 32
    %v3336 = vpop.permute.xlu0 %3335
    %3337 = vrot.lane.b32.xlu0 %v3301, 32
    %v3338 = vpop.permute.xlu0 %3337
    %3339 = vrot.lane.b32.xlu0 %v3308, 32
    %v3340 = vpop.permute.xlu0 %3339
    %v3357 = vunpack.c.l.b16 %v2684
    %v3358 = vunpack.c.l.b16 %v2685
    %v3359 = vunpack.c.l.b16 %v2686
    %v3360 = vunpack.c.l.b16 %v2687
    %v3361 = vunpack.c.l.b16 %v2688
    %v3362 = vunpack.c.l.b16 %v2689
    %v3363 = vunpack.c.l.b16 %v2690
    %v3364 = vunpack.c.l.b16 %v2691
    %v3365 = vunpack.c.l.b16 %v2692
    %v3366 = vunpack.c.l.b16 %v2693
    %v3367 = vunpack.c.l.b16 %v2694
    %v3368 = vunpack.c.l.b16 %v2695
    %v3369 = vunpack.c.l.b16 %v2696
    %v3370 = vunpack.c.l.b16 %v2697
    %v3371 = vunpack.c.l.b16 %v2698
    %v3372 = vunpack.c.l.b16 %v2699
    %v3373 = vpack.c.b16 %v3165, %v3357
    %v3374 = vpack.c.b16 %v3166, %v3358
    %v3375 = vpack.c.b16 %v3167, %v3359
    %v3376 = vpack.c.b16 %v3168, %v3360
    %v3377 = vpack.c.b16 %v3169, %v3361
    %v3378 = vpack.c.b16 %v3170, %v3362
    %v3379 = vpack.c.b16 %v3171, %v3363
    %v3380 = vpack.c.b16 %v3172, %v3364
    %v3381 = vpack.c.b16 %v3173, %v3365
    %v3382 = vpack.c.b16 %v3174, %v3366
    %v3383 = vpack.c.b16 %v3175, %v3367
    %v3384 = vpack.c.b16 %v3176, %v3368
    %v3385 = vpack.c.b16 %v3177, %v3369
    %v3386 = vpack.c.b16 %v3178, %v3370
    %v3387 = vpack.c.b16 %v3179, %v3371
    %v3388 = vpack.c.b16 %v3180, %v3372
    %v3389 = vrot.slane %v3373, 1
    %v3390 = vrot.slane %v3374, 1
    %v3391 = vrot.slane %v3375, 1
    %v3392 = vrot.slane %v3376, 1
    %v3393 = vrot.slane %v3377, 1
    %v3394 = vrot.slane %v3378, 1
    %v3395 = vrot.slane %v3379, 1
    %v3396 = vrot.slane %v3380, 1
    %v3397 = vrot.slane %v3381, 1
    %v3398 = vrot.slane %v3382, 1
    %v3399 = vrot.slane %v3383, 1
    %v3400 = vrot.slane %v3384, 1
    %v3401 = vrot.slane %v3385, 1
    %v3402 = vrot.slane %v3386, 1
    %v3403 = vrot.slane %v3387, 1
    %v3404 = vrot.slane %v3388, 1
    %3405 = vrot.lane.b32.xlu0 %v3389, 40
    %v3406 = vpop.permute.xlu0 %3405
    %3407 = vrot.lane.b32.xlu0 %v3390, 40
    %v3408 = vpop.permute.xlu0 %3407
    %3409 = vrot.lane.b32.xlu0 %v3391, 40
    %v3410 = vpop.permute.xlu0 %3409
    %3411 = vrot.lane.b32.xlu0 %v3392, 40
    %v3412 = vpop.permute.xlu0 %3411
    %3413 = vrot.lane.b32.xlu0 %v3393, 40
    %v3414 = vpop.permute.xlu0 %3413
    %3415 = vrot.lane.b32.xlu0 %v3394, 40
    %v3416 = vpop.permute.xlu0 %3415
    %3417 = vrot.lane.b32.xlu0 %v3395, 40
    %v3418 = vpop.permute.xlu0 %3417
    %3419 = vrot.lane.b32.xlu0 %v3396, 40
    %v3420 = vpop.permute.xlu0 %3419
    %3421 = vrot.lane.b32.xlu0 %v3397, 40
    %v3422 = vpop.permute.xlu0 %3421
    %3423 = vrot.lane.b32.xlu0 %v3398, 40
    %v3424 = vpop.permute.xlu0 %3423
    %3425 = vrot.lane.b32.xlu0 %v3399, 40
    %v3426 = vpop.permute.xlu0 %3425
    %3427 = vrot.lane.b32.xlu0 %v3400, 40
    %v3428 = vpop.permute.xlu0 %3427
    %3429 = vrot.lane.b32.xlu0 %v3401, 40
    %v3430 = vpop.permute.xlu0 %3429
    %3431 = vrot.lane.b32.xlu0 %v3402, 40
    %v3432 = vpop.permute.xlu0 %3431
    %3433 = vrot.lane.b32.xlu0 %v3403, 40
    %v3434 = vpop.permute.xlu0 %3433
    %3435 = vrot.lane.b32.xlu0 %v3404, 40
    %v3436 = vpop.permute.xlu0 %3435
    %v3453 = vunpack.c.l.b16 %v2701
    %v3454 = vunpack.c.l.b16 %v2702
    %v3455 = vunpack.c.l.b16 %v2703
    %v3456 = vunpack.c.l.b16 %v2704
    %v3457 = vunpack.c.l.b16 %v2705
    %v3458 = vunpack.c.l.b16 %v2706
    %v3459 = vunpack.c.l.b16 %v2707
    %v3460 = vunpack.c.l.b16 %v2708
    %v3461 = vunpack.c.l.b16 %v2709
    %v3462 = vunpack.c.l.b16 %v2710
    %v3463 = vunpack.c.l.b16 %v2711
    %v3464 = vunpack.c.l.b16 %v2712
    %v3465 = vunpack.c.l.b16 %v2713
    %v3466 = vunpack.c.l.b16 %v2714
    %v3467 = vunpack.c.l.b16 %v2715
    %v3468 = vunpack.c.l.b16 %v2716
    %v3469 = vpack.c.b16 %v3453, %v3453
    %v3470 = vpack.c.b16 %v3454, %v3454
    %v3471 = vpack.c.b16 %v3455, %v3455
    %v3472 = vpack.c.b16 %v3456, %v3456
    %v3473 = vpack.c.b16 %v3457, %v3457
    %v3474 = vpack.c.b16 %v3458, %v3458
    %v3475 = vpack.c.b16 %v3459, %v3459
    %v3476 = vpack.c.b16 %v3460, %v3460
    %v3477 = vpack.c.b16 %v3461, %v3461
    %v3478 = vpack.c.b16 %v3462, %v3462
    %v3479 = vpack.c.b16 %v3463, %v3463
    %v3480 = vpack.c.b16 %v3464, %v3464
    %v3481 = vpack.c.b16 %v3465, %v3465
    %v3482 = vpack.c.b16 %v3466, %v3466
    %v3483 = vpack.c.b16 %v3467, %v3467
    %v3484 = vpack.c.b16 %v3468, %v3468
    %3485 = vrot.lane.b32.xlu0 %v3469, 48
    %v3486 = vpop.permute.xlu0 %3485
    %3487 = vrot.lane.b32.xlu0 %v3470, 48
    %v3488 = vpop.permute.xlu0 %3487
    %3489 = vrot.lane.b32.xlu0 %v3471, 48
    %v3490 = vpop.permute.xlu0 %3489
    %3491 = vrot.lane.b32.xlu0 %v3472, 48
    %v3492 = vpop.permute.xlu0 %3491
    %3493 = vrot.lane.b32.xlu0 %v3473, 48
    %v3494 = vpop.permute.xlu0 %3493
    %3495 = vrot.lane.b32.xlu0 %v3474, 48
    %v3496 = vpop.permute.xlu0 %3495
    %3497 = vrot.lane.b32.xlu0 %v3475, 48
    %v3498 = vpop.permute.xlu0 %3497
    %3499 = vrot.lane.b32.xlu0 %v3476, 48
    %v3500 = vpop.permute.xlu0 %3499
    %3501 = vrot.lane.b32.xlu0 %v3477, 48
    %v3502 = vpop.permute.xlu0 %3501
    %3503 = vrot.lane.b32.xlu0 %v3478, 48
    %v3504 = vpop.permute.xlu0 %3503
    %3505 = vrot.lane.b32.xlu0 %v3479, 48
    %v3506 = vpop.permute.xlu0 %3505
    %3507 = vrot.lane.b32.xlu0 %v3480, 48
    %v3508 = vpop.permute.xlu0 %3507
    %3509 = vrot.lane.b32.xlu0 %v3481, 48
    %v3510 = vpop.permute.xlu0 %3509
    %3511 = vrot.lane.b32.xlu0 %v3482, 48
    %v3512 = vpop.permute.xlu0 %3511
    %3513 = vrot.lane.b32.xlu0 %v3483, 48
    %v3514 = vpop.permute.xlu0 %3513
    %3515 = vrot.lane.b32.xlu0 %v3484, 48
    %v3516 = vpop.permute.xlu0 %3515
    %v3533 = vunpack.c.l.b16 %v2717
    %v3534 = vunpack.c.l.b16 %v2718
    %v3535 = vunpack.c.l.b16 %v2719
    %v3536 = vunpack.c.l.b16 %v2720
    %v3537 = vunpack.c.l.b16 %v2721
    %v3538 = vunpack.c.l.b16 %v2722
    %v3539 = vunpack.c.l.b16 %v2723
    %v3540 = vunpack.c.l.b16 %v2724
    %v3541 = vunpack.c.l.b16 %v2725
    %v3542 = vunpack.c.l.b16 %v2726
    %v3543 = vunpack.c.l.b16 %v2727
    %v3544 = vunpack.c.l.b16 %v2728
    %v3545 = vunpack.c.l.b16 %v2729
    %v3546 = vunpack.c.l.b16 %v2730
    %v3547 = vunpack.c.l.b16 %v2731
    %v3548 = vunpack.c.l.b16 %v2732
    %v3549 = vpack.c.b16 %v3533, %v3453
    %v3550 = vpack.c.b16 %v3534, %v3454
    %v3551 = vpack.c.b16 %v3535, %v3455
    %v3552 = vpack.c.b16 %v3536, %v3456
    %v3553 = vpack.c.b16 %v3537, %v3457
    %v3554 = vpack.c.b16 %v3538, %v3458
    %v3555 = vpack.c.b16 %v3539, %v3459
    %v3556 = vpack.c.b16 %v3540, %v3460
    %v3557 = vpack.c.b16 %v3541, %v3461
    %v3558 = vpack.c.b16 %v3542, %v3462
    %v3559 = vpack.c.b16 %v3543, %v3463
    %v3560 = vpack.c.b16 %v3544, %v3464
    %v3561 = vpack.c.b16 %v3545, %v3465
    %v3562 = vpack.c.b16 %v3546, %v3466
    %v3563 = vpack.c.b16 %v3547, %v3467
    %v3564 = vpack.c.b16 %v3548, %v3468
    %v3566 = vshrl.u32 %v3549, 16
    %v3568 = vshll.u32 %v3549, 16
    %v3570 = vrot.slane %v3568, 1
    %v3571 = vor.u32 %v3566, %v3570
    %v3573 = vshrl.u32 %v3550, 16
    %v3575 = vshll.u32 %v3550, 16
    %v3577 = vrot.slane %v3575, 1
    %v3578 = vor.u32 %v3573, %v3577
    %v3580 = vshrl.u32 %v3551, 16
    %v3582 = vshll.u32 %v3551, 16
    %v3584 = vrot.slane %v3582, 1
    %v3585 = vor.u32 %v3580, %v3584
    %v3587 = vshrl.u32 %v3552, 16
    %v3589 = vshll.u32 %v3552, 16
    %v3591 = vrot.slane %v3589, 1
    %v3592 = vor.u32 %v3587, %v3591
    %v3594 = vshrl.u32 %v3553, 16
    %v3596 = vshll.u32 %v3553, 16
    %v3598 = vrot.slane %v3596, 1
    %v3599 = vor.u32 %v3594, %v3598
    %v3601 = vshrl.u32 %v3554, 16
    %v3603 = vshll.u32 %v3554, 16
    %v3605 = vrot.slane %v3603, 1
    %v3606 = vor.u32 %v3601, %v3605
    %v3608 = vshrl.u32 %v3555, 16
    %v3610 = vshll.u32 %v3555, 16
    %v3612 = vrot.slane %v3610, 1
    %v3613 = vor.u32 %v3608, %v3612
    %v3615 = vshrl.u32 %v3556, 16
    %v3617 = vshll.u32 %v3556, 16
    %v3619 = vrot.slane %v3617, 1
    %v3620 = vor.u32 %v3615, %v3619
    %v3622 = vshrl.u32 %v3557, 16
    %v3624 = vshll.u32 %v3557, 16
    %v3626 = vrot.slane %v3624, 1
    %v3627 = vor.u32 %v3622, %v3626
    %v3629 = vshrl.u32 %v3558, 16
    %v3631 = vshll.u32 %v3558, 16
    %v3633 = vrot.slane %v3631, 1
    %v3634 = vor.u32 %v3629, %v3633
    %v3636 = vshrl.u32 %v3559, 16
    %v3638 = vshll.u32 %v3559, 16
    %v3640 = vrot.slane %v3638, 1
    %v3641 = vor.u32 %v3636, %v3640
    %v3643 = vshrl.u32 %v3560, 16
    %v3645 = vshll.u32 %v3560, 16
    %v3647 = vrot.slane %v3645, 1
    %v3648 = vor.u32 %v3643, %v3647
    %v3650 = vshrl.u32 %v3561, 16
    %v3652 = vshll.u32 %v3561, 16
    %v3654 = vrot.slane %v3652, 1
    %v3655 = vor.u32 %v3650, %v3654
    %v3657 = vshrl.u32 %v3562, 16
    %v3659 = vshll.u32 %v3562, 16
    %v3661 = vrot.slane %v3659, 1
    %v3662 = vor.u32 %v3657, %v3661
    %v3664 = vshrl.u32 %v3563, 16
    %v3666 = vshll.u32 %v3563, 16
    %v3668 = vrot.slane %v3666, 1
    %v3669 = vor.u32 %v3664, %v3668
    %v3671 = vshrl.u32 %v3564, 16
    %v3673 = vshll.u32 %v3564, 16
    %v3675 = vrot.slane %v3673, 1
    %v3676 = vor.u32 %v3671, %v3675
    %3677 = vrot.lane.b32.xlu0 %v3571, 56
    %v3678 = vpop.permute.xlu0 %3677
    %3679 = vrot.lane.b32.xlu0 %v3578, 56
    %v3680 = vpop.permute.xlu0 %3679
    %3681 = vrot.lane.b32.xlu0 %v3585, 56
    %v3682 = vpop.permute.xlu0 %3681
    %3683 = vrot.lane.b32.xlu0 %v3592, 56
    %v3684 = vpop.permute.xlu0 %3683
    %3685 = vrot.lane.b32.xlu0 %v3599, 56
    %v3686 = vpop.permute.xlu0 %3685
    %3687 = vrot.lane.b32.xlu0 %v3606, 56
    %v3688 = vpop.permute.xlu0 %3687
    %3689 = vrot.lane.b32.xlu0 %v3613, 56
    %v3690 = vpop.permute.xlu0 %3689
    %3691 = vrot.lane.b32.xlu0 %v3620, 56
    %v3692 = vpop.permute.xlu0 %3691
    %3693 = vrot.lane.b32.xlu0 %v3627, 56
    %v3694 = vpop.permute.xlu0 %3693
    %3695 = vrot.lane.b32.xlu0 %v3634, 56
    %v3696 = vpop.permute.xlu0 %3695
    %3697 = vrot.lane.b32.xlu0 %v3641, 56
    %v3698 = vpop.permute.xlu0 %3697
    %3699 = vrot.lane.b32.xlu0 %v3648, 56
    %v3700 = vpop.permute.xlu0 %3699
    %3701 = vrot.lane.b32.xlu0 %v3655, 56
    %v3702 = vpop.permute.xlu0 %3701
    %3703 = vrot.lane.b32.xlu0 %v3662, 56
    %v3704 = vpop.permute.xlu0 %3703
    %3705 = vrot.lane.b32.xlu0 %v3669, 56
    %v3706 = vpop.permute.xlu0 %3705
    %3707 = vrot.lane.b32.xlu0 %v3676, 56
    %v3708 = vpop.permute.xlu0 %3707
    %v3725 = vunpack.c.l.b16 %v2733
    %v3726 = vunpack.c.l.b16 %v2734
    %v3727 = vunpack.c.l.b16 %v2735
    %v3728 = vunpack.c.l.b16 %v2736
    %v3729 = vunpack.c.l.b16 %v2737
    %v3730 = vunpack.c.l.b16 %v2738
    %v3731 = vunpack.c.l.b16 %v2739
    %v3732 = vunpack.c.l.b16 %v2740
    %v3733 = vunpack.c.l.b16 %v2741
    %v3734 = vunpack.c.l.b16 %v2742
    %v3735 = vunpack.c.l.b16 %v2743
    %v3736 = vunpack.c.l.b16 %v2744
    %v3737 = vunpack.c.l.b16 %v2745
    %v3738 = vunpack.c.l.b16 %v2746
    %v3739 = vunpack.c.l.b16 %v2747
    %v3740 = vunpack.c.l.b16 %v2748
    %v3741 = vpack.c.b16 %v3533, %v3725
    %v3742 = vpack.c.b16 %v3534, %v3726
    %v3743 = vpack.c.b16 %v3535, %v3727
    %v3744 = vpack.c.b16 %v3536, %v3728
    %v3745 = vpack.c.b16 %v3537, %v3729
    %v3746 = vpack.c.b16 %v3538, %v3730
    %v3747 = vpack.c.b16 %v3539, %v3731
    %v3748 = vpack.c.b16 %v3540, %v3732
    %v3749 = vpack.c.b16 %v3541, %v3733
    %v3750 = vpack.c.b16 %v3542, %v3734
    %v3751 = vpack.c.b16 %v3543, %v3735
    %v3752 = vpack.c.b16 %v3544, %v3736
    %v3753 = vpack.c.b16 %v3545, %v3737
    %v3754 = vpack.c.b16 %v3546, %v3738
    %v3755 = vpack.c.b16 %v3547, %v3739
    %v3756 = vpack.c.b16 %v3548, %v3740
    %v3757 = vrot.slane %v3741, 1
    %v3758 = vrot.slane %v3742, 1
    %v3759 = vrot.slane %v3743, 1
    %v3760 = vrot.slane %v3744, 1
    %v3761 = vrot.slane %v3745, 1
    %v3762 = vrot.slane %v3746, 1
    %v3763 = vrot.slane %v3747, 1
    %v3764 = vrot.slane %v3748, 1
    %v3765 = vrot.slane %v3749, 1
    %v3766 = vrot.slane %v3750, 1
    %v3767 = vrot.slane %v3751, 1
    %v3768 = vrot.slane %v3752, 1
    %v3769 = vrot.slane %v3753, 1
    %v3770 = vrot.slane %v3754, 1
    %v3771 = vrot.slane %v3755, 1
    %v3772 = vrot.slane %v3756, 1
    %3773 = vrot.lane.b32.xlu0 %v3757, 64
    %v3774 = vpop.permute.xlu0 %3773
    %3775 = vrot.lane.b32.xlu0 %v3758, 64
    %v3776 = vpop.permute.xlu0 %3775
    %3777 = vrot.lane.b32.xlu0 %v3759, 64
    %v3778 = vpop.permute.xlu0 %3777
    %3779 = vrot.lane.b32.xlu0 %v3760, 64
    %v3780 = vpop.permute.xlu0 %3779
    %3781 = vrot.lane.b32.xlu0 %v3761, 64
    %v3782 = vpop.permute.xlu0 %3781
    %3783 = vrot.lane.b32.xlu0 %v3762, 64
    %v3784 = vpop.permute.xlu0 %3783
    %3785 = vrot.lane.b32.xlu0 %v3763, 64
    %v3786 = vpop.permute.xlu0 %3785
    %3787 = vrot.lane.b32.xlu0 %v3764, 64
    %v3788 = vpop.permute.xlu0 %3787
    %3789 = vrot.lane.b32.xlu0 %v3765, 64
    %v3790 = vpop.permute.xlu0 %3789
    %3791 = vrot.lane.b32.xlu0 %v3766, 64
    %v3792 = vpop.permute.xlu0 %3791
    %3793 = vrot.lane.b32.xlu0 %v3767, 64
    %v3794 = vpop.permute.xlu0 %3793
    %3795 = vrot.lane.b32.xlu0 %v3768, 64
    %v3796 = vpop.permute.xlu0 %3795
    %3797 = vrot.lane.b32.xlu0 %v3769, 64
    %v3798 = vpop.permute.xlu0 %3797
    %3799 = vrot.lane.b32.xlu0 %v3770, 64
    %v3800 = vpop.permute.xlu0 %3799
    %3801 = vrot.lane.b32.xlu0 %v3771, 64
    %v3802 = vpop.permute.xlu0 %3801
    %3803 = vrot.lane.b32.xlu0 %v3772, 64
    %v3804 = vpop.permute.xlu0 %3803
    %v3807 = vsel %vm1903, %v2604, %v2942
    %v3810 = vsel %vm1903, %v2605, %v2944
    %v3813 = vsel %vm1903, %v2606, %v2946
    %v3816 = vsel %vm1903, %v2607, %v2948
    %v3819 = vsel %vm1903, %v2608, %v2950
    %v3822 = vsel %vm1903, %v2609, %v2952
    %v3825 = vsel %vm1903, %v2610, %v2954
    %v3828 = vsel %vm1903, %v2611, %v2956
    %v3831 = vsel %vm1903, %v2612, %v2958
    %v3834 = vsel %vm1903, %v2613, %v2960
    %v3837 = vsel %vm1903, %v2614, %v2962
    %v3840 = vsel %vm1903, %v2615, %v2964
    %v3843 = vsel %vm1903, %v2616, %v2966
    %v3846 = vsel %vm1903, %v2617, %v2968
    %v3849 = vsel %vm1903, %v2618, %v2970
    %v3852 = vsel %vm1903, %v2619, %v2972
    %v3854 = vsel %vm1969, %v3807, %v3038
    %v3856 = vsel %vm1969, %v3810, %v3040
    %v3858 = vsel %vm1969, %v3813, %v3042
    %v3860 = vsel %vm1969, %v3816, %v3044
    %v3862 = vsel %vm1969, %v3819, %v3046
    %v3864 = vsel %vm1969, %v3822, %v3048
    %v3866 = vsel %vm1969, %v3825, %v3050
    %v3868 = vsel %vm1969, %v3828, %v3052
    %v3870 = vsel %vm1969, %v3831, %v3054
    %v3872 = vsel %vm1969, %v3834, %v3056
    %v3874 = vsel %vm1969, %v3837, %v3058
    %v3876 = vsel %vm1969, %v3840, %v3060
    %v3878 = vsel %vm1969, %v3843, %v3062
    %v3880 = vsel %vm1969, %v3846, %v3064
    %v3882 = vsel %vm1969, %v3849, %v3066
    %v3884 = vsel %vm1969, %v3852, %v3068
    %v3886 = vsel %vm2035, %v3854, %v3118
    %v3888 = vsel %vm2035, %v3856, %v3120
    %v3890 = vsel %vm2035, %v3858, %v3122
    %v3892 = vsel %vm2035, %v3860, %v3124
    %v3894 = vsel %vm2035, %v3862, %v3126
    %v3896 = vsel %vm2035, %v3864, %v3128
    %v3898 = vsel %vm2035, %v3866, %v3130
    %v3900 = vsel %vm2035, %v3868, %v3132
    %v3902 = vsel %vm2035, %v3870, %v3134
    %v3904 = vsel %vm2035, %v3872, %v3136
    %v3906 = vsel %vm2035, %v3874, %v3138
    %v3908 = vsel %vm2035, %v3876, %v3140
    %v3910 = vsel %vm2035, %v3878, %v3142
    %v3912 = vsel %vm2035, %v3880, %v3144
    %v3914 = vsel %vm2035, %v3882, %v3146
    %v3916 = vsel %vm2035, %v3884, %v3148
    %v3918 = vsel %vm2101, %v3886, %v3310
    %v3920 = vsel %vm2101, %v3888, %v3312
    %v3922 = vsel %vm2101, %v3890, %v3314
    %v3924 = vsel %vm2101, %v3892, %v3316
    %v3926 = vsel %vm2101, %v3894, %v3318
    %v3928 = vsel %vm2101, %v3896, %v3320
    %v3930 = vsel %vm2101, %v3898, %v3322
    %v3932 = vsel %vm2101, %v3900, %v3324
    %v3934 = vsel %vm2101, %v3902, %v3326
    %v3936 = vsel %vm2101, %v3904, %v3328
    %v3938 = vsel %vm2101, %v3906, %v3330
    %v3940 = vsel %vm2101, %v3908, %v3332
    %v3942 = vsel %vm2101, %v3910, %v3334
    %v3944 = vsel %vm2101, %v3912, %v3336
    %v3946 = vsel %vm2101, %v3914, %v3338
    %v3948 = vsel %vm2101, %v3916, %v3340
    %vm3949 = vcmask 326656
    %v3951 = vsel %vm3949, %v3918, %v3406
    %v3953 = vsel %vm3949, %v3920, %v3408
    %v3955 = vsel %vm3949, %v3922, %v3410
    %v3957 = vsel %vm3949, %v3924, %v3412
    %v3959 = vsel %vm3949, %v3926, %v3414
    %v3961 = vsel %vm3949, %v3928, %v3416
    %v3963 = vsel %vm3949, %v3930, %v3418
    %v3965 = vsel %vm3949, %v3932, %v3420
    %v3967 = vsel %vm3949, %v3934, %v3422
    %v3969 = vsel %vm3949, %v3936, %v3424
    %v3971 = vsel %vm3949, %v3938, %v3426
    %v3973 = vsel %vm3949, %v3940, %v3428
    %v3975 = vsel %vm3949, %v3942, %v3430
    %v3977 = vsel %vm3949, %v3944, %v3432
    %v3979 = vsel %vm3949, %v3946, %v3434
    %v3981 = vsel %vm3949, %v3948, %v3436
    %vm3982 = vcmask 392192
    %v3984 = vsel %vm3982, %v3951, %v3486
    %v3986 = vsel %vm3982, %v3953, %v3488
    %v3988 = vsel %vm3982, %v3955, %v3490
    %v3990 = vsel %vm3982, %v3957, %v3492
    %v3992 = vsel %vm3982, %v3959, %v3494
    %v3994 = vsel %vm3982, %v3961, %v3496
    %v3996 = vsel %vm3982, %v3963, %v3498
    %v3998 = vsel %vm3982, %v3965, %v3500
    %v4000 = vsel %vm3982, %v3967, %v3502
    %v4002 = vsel %vm3982, %v3969, %v3504
    %v4004 = vsel %vm3982, %v3971, %v3506
    %v4006 = vsel %vm3982, %v3973, %v3508
    %v4008 = vsel %vm3982, %v3975, %v3510
    %v4010 = vsel %vm3982, %v3977, %v3512
    %v4012 = vsel %vm3982, %v3979, %v3514
    %v4014 = vsel %vm3982, %v3981, %v3516
    %vm4015 = vcmask 457728
    %v4017 = vsel %vm4015, %v3984, %v3678
    %v4019 = vsel %vm4015, %v3986, %v3680
    %v4021 = vsel %vm4015, %v3988, %v3682
    %v4023 = vsel %vm4015, %v3990, %v3684
    %v4025 = vsel %vm4015, %v3992, %v3686
    %v4027 = vsel %vm4015, %v3994, %v3688
    %v4029 = vsel %vm4015, %v3996, %v3690
    %v4031 = vsel %vm4015, %v3998, %v3692
    %v4033 = vsel %vm4015, %v4000, %v3694
    %v4035 = vsel %vm4015, %v4002, %v3696
    %v4037 = vsel %vm4015, %v4004, %v3698
    %v4039 = vsel %vm4015, %v4006, %v3700
    %v4041 = vsel %vm4015, %v4008, %v3702
    %v4043 = vsel %vm4015, %v4010, %v3704
    %v4045 = vsel %vm4015, %v4012, %v3706
    %v4047 = vsel %vm4015, %v4014, %v3708
    %vm4048 = vcmask 523264
    %v4050 = vsel %vm4048, %v4017, %v3774
    %v4052 = vsel %vm4048, %v4019, %v3776
    %v4054 = vsel %vm4048, %v4021, %v3778
    %v4056 = vsel %vm4048, %v4023, %v3780
    %v4058 = vsel %vm4048, %v4025, %v3782
    %v4060 = vsel %vm4048, %v4027, %v3784
    %v4062 = vsel %vm4048, %v4029, %v3786
    %v4064 = vsel %vm4048, %v4031, %v3788
    %v4066 = vsel %vm4048, %v4033, %v3790
    %v4068 = vsel %vm4048, %v4035, %v3792
    %v4070 = vsel %vm4048, %v4037, %v3794
    %v4072 = vsel %vm4048, %v4039, %v3796
    %v4074 = vsel %vm4048, %v4041, %v3798
    %v4076 = vsel %vm4048, %v4043, %v3800
    %v4078 = vsel %vm4048, %v4045, %v3802
    %v4080 = vsel %vm4048, %v4047, %v3804
    %v4081 = vld [vmem:[%s4] sm:$0xf]
    %v4098 = vunpack.c.l.b16 %v4050
    %v4099 = vunpack.c.l.b16 %v4052
    %v4100 = vunpack.c.l.b16 %v4054
    %v4101 = vunpack.c.l.b16 %v4056
    %v4102 = vunpack.c.l.b16 %v4058
    %v4103 = vunpack.c.l.b16 %v4060
    %v4104 = vunpack.c.l.b16 %v4062
    %v4105 = vunpack.c.l.b16 %v4064
    %v4106 = vunpack.c.l.b16 %v4066
    %v4107 = vunpack.c.l.b16 %v4068
    %v4108 = vunpack.c.l.b16 %v4070
    %v4109 = vunpack.c.l.b16 %v4072
    %v4110 = vunpack.c.l.b16 %v4074
    %v4111 = vunpack.c.l.b16 %v4076
    %v4112 = vunpack.c.l.b16 %v4078
    %v4113 = vunpack.c.l.b16 %v4080
    %v4114 = vpack.c.b16 %v4099, %v4098
    %v4115 = vpack.c.b16 %v4101, %v4100
    %v4116 = vpack.c.b16 %v4103, %v4102
    %v4117 = vpack.c.b16 %v4105, %v4104
    %v4118 = vpack.c.b16 %v4107, %v4106
    %v4119 = vpack.c.b16 %v4109, %v4108
    %v4120 = vpack.c.b16 %v4111, %v4110
    %v4121 = vpack.c.b16 %v4113, %v4112
    %vm4122 = vcmask 588800
    %v4124 = vsel %vm4122, %v4081, 0
    %v4127 = vsel %vm4122, %v4114, 0
    %v4130 = vsel %vm4122, %v4115, 0
    %v4133 = vsel %vm4122, %v4116, 0
    %v4136 = vsel %vm4122, %v4117, 0
    %v4139 = vsel %vm4122, %v4118, 0
    %v4142 = vsel %vm4122, %v4119, 0
    %v4145 = vsel %vm4122, %v4120, 0
    %v4148 = vsel %vm4122, %v4121, 0
    %4150 = vmatpush.bf16.xpose.msra.mxu0 %v4148
    %4151 = vmatpush.bf16.xpose.msra.mxu0 %v4145
    %4152 = vmatpush.bf16.xpose.msra.mxu0 %v4142
    %4153 = vmatpush.bf16.xpose.msra.mxu0 %v4139
    %4154 = vmatpush.bf16.xpose.msra.mxu0 %v4136
    %4155 = vmatpush.bf16.xpose.msra.mxu0 %v4133
    %4156 = vmatpush.bf16.xpose.msra.mxu0 %v4130
    %4157 = vmatpush.bf16.xpose.msra.mxu0 %v4127
    %4158 = vmatmul.bf16.gmra.mxu0 %v4124
    %v4159 = vpop.f32.mrf.mxu0
    %v4160 = vadd.f32 0.0, %v4159
    %v4161 = vpop.f32.mrf.mxu0
    %4162 = vdwg.mxu0
    %v4163 = vld [vmem:[%s5] sm:$0xff]
    %v4164 = vld [vmem:[%s6] sm:$0xff]
    %4165 = vadd.xlane.f32.xlu0 %v4160
    %v4166 = vpop.xlane.xlu0 %4165
    %v4167 = vmul.f32 %v4166, 0.0078125
    %v4168 = vsub.f32 %v4160, %v4167
    %v4169 = vmul.f32 %v4168, %v4168
    %4170 = vadd.xlane.f32.xlu0 %v4169
    %v4171 = vpop.xlane.xlu0 %4170
    %v4172 = vmul.f32 %v4171, 0.0078125
    %v4173 = vadd.f32 %v4172, 1e-05
    %v4174 = vrsqrt.pop %v4173
    %v4175 = vmul.f32 %v4174, %v4173
    %v4176 = vmul.f32 %v4175, %v4174
    %v4177 = vmul.f32 0.5, %v4176
    %v4178 = vsub.f32 1.5, %v4177
    %v4179 = vmul.f32 %v4174, %v4178
    %vm4180 = vweird.f32 %v4173
    %vm4181 = vweird.f32 %v4174
    %vm4182 = vmor %vm4180, %vm4181
    %v4183 = vsel %vm4182, %v4174, %v4179
    %v4184 = vmul.f32 %v4163, %v4183
    %4186 = vset.pattern.permute.xlu0 0
    %4187 = vperm.xlu0 %4186, %v4184
    %v4188 = vpop.permute.xlu0 %4187
    %v4190 = vmul.f32 %v4168, %v4188
    %4192 = vset.pattern.permute.xlu0 0
    %4193 = vperm.xlu0 %4192, %v4164
    %v4194 = vpop.permute.xlu0 %4193
    %v4196 = vadd.f32 %v4190, %v4194
    %vm4197 = vcmp.gt.f32.partialorder %v4196, 0.0
    %v4198 = vmul.f32 %v4196, 0.01
    %v4199 = vsel %vm4197, %v4196, %v4198
    %4200 = vst [vmem:[#allocation4] sm:$0xff] %v4199
    // Predicated region
    $region30: #{tpu_custom_call.1} parent=1 // pred_check
      _
    $region31: #{tpu_custom_call.1} parent=1 // pred_check_branch
      %4202 = sbr.rel (0) target = $region33
    $region32: #{tpu_custom_call.1} parent=1 // pred_region
      %4204 = vsyncadd [#allocation5], 0
      %s4206 = sshll.u32 [#allocation4], 4
      %s4207 = int_to_ptr.vmem [resolvable:$true] %s4206
      %s4208 = sshll.u32 %s7, 4
      %s4209 = int_to_ptr.hbm [resolvable:$true] %s4208
      %4211 = dma.vmem_to_hbm [thread:$0]  %s4207, 128, %s4209, [#allocation5]
    $region33: #{tpu_custom_call.1} parent=1 // pred_fallthru
      _
    // Predicated region
    $region34: #{tpu_custom_call.1} parent=1 // pred_check
      _
    $region35: #{tpu_custom_call.1} parent=1 // pred_check_branch
      %4213 = sbr.rel (0) target = $region37
    $region36: #{tpu_custom_call.1} parent=1 // pred_region
      %4215 = dma.done [#allocation5], 128
    $region37: #{tpu_custom_call.1} parent=1 // pred_fallthru
      _
    %4216 = vsyncpa [#allocation5], 1

</llo_original>
